<compile_context>
chip_gen: v7x
topology: tpu7x:2x2x1
jax: 0.10.0
libtpu: 0.0.40
codegen_flags: <defaults>
</compile_context>

<pallas_src>
import jax
import jax.numpy as jnp
import numpy as np
from jax.experimental import pallas as pl
from jax.experimental.pallas import tpu as pltpu


def convnet_kernel(x_ref, wcp_ref, bcf_ref, wfc_ref, bfc_ref, out_ref):
    # x_ref  : (B, 784)      bf16  raw images, row-major 28x28 flatten
    # wcp_ref: (9, 784, 192) bf16  conv weights with im2col + pool-offset folded in
    # bcf_ref: (1, 192)      f32   conv bias broadcast onto the flat c*64+hw axis
    # wfc_ref: (192, 10)     bf16  fc weight (rows in torch's c*64+hw order)
    # bfc_ref: (1, 10)       f32   fc bias
    # out_ref: (B, 10)       f32   log-probabilities
    x = x_ref[...]                                              # stays VMEM-resident

    # conv evaluated at each of the 9 pool-window offsets + running max
    #   == max_pool(conv(x), 3, stride 3)        (bias hoisted out of the max)
    pooled = jnp.dot(x, wcp_ref[0], preferred_element_type=jnp.float32)
    for t in range(1, 9):
        pooled = jnp.maximum(
            pooled, jnp.dot(x, wcp_ref[t], preferred_element_type=jnp.float32))

    # + bias, relu (relu is monotone, so it commutes with the max)
    pooled = jnp.maximum(pooled + bcf_ref[...], 0.0)            # (B, 192) f32

    # fully connected: one (B,192) @ (192,10) matmul (bf16 operands, f32 acc)
    logits = jnp.dot(pooled.astype(jnp.bfloat16), wfc_ref[...],
                     preferred_element_type=jnp.float32) + bfc_ref[...]

    # stable log_softmax over the class dim
    m = jnp.max(logits, axis=-1, keepdims=True)
    lse = m + jnp.log(jnp.sum(jnp.exp(logits - m), axis=-1, keepdims=True))
    out_ref[...] = logits - lse


def _pool_conv_matrices(wconv):
    """Fold conv taps + pool-window offsets into 9 (784, 192) matrices.

    W[t, y*28+x, c*64 + i*8+j] = wconv[c, 0, r, s]
      where t = 3p+q, y = 3i+p+r, x = 3j+q+s   (p,q,r,s in 0..2; i,j in 0..7)
    """
    # Data-independent indicator built once on the host with numpy.
    m = np.zeros((9, 28 * 28, 9, 64), np.float32)
    ii, jj = np.meshgrid(np.arange(8), np.arange(8), indexing="ij")
    hw = (ii * 8 + jj).ravel()
    for t in range(9):                                          # pool offset (p, q)
        p, q = divmod(t, 3)
        for k in range(9):                                      # conv tap (r, s)
            r, s = divmod(k, 3)
            pix = ((3 * ii + p + r) * 28 + (3 * jj + q + s)).ravel()
            m[t, pix, k, hw] = 1.0
    wc = wconv.reshape(3, 9).astype(jnp.float32)                # (c, k)
    w = jnp.einsum("tnkh,ck->tnch", jnp.asarray(m), wc)         # (9, 784, 3, 64)
    return w.reshape(9, 784, 192).astype(jnp.bfloat16)


def convnet_forward(x, params, b_tile_max=512):
    wconv, bconv, wfc, bfc = params                             # PyTorch-shaped params
    n = x.shape[0]

    # Batch tile: multiple of 16 (bf16 sublane packing); aim for >= 2 grid
    # steps whenever the batch allows so the "parallel" axis can shard across
    # v7x's two TensorCores.  b_tile_max=512 stays inside every generation's
    # default scoped-VMEM budget.
    half = (n + 1) // 2
    b_tile = int(max(16, min(b_tile_max, ((half + 15) // 16) * 16)))
    n_pad = ((n + b_tile - 1) // b_tile) * b_tile

    # Raw images only: cast to bf16 first, flatten, then pad the batch.
    x_flat = x.astype(jnp.bfloat16).reshape(n, 784)
    if n_pad != n:
        x_flat = jnp.pad(x_flat, ((0, n_pad - n), (0, 0)))

    wcp = _pool_conv_matrices(wconv)                            # (9, 784, 192) bf16
    bcf = jnp.repeat(bconv.reshape(3, 1).astype(jnp.float32), 64, axis=1)
    bcf = bcf.reshape(1, 192)                                   # (1, 192), c*64+hw
    wfc_r = wfc.reshape(10, 192).T.astype(jnp.bfloat16)         # (192, 10)
    bfc_r = bfc.reshape(1, 10).astype(jnp.float32)

    out = pl.pallas_call(
        convnet_kernel,
        out_shape=jax.ShapeDtypeStruct((n_pad, 10), jnp.float32),
        grid=(n_pad // b_tile,),
        in_specs=[
            pl.BlockSpec((b_tile, 784), lambda i: (i, 0)),
            pl.BlockSpec((9, 784, 192), lambda i: (0, 0, 0)),   # resident weights
            pl.BlockSpec((1, 192), lambda i: (0, 0)),
            pl.BlockSpec((192, 10), lambda i: (0, 0)),
            pl.BlockSpec((1, 10), lambda i: (0, 0)),
        ],
        out_specs=pl.BlockSpec((b_tile, 10), lambda i: (i, 0)),
        compiler_params=pltpu.CompilerParams(
            dimension_semantics=("parallel",)),
    )(x_flat, wcp, bcf, wfc_r, bfc_r)
    return out[:n]                                              # (N, 10)


def reference_forward(x, params):
    """Pure-JAX reference matching the PyTorch forward."""
    wconv, bconv, wfc, bfc = params
    conv = jax.lax.conv_general_dilated(
        x, wconv, window_strides=(1, 1), padding="VALID",
        dimension_numbers=("NCHW", "OIHW", "NCHW")) + bconv.reshape(1, 3, 1, 1)
    pooled = jax.lax.reduce_window(
        conv, -jnp.inf, jax.lax.max,
        window_dimensions=(1, 1, 3, 3), window_strides=(1, 1, 3, 3),
        padding="VALID")                                        # (N, 3, 8, 8)
    act = jnp.maximum(pooled, 0.0).reshape(x.shape[0], 192)
    logits = act @ wfc.T + bfc
    return jax.nn.log_softmax(logits, axis=1)


if __name__ == "__main__":
    key = jax.random.PRNGKey(0)
    kx, kw1, kb1, kw2, kb2 = jax.random.split(key, 5)

    batch = 2
    # forward implies 28x28 single-channel input (26x26 conv -> 8x8 pool -> 192)
    x = jax.random.normal(kx, (batch, 1, 28, 28), jnp.float32)

    wconv = jax.random.normal(kw1, (3, 1, 3, 3), jnp.float32) * 0.2
    bconv = jax.random.normal(kb1, (3,), jnp.float32) * 0.1
    wfc = jax.random.normal(kw2, (10, 192), jnp.float32) * 0.05
    bfc = jax.random.normal(kb2, (10,), jnp.float32) * 0.1
    params = (wconv, bconv, wfc, bfc)

    out = jax.block_until_ready(convnet_forward(x, params))
    ref = jax.block_until_ready(reference_forward(x, params))

    assert out.shape == (batch, 10)
    np.testing.assert_allclose(np.asarray(out), np.asarray(ref),
                               atol=3e-2, rtol=3e-2)
    print("KERNEL_OK")
</pallas_src>

<mosaic_0001>
module attributes {stable_mosaic.version = 11 : i64} {
  func.func @convnet_kernel(%arg0: i32, %arg1: memref<16x784xbf16, #tpu.memory_space<vmem>>, %arg2: memref<9x784x192xbf16, #tpu.memory_space<vmem>>, %arg3: memref<1x192xf32, #tpu.memory_space<vmem>>, %arg4: memref<192x10xbf16, #tpu.memory_space<vmem>>, %arg5: memref<1x10xf32, #tpu.memory_space<vmem>>, %arg6: memref<16x10xf32, #tpu.memory_space<vmem>>) attributes {dimension_semantics = [#tpu.dimension_semantics<parallel>], iteration_bounds = array<i64: 1>, scalar_prefetch = 0 : i64, scratch_operands = 0 : i64, tpu.core_type = #tpu.core_type<tc>, window_params = [{transform_indices = @transform_0, window_bounds = array<i64: 16, 784>}, {pipeline_mode = #tpu.pipeline_mode<synchronous>, transform_indices = @transform_1, window_bounds = array<i64: 9, 784, 192>}, {pipeline_mode = #tpu.pipeline_mode<synchronous>, transform_indices = @transform_2, window_bounds = array<i64: 1, 192>}, {pipeline_mode = #tpu.pipeline_mode<synchronous>, transform_indices = @transform_3, window_bounds = array<i64: 192, 10>}, {pipeline_mode = #tpu.pipeline_mode<synchronous>, transform_indices = @transform_4, window_bounds = array<i64: 1, 10>}, {transform_indices = @transform_5, window_bounds = array<i64: 16, 10>}]} {
    %c0 = arith.constant 0 : index
    %c0_0 = arith.constant 0 : index
    %0 = vector.load %arg1[%c0, %c0_0] : memref<16x784xbf16, #tpu.memory_space<vmem>>, vector<16x784xbf16>
    %c0_1 = arith.constant 0 : index
    %c0_2 = arith.constant 0 : index
    %c0_3 = arith.constant 0 : index
    %1 = vector.load %arg2[%c0_1, %c0_2, %c0_3] : memref<9x784x192xbf16, #tpu.memory_space<vmem>>, vector<1x784x192xbf16>
    %2 = vector.shape_cast %1 : vector<1x784x192xbf16> to vector<784x192xbf16>
    %cst = arith.constant dense<0.000000e+00> : vector<16x192xf32>
    %3 = tpu.matmul %0, %2, %cst {dimension_numbers = #tpu.dot_dimension_numbers<[1], [0], [0], [1], [0, 0, 1, 1], [], []>} : vector<16x784xbf16>, vector<784x192xbf16>, vector<16x192xf32> -> vector<16x192xf32>
    %c1 = arith.constant 1 : index
    %c0_4 = arith.constant 0 : index
    %c0_5 = arith.constant 0 : index
    %4 = vector.load %arg2[%c1, %c0_4, %c0_5] : memref<9x784x192xbf16, #tpu.memory_space<vmem>>, vector<1x784x192xbf16>
    %5 = vector.shape_cast %4 : vector<1x784x192xbf16> to vector<784x192xbf16>
    %cst_6 = arith.constant dense<0.000000e+00> : vector<16x192xf32>
    %6 = tpu.matmul %0, %5, %cst_6 {dimension_numbers = #tpu.dot_dimension_numbers<[1], [0], [0], [1], [0, 0, 1, 1], [], []>} : vector<16x784xbf16>, vector<784x192xbf16>, vector<16x192xf32> -> vector<16x192xf32>
    %7 = arith.maximumf %3, %6 : vector<16x192xf32>
    %c2 = arith.constant 2 : index
    %c0_7 = arith.constant 0 : index
    %c0_8 = arith.constant 0 : index
    %8 = vector.load %arg2[%c2, %c0_7, %c0_8] : memref<9x784x192xbf16, #tpu.memory_space<vmem>>, vector<1x784x192xbf16>
    %9 = vector.shape_cast %8 : vector<1x784x192xbf16> to vector<784x192xbf16>
    %cst_9 = arith.constant dense<0.000000e+00> : vector<16x192xf32>
    %10 = tpu.matmul %0, %9, %cst_9 {dimension_numbers = #tpu.dot_dimension_numbers<[1], [0], [0], [1], [0, 0, 1, 1], [], []>} : vector<16x784xbf16>, vector<784x192xbf16>, vector<16x192xf32> -> vector<16x192xf32>
    %11 = arith.maximumf %7, %10 : vector<16x192xf32>
    %c3 = arith.constant 3 : index
    %c0_10 = arith.constant 0 : index
    %c0_11 = arith.constant 0 : index
    %12 = vector.load %arg2[%c3, %c0_10, %c0_11] : memref<9x784x192xbf16, #tpu.memory_space<vmem>>, vector<1x784x192xbf16>
    %13 = vector.shape_cast %12 : vector<1x784x192xbf16> to vector<784x192xbf16>
    %cst_12 = arith.constant dense<0.000000e+00> : vector<16x192xf32>
    %14 = tpu.matmul %0, %13, %cst_12 {dimension_numbers = #tpu.dot_dimension_numbers<[1], [0], [0], [1], [0, 0, 1, 1], [], []>} : vector<16x784xbf16>, vector<784x192xbf16>, vector<16x192xf32> -> vector<16x192xf32>
    %15 = arith.maximumf %11, %14 : vector<16x192xf32>
    %c4 = arith.constant 4 : index
    %c0_13 = arith.constant 0 : index
    %c0_14 = arith.constant 0 : index
    %16 = vector.load %arg2[%c4, %c0_13, %c0_14] : memref<9x784x192xbf16, #tpu.memory_space<vmem>>, vector<1x784x192xbf16>
    %17 = vector.shape_cast %16 : vector<1x784x192xbf16> to vector<784x192xbf16>
    %cst_15 = arith.constant dense<0.000000e+00> : vector<16x192xf32>
    %18 = tpu.matmul %0, %17, %cst_15 {dimension_numbers = #tpu.dot_dimension_numbers<[1], [0], [0], [1], [0, 0, 1, 1], [], []>} : vector<16x784xbf16>, vector<784x192xbf16>, vector<16x192xf32> -> vector<16x192xf32>
    %19 = arith.maximumf %15, %18 : vector<16x192xf32>
    %c5 = arith.constant 5 : index
    %c0_16 = arith.constant 0 : index
    %c0_17 = arith.constant 0 : index
    %20 = vector.load %arg2[%c5, %c0_16, %c0_17] : memref<9x784x192xbf16, #tpu.memory_space<vmem>>, vector<1x784x192xbf16>
    %21 = vector.shape_cast %20 : vector<1x784x192xbf16> to vector<784x192xbf16>
    %cst_18 = arith.constant dense<0.000000e+00> : vector<16x192xf32>
    %22 = tpu.matmul %0, %21, %cst_18 {dimension_numbers = #tpu.dot_dimension_numbers<[1], [0], [0], [1], [0, 0, 1, 1], [], []>} : vector<16x784xbf16>, vector<784x192xbf16>, vector<16x192xf32> -> vector<16x192xf32>
    %23 = arith.maximumf %19, %22 : vector<16x192xf32>
    %c6 = arith.constant 6 : index
    %c0_19 = arith.constant 0 : index
    %c0_20 = arith.constant 0 : index
    %24 = vector.load %arg2[%c6, %c0_19, %c0_20] : memref<9x784x192xbf16, #tpu.memory_space<vmem>>, vector<1x784x192xbf16>
    %25 = vector.shape_cast %24 : vector<1x784x192xbf16> to vector<784x192xbf16>
    %cst_21 = arith.constant dense<0.000000e+00> : vector<16x192xf32>
    %26 = tpu.matmul %0, %25, %cst_21 {dimension_numbers = #tpu.dot_dimension_numbers<[1], [0], [0], [1], [0, 0, 1, 1], [], []>} : vector<16x784xbf16>, vector<784x192xbf16>, vector<16x192xf32> -> vector<16x192xf32>
    %27 = arith.maximumf %23, %26 : vector<16x192xf32>
    %c7 = arith.constant 7 : index
    %c0_22 = arith.constant 0 : index
    %c0_23 = arith.constant 0 : index
    %28 = vector.load %arg2[%c7, %c0_22, %c0_23] : memref<9x784x192xbf16, #tpu.memory_space<vmem>>, vector<1x784x192xbf16>
    %29 = vector.shape_cast %28 : vector<1x784x192xbf16> to vector<784x192xbf16>
    %cst_24 = arith.constant dense<0.000000e+00> : vector<16x192xf32>
    %30 = tpu.matmul %0, %29, %cst_24 {dimension_numbers = #tpu.dot_dimension_numbers<[1], [0], [0], [1], [0, 0, 1, 1], [], []>} : vector<16x784xbf16>, vector<784x192xbf16>, vector<16x192xf32> -> vector<16x192xf32>
    %31 = arith.maximumf %27, %30 : vector<16x192xf32>
    %c8 = arith.constant 8 : index
    %c0_25 = arith.constant 0 : index
    %c0_26 = arith.constant 0 : index
    %32 = vector.load %arg2[%c8, %c0_25, %c0_26] : memref<9x784x192xbf16, #tpu.memory_space<vmem>>, vector<1x784x192xbf16>
    %33 = vector.shape_cast %32 : vector<1x784x192xbf16> to vector<784x192xbf16>
    %cst_27 = arith.constant dense<0.000000e+00> : vector<16x192xf32>
    %34 = tpu.matmul %0, %33, %cst_27 {dimension_numbers = #tpu.dot_dimension_numbers<[1], [0], [0], [1], [0, 0, 1, 1], [], []>} : vector<16x784xbf16>, vector<784x192xbf16>, vector<16x192xf32> -> vector<16x192xf32>
    %35 = arith.maximumf %31, %34 : vector<16x192xf32>
    %c0_28 = arith.constant 0 : index
    %c0_29 = arith.constant 0 : index
    %36 = vector.load %arg3[%c0_28, %c0_29] : memref<1x192xf32, #tpu.memory_space<vmem>>, vector<1x192xf32>
    %37 = vector.broadcast %36 : vector<1x192xf32> to vector<16x192xf32>
    %38 = arith.addf %35, %37 : vector<16x192xf32>
    %cst_30 = arith.constant 0.000000e+00 : f32
    %39 = vector.broadcast %cst_30 : f32 to vector<16x192xf32>
    %40 = arith.maximumf %38, %39 : vector<16x192xf32>
    %41 = arith.truncf %40 : vector<16x192xf32> to vector<16x192xbf16>
    %c0_31 = arith.constant 0 : index
    %c0_32 = arith.constant 0 : index
    %42 = vector.load %arg4[%c0_31, %c0_32] : memref<192x10xbf16, #tpu.memory_space<vmem>>, vector<192x10xbf16>
    %cst_33 = arith.constant dense<0.000000e+00> : vector<16x10xf32>
    %43 = tpu.matmul %41, %42, %cst_33 {dimension_numbers = #tpu.dot_dimension_numbers<[1], [0], [0], [1], [0, 0, 1, 1], [], []>} : vector<16x192xbf16>, vector<192x10xbf16>, vector<16x10xf32> -> vector<16x10xf32>
    %c0_34 = arith.constant 0 : index
    %c0_35 = arith.constant 0 : index
    %44 = vector.load %arg5[%c0_34, %c0_35] : memref<1x10xf32, #tpu.memory_space<vmem>>, vector<1x10xf32>
    %45 = vector.broadcast %44 : vector<1x10xf32> to vector<16x10xf32>
    %46 = arith.addf %43, %45 : vector<16x10xf32>
    %cst_36 = arith.constant dense<0xFF800000> : vector<16xf32>
    %47 = vector.multi_reduction <maximumf>, %46, %cst_36 [1] : vector<16x10xf32> to vector<16xf32>
    %48 = vector.shape_cast %47 : vector<16xf32> to vector<16x1xf32>
    %49 = vector.broadcast %48 : vector<16x1xf32> to vector<16x10xf32>
    %50 = arith.subf %46, %49 : vector<16x10xf32>
    %51 = math.exp %50 : vector<16x10xf32>
    %cst_37 = arith.constant dense<0.000000e+00> : vector<16xf32>
    %52 = vector.multi_reduction <add>, %51, %cst_37 [1] : vector<16x10xf32> to vector<16xf32>
    %53 = vector.shape_cast %52 : vector<16xf32> to vector<16x1xf32>
    %54 = math.log %53 : vector<16x1xf32>
    %55 = arith.addf %48, %54 : vector<16x1xf32>
    %56 = vector.broadcast %55 : vector<16x1xf32> to vector<16x10xf32>
    %57 = arith.subf %46, %56 : vector<16x10xf32>
    %c0_38 = arith.constant 0 : index
    %c0_39 = arith.constant 0 : index
    %58 = vector.load %arg6[%c0_38, %c0_39] : memref<16x10xf32, #tpu.memory_space<vmem>>, vector<16x10xf32>
    tpu.vector_store %arg6[%c0_38, %c0_39], %57 {strides = array<i32>} : memref<16x10xf32, #tpu.memory_space<vmem>>, vector<16x10xf32>,
    return
  }
  func.func @transform_0(%arg0: i32) -> (i32, i32) {
    %c0_i32 = arith.constant 0 : i32
    %c0_i32_0 = arith.constant 0 : i32
    return %arg0, %c0_i32 : i32, i32
  }
  func.func @transform_1(%arg0: i32) -> (i32, i32, i32) {
    %c0_i32 = arith.constant 0 : i32
    %c0_i32_0 = arith.constant 0 : i32
    %c0_i32_1 = arith.constant 0 : i32
    %c0_i32_2 = arith.constant 0 : i32
    return %c0_i32, %c0_i32_0, %c0_i32_1 : i32, i32, i32
  }
  func.func @transform_2(%arg0: i32) -> (i32, i32) {
    %c0_i32 = arith.constant 0 : i32
    %c0_i32_0 = arith.constant 0 : i32
    %c0_i32_1 = arith.constant 0 : i32
    return %c0_i32, %c0_i32_0 : i32, i32
  }
  func.func @transform_3(%arg0: i32) -> (i32, i32) {
    %c0_i32 = arith.constant 0 : i32
    %c0_i32_0 = arith.constant 0 : i32
    %c0_i32_1 = arith.constant 0 : i32
    return %c0_i32, %c0_i32_0 : i32, i32
  }
  func.func @transform_4(%arg0: i32) -> (i32, i32) {
    %c0_i32 = arith.constant 0 : i32
    %c0_i32_0 = arith.constant 0 : i32
    %c0_i32_1 = arith.constant 0 : i32
    return %c0_i32, %c0_i32_0 : i32, i32
  }
  func.func @transform_5(%arg0: i32) -> (i32, i32) {
    %c0_i32 = arith.constant 0 : i32
    %c0_i32_0 = arith.constant 0 : i32
    return %arg0, %c0_i32 : i32, i32
  }
}

</mosaic_0001>

<llo_original>
// kernel: tpu_custom_call.1
$region0: #{tpu_custom_call.1}
  #allocation0 [shape = 'u32[]', space=smem, size = 0x4, offset = 0x4, fixed_abs, tag = 'smem constant byte address 0x4 - core index']
  #allocation1 [shape = 'u32[144,128]{1,0:T(1,128)}', space=vmem, size = 0x12000, scoped, tag = 'internal scratch']
  %s0 = inlined_call_operand.vmem [shape: bf16[16,784], index: 0, kind: input, shape index: {}]
  %s1 = inlined_call_operand.vmem [shape: bf16[9,784,192], index: 1, kind: input, shape index: {}]
  %s2 = inlined_call_operand.vmem [shape: f32[1,192], index: 2, kind: input, shape index: {}]
  %s3 = inlined_call_operand.vmem [shape: bf16[192,10], index: 3, kind: input, shape index: {}]
  %s4 = inlined_call_operand.vmem [shape: f32[1,10], index: 4, kind: input, shape index: {}]
  %s5 = inlined_call_operand.hbm [shape: f32[16,10], index: 5, kind: output, shape index: {}]
  %s6 = sld [smem:[#allocation0]]
  $region30: #{tpu_custom_call.1} parent=0
    _
  %s8 = ssub.s32 1, %s6
  %s9 = scalar_select 0, %s8, %s6
  $region1: #{tpu_custom_call.1} parent=0
    #allocation2 [shape = 'u8[8192]{0}', space=vmem, size = 0x2000, scoped, tag = 'output window, operand 0, single buffered']
    #allocation3 [shape = 's32[1]{0}', space=sflag, size = 0x4, scoped, tag = 'scoped memory for tpu_custom_call.1']
    %10 = vsyncpa [#allocation3], 0
    // Predicated region
    $region2: #{tpu_custom_call.1} parent=1 // pred_check
      _
    $region3: #{tpu_custom_call.1} parent=1 // pred_check_branch
      %12 = sbr.rel (0) target = $region5
    $region4: #{tpu_custom_call.1} parent=1 // pred_region
      _
    $region5: #{tpu_custom_call.1} parent=1 // pred_fallthru
      _
    // Predicated region
    $region6: #{tpu_custom_call.1} parent=1 // pred_check
      _
    $region7: #{tpu_custom_call.1} parent=1 // pred_check_branch
      %14 = sbr.rel (0) target = $region9
    $region8: #{tpu_custom_call.1} parent=1 // pred_region
      _
    $region9: #{tpu_custom_call.1} parent=1 // pred_fallthru
      _
    // Predicated region
    $region10: #{tpu_custom_call.1} parent=1 // pred_check
      _
    $region11: #{tpu_custom_call.1} parent=1 // pred_check_branch
      %16 = sbr.rel (0) target = $region13
    $region12: #{tpu_custom_call.1} parent=1 // pred_region
      _
    $region13: #{tpu_custom_call.1} parent=1 // pred_fallthru
      _
    // Predicated region
    $region14: #{tpu_custom_call.1} parent=1 // pred_check
      _
    $region15: #{tpu_custom_call.1} parent=1 // pred_check_branch
      %18 = sbr.rel (0) target = $region17
    $region16: #{tpu_custom_call.1} parent=1 // pred_region
      _
    $region17: #{tpu_custom_call.1} parent=1 // pred_fallthru
      _
    // Predicated region
    $region18: #{tpu_custom_call.1} parent=1 // pred_check
      _
    $region19: #{tpu_custom_call.1} parent=1 // pred_check_branch
      %20 = sbr.rel (0) target = $region21
    $region20: #{tpu_custom_call.1} parent=1 // pred_region
      _
    $region21: #{tpu_custom_call.1} parent=1 // pred_fallthru
      _
    %v22 = vld [vmem:[%s0] sm:$0xff]
    %v23 = vld [vmem:[%s0 + $0x8] sm:$0xff]
    %v24 = vld [vmem:[%s0 + $0x10] sm:$0xff]
    %v25 = vld [vmem:[%s0 + $0x18] sm:$0xf]
    %v26 = vld [vmem:[%s0 + $0x1c] sm:$0xff]
    %v27 = vld [vmem:[%s0 + $0x24] sm:$0xff]
    %v28 = vld [vmem:[%s0 + $0x2c] sm:$0xff]
    %v29 = vld [vmem:[%s0 + $0x34] sm:$0xf]
    %v30 = vld [vmem:[%s1] sm:$0xff]
    %v31 = vld [vmem:[%s1 + $0x8] sm:$0xff]
    %v32 = vld [vmem:[%s1 + $0x10] sm:$0xff]
    %v33 = vld [vmem:[%s1 + $0x18] sm:$0xff]
    %v34 = vld [vmem:[%s1 + $0x20] sm:$0xff]
    %v35 = vld [vmem:[%s1 + $0x28] sm:$0xff]
    %v36 = vld [vmem:[%s1 + $0x30] sm:$0xff]
    %v37 = vld [vmem:[%s1 + $0x38] sm:$0xff]
    %v38 = vld [vmem:[%s1 + $0x40] sm:$0xff]
    %v39 = vld [vmem:[%s1 + $0x48] sm:$0xff]
    %v40 = vld [vmem:[%s1 + $0x50] sm:$0xff]
    %v41 = vld [vmem:[%s1 + $0x58] sm:$0xff]
    %v42 = vld [vmem:[%s1 + $0x60] sm:$0xff]
    %v43 = vld [vmem:[%s1 + $0x68] sm:$0xff]
    %v44 = vld [vmem:[%s1 + $0x70] sm:$0xff]
    %v45 = vld [vmem:[%s1 + $0x78] sm:$0xff]
    %v46 = vld [vmem:[%s1 + $0x80] sm:$0xff]
    %v47 = vld [vmem:[%s1 + $0x88] sm:$0xff]
    %v48 = vld [vmem:[%s1 + $0x90] sm:$0xff]
    %v49 = vld [vmem:[%s1 + $0x98] sm:$0xff]
    %v50 = vld [vmem:[%s1 + $0xa0] sm:$0xff]
    %v51 = vld [vmem:[%s1 + $0xa8] sm:$0xff]
    %v52 = vld [vmem:[%s1 + $0xb0] sm:$0xff]
    %v53 = vld [vmem:[%s1 + $0xb8] sm:$0xff]
    %v54 = vld [vmem:[%s1 + $0xc0] sm:$0xff]
    %v55 = vld [vmem:[%s1 + $0xc8] sm:$0xff]
    %v56 = vld [vmem:[%s1 + $0xd0] sm:$0xff]
    %v57 = vld [vmem:[%s1 + $0xd8] sm:$0xff]
    %v58 = vld [vmem:[%s1 + $0xe0] sm:$0xff]
    %v59 = vld [vmem:[%s1 + $0xe8] sm:$0xff]
    %v60 = vld [vmem:[%s1 + $0xf0] sm:$0xff]
    %v61 = vld [vmem:[%s1 + $0xf8] sm:$0xff]
    %v62 = vld [vmem:[%s1 + $0x100] sm:$0xff]
    %v63 = vld [vmem:[%s1 + $0x108] sm:$0xff]
    %v64 = vld [vmem:[%s1 + $0x110] sm:$0xff]
    %v65 = vld [vmem:[%s1 + $0x118] sm:$0xff]
    %v66 = vld [vmem:[%s1 + $0x120] sm:$0xff]
    %v67 = vld [vmem:[%s1 + $0x128] sm:$0xff]
    %v68 = vld [vmem:[%s1 + $0x130] sm:$0xff]
    %v69 = vld [vmem:[%s1 + $0x138] sm:$0xff]
    %v70 = vld [vmem:[%s1 + $0x140] sm:$0xff]
    %v71 = vld [vmem:[%s1 + $0x148] sm:$0xff]
    %v72 = vld [vmem:[%s1 + $0x150] sm:$0xff]
    %v73 = vld [vmem:[%s1 + $0x158] sm:$0xff]
    %v74 = vld [vmem:[%s1 + $0x160] sm:$0xff]
    %v75 = vld [vmem:[%s1 + $0x168] sm:$0xff]
    %v76 = vld [vmem:[%s1 + $0x170] sm:$0xff]
    %v77 = vld [vmem:[%s1 + $0x178] sm:$0xff]
    %v78 = vld [vmem:[%s1 + $0x180] sm:$0xff]
    %v79 = vld [vmem:[%s1 + $0x188] sm:$0xff]
    %v80 = vld [vmem:[%s1 + $0x190] sm:$0xff]
    %v81 = vld [vmem:[%s1 + $0x198] sm:$0xff]
    %v82 = vld [vmem:[%s1 + $0x1a0] sm:$0xff]
    %v83 = vld [vmem:[%s1 + $0x1a8] sm:$0xff]
    %v84 = vld [vmem:[%s1 + $0x1b0] sm:$0xff]
    %v85 = vld [vmem:[%s1 + $0x1b8] sm:$0xff]
    %v86 = vld [vmem:[%s1 + $0x1c0] sm:$0xff]
    %v87 = vld [vmem:[%s1 + $0x1c8] sm:$0xff]
    %v88 = vld [vmem:[%s1 + $0x1d0] sm:$0xff]
    %v89 = vld [vmem:[%s1 + $0x1d8] sm:$0xff]
    %v90 = vld [vmem:[%s1 + $0x1e0] sm:$0xff]
    %v91 = vld [vmem:[%s1 + $0x1e8] sm:$0xff]
    %v92 = vld [vmem:[%s1 + $0x1f0] sm:$0xff]
    %v93 = vld [vmem:[%s1 + $0x1f8] sm:$0xff]
    %v94 = vld [vmem:[%s1 + $0x200] sm:$0xff]
    %v95 = vld [vmem:[%s1 + $0x208] sm:$0xff]
    %v96 = vld [vmem:[%s1 + $0x210] sm:$0xff]
    %v97 = vld [vmem:[%s1 + $0x218] sm:$0xff]
    %v98 = vld [vmem:[%s1 + $0x220] sm:$0xff]
    %v99 = vld [vmem:[%s1 + $0x228] sm:$0xff]
    %v100 = vld [vmem:[%s1 + $0x230] sm:$0xff]
    %v101 = vld [vmem:[%s1 + $0x238] sm:$0xff]
    %v102 = vld [vmem:[%s1 + $0x240] sm:$0xff]
    %v103 = vld [vmem:[%s1 + $0x248] sm:$0xff]
    %v104 = vld [vmem:[%s1 + $0x250] sm:$0xff]
    %v105 = vld [vmem:[%s1 + $0x258] sm:$0xff]
    %v106 = vld [vmem:[%s1 + $0x260] sm:$0xff]
    %v107 = vld [vmem:[%s1 + $0x268] sm:$0xff]
    %v108 = vld [vmem:[%s1 + $0x270] sm:$0xff]
    %v109 = vld [vmem:[%s1 + $0x278] sm:$0xff]
    %v110 = vld [vmem:[%s1 + $0x280] sm:$0xff]
    %v111 = vld [vmem:[%s1 + $0x288] sm:$0xff]
    %v112 = vld [vmem:[%s1 + $0x290] sm:$0xff]
    %v113 = vld [vmem:[%s1 + $0x298] sm:$0xff]
    %v114 = vld [vmem:[%s1 + $0x2a0] sm:$0xff]
    %v115 = vld [vmem:[%s1 + $0x2a8] sm:$0xff]
    %v116 = vld [vmem:[%s1 + $0x2b0] sm:$0xff]
    %v117 = vld [vmem:[%s1 + $0x2b8] sm:$0xff]
    %v118 = vld [vmem:[%s1 + $0x2c0] sm:$0xff]
    %v119 = vld [vmem:[%s1 + $0x2c8] sm:$0xff]
    %v120 = vld [vmem:[%s1 + $0x2d0] sm:$0xff]
    %v121 = vld [vmem:[%s1 + $0x2d8] sm:$0xff]
    %v122 = vld [vmem:[%s1 + $0x2e0] sm:$0xff]
    %v123 = vld [vmem:[%s1 + $0x2e8] sm:$0xff]
    %v124 = vld [vmem:[%s1 + $0x2f0] sm:$0xff]
    %v125 = vld [vmem:[%s1 + $0x2f8] sm:$0xff]
    %v126 = vld [vmem:[%s1 + $0x300] sm:$0xff]
    %v127 = vld [vmem:[%s1 + $0x308] sm:$0xff]
    %v136 = vunpack.c.l.b16 %v22
    %v137 = vunpack.c.h.b16 %v22
    %v138 = vunpack.c.l.b16 %v23
    %v139 = vunpack.c.h.b16 %v23
    %v140 = vunpack.c.l.b16 %v24
    %v141 = vunpack.c.h.b16 %v24
    %v142 = vunpack.c.l.b16 %v25
    %v143 = vunpack.c.l.b16 %v26
    %v144 = vunpack.c.h.b16 %v26
    %v145 = vunpack.c.l.b16 %v27
    %v146 = vunpack.c.h.b16 %v27
    %v147 = vunpack.c.l.b16 %v28
    %v148 = vunpack.c.h.b16 %v28
    %v149 = vunpack.c.l.b16 %v29
    %v150 = vpack.c.b16 %v143, %v136
    %v151 = vpack.c.b16 %v144, %v137
    %v152 = vpack.c.b16 %v145, %v138
    %v153 = vpack.c.b16 %v146, %v139
    %v154 = vpack.c.b16 %v147, %v140
    %v155 = vpack.c.b16 %v148, %v141
    %v156 = vpack.c.b16 %v149, %v142
    %v261 = vunpack.c.l.b16 %v30
    %v262 = vunpack.c.h.b16 %v30
    %v263 = vunpack.c.l.b16 %v31
    %v264 = vunpack.c.h.b16 %v31
    %v265 = vunpack.c.l.b16 %v32
    %v266 = vunpack.c.h.b16 %v32
    %v267 = vunpack.c.l.b16 %v33
    %v268 = vunpack.c.h.b16 %v33
    %v269 = vunpack.c.l.b16 %v34
    %v270 = vunpack.c.h.b16 %v34
    %v271 = vunpack.c.l.b16 %v35
    %v272 = vunpack.c.h.b16 %v35
    %v273 = vunpack.c.l.b16 %v36
    %v274 = vunpack.c.h.b16 %v36
    %v275 = vunpack.c.l.b16 %v37
    %v276 = vunpack.c.h.b16 %v37
    %v277 = vunpack.c.l.b16 %v38
    %v278 = vunpack.c.h.b16 %v38
    %v279 = vunpack.c.l.b16 %v39
    %v280 = vunpack.c.h.b16 %v39
    %v281 = vunpack.c.l.b16 %v40
    %v282 = vunpack.c.h.b16 %v40
    %v283 = vunpack.c.l.b16 %v41
    %v284 = vunpack.c.h.b16 %v41
    %v285 = vunpack.c.l.b16 %v42
    %v286 = vunpack.c.h.b16 %v42
    %v287 = vunpack.c.l.b16 %v43
    %v288 = vunpack.c.h.b16 %v43
    %v289 = vunpack.c.l.b16 %v44
    %v290 = vunpack.c.h.b16 %v44
    %v291 = vunpack.c.l.b16 %v45
    %v292 = vunpack.c.h.b16 %v45
    %v293 = vunpack.c.l.b16 %v46
    %v294 = vunpack.c.h.b16 %v46
    %v295 = vunpack.c.l.b16 %v47
    %v296 = vunpack.c.h.b16 %v47
    %v297 = vunpack.c.l.b16 %v48
    %v298 = vunpack.c.h.b16 %v48
    %v299 = vunpack.c.l.b16 %v49
    %v300 = vunpack.c.h.b16 %v49
    %v301 = vunpack.c.l.b16 %v50
    %v302 = vunpack.c.h.b16 %v50
    %v303 = vunpack.c.l.b16 %v51
    %v304 = vunpack.c.h.b16 %v51
    %v305 = vunpack.c.l.b16 %v52
    %v306 = vunpack.c.h.b16 %v52
    %v307 = vunpack.c.l.b16 %v53
    %v308 = vunpack.c.h.b16 %v53
    %v309 = vunpack.c.l.b16 %v54
    %v310 = vunpack.c.h.b16 %v54
    %v311 = vunpack.c.l.b16 %v55
    %v312 = vunpack.c.h.b16 %v55
    %v313 = vunpack.c.l.b16 %v56
    %v314 = vunpack.c.h.b16 %v56
    %v315 = vunpack.c.l.b16 %v57
    %v316 = vunpack.c.h.b16 %v57
    %v317 = vunpack.c.l.b16 %v58
    %v318 = vunpack.c.h.b16 %v58
    %v319 = vunpack.c.l.b16 %v59
    %v320 = vunpack.c.h.b16 %v59
    %v321 = vunpack.c.l.b16 %v60
    %v322 = vunpack.c.h.b16 %v60
    %v323 = vunpack.c.l.b16 %v61
    %v324 = vunpack.c.h.b16 %v61
    %v325 = vunpack.c.l.b16 %v62
    %v326 = vunpack.c.h.b16 %v62
    %v327 = vunpack.c.l.b16 %v63
    %v328 = vunpack.c.h.b16 %v63
    %v329 = vunpack.c.l.b16 %v64
    %v330 = vunpack.c.h.b16 %v64
    %v331 = vunpack.c.l.b16 %v65
    %v332 = vunpack.c.h.b16 %v65
    %v333 = vunpack.c.l.b16 %v66
    %v334 = vunpack.c.h.b16 %v66
    %v335 = vunpack.c.l.b16 %v67
    %v336 = vunpack.c.h.b16 %v67
    %v337 = vunpack.c.l.b16 %v68
    %v338 = vunpack.c.h.b16 %v68
    %v339 = vunpack.c.l.b16 %v69
    %v340 = vunpack.c.h.b16 %v69
    %v341 = vunpack.c.l.b16 %v70
    %v342 = vunpack.c.h.b16 %v70
    %v343 = vunpack.c.l.b16 %v71
    %v344 = vunpack.c.h.b16 %v71
    %v345 = vunpack.c.l.b16 %v72
    %v346 = vunpack.c.h.b16 %v72
    %v347 = vunpack.c.l.b16 %v73
    %v348 = vunpack.c.h.b16 %v73
    %v349 = vunpack.c.l.b16 %v74
    %v350 = vunpack.c.h.b16 %v74
    %v351 = vunpack.c.l.b16 %v75
    %v352 = vunpack.c.h.b16 %v75
    %v353 = vunpack.c.l.b16 %v76
    %v354 = vunpack.c.h.b16 %v76
    %v355 = vunpack.c.l.b16 %v77
    %v356 = vunpack.c.h.b16 %v77
    %v357 = vunpack.c.l.b16 %v78
    %v358 = vunpack.c.h.b16 %v78
    %v359 = vunpack.c.l.b16 %v79
    %v360 = vunpack.c.h.b16 %v79
    %v361 = vunpack.c.l.b16 %v80
    %v362 = vunpack.c.h.b16 %v80
    %v363 = vunpack.c.l.b16 %v81
    %v364 = vunpack.c.h.b16 %v81
    %v365 = vunpack.c.l.b16 %v82
    %v366 = vunpack.c.h.b16 %v82
    %v367 = vunpack.c.l.b16 %v83
    %v368 = vunpack.c.h.b16 %v83
    %v369 = vunpack.c.l.b16 %v84
    %v370 = vunpack.c.h.b16 %v84
    %v371 = vunpack.c.l.b16 %v85
    %v372 = vunpack.c.h.b16 %v85
    %v373 = vunpack.c.l.b16 %v86
    %v374 = vunpack.c.h.b16 %v86
    %v375 = vunpack.c.l.b16 %v87
    %v376 = vunpack.c.h.b16 %v87
    %v377 = vunpack.c.l.b16 %v88
    %v378 = vunpack.c.h.b16 %v88
    %v379 = vunpack.c.l.b16 %v89
    %v380 = vunpack.c.h.b16 %v89
    %v381 = vunpack.c.l.b16 %v90
    %v382 = vunpack.c.h.b16 %v90
    %v383 = vunpack.c.l.b16 %v91
    %v384 = vunpack.c.h.b16 %v91
    %v385 = vunpack.c.l.b16 %v92
    %v386 = vunpack.c.h.b16 %v92
    %v387 = vunpack.c.l.b16 %v93
    %v388 = vunpack.c.h.b16 %v93
    %v389 = vunpack.c.l.b16 %v94
    %v390 = vunpack.c.h.b16 %v94
    %v391 = vunpack.c.l.b16 %v95
    %v392 = vunpack.c.h.b16 %v95
    %v393 = vunpack.c.l.b16 %v96
    %v394 = vunpack.c.h.b16 %v96
    %v395 = vunpack.c.l.b16 %v97
    %v396 = vunpack.c.h.b16 %v97
    %v397 = vunpack.c.l.b16 %v98
    %v398 = vunpack.c.h.b16 %v98
    %v399 = vunpack.c.l.b16 %v99
    %v400 = vunpack.c.h.b16 %v99
    %v401 = vunpack.c.l.b16 %v100
    %v402 = vunpack.c.h.b16 %v100
    %v403 = vunpack.c.l.b16 %v101
    %v404 = vunpack.c.h.b16 %v101
    %v405 = vunpack.c.l.b16 %v102
    %v406 = vunpack.c.h.b16 %v102
    %v407 = vunpack.c.l.b16 %v103
    %v408 = vunpack.c.h.b16 %v103
    %v409 = vunpack.c.l.b16 %v104
    %v410 = vunpack.c.h.b16 %v104
    %v411 = vunpack.c.l.b16 %v105
    %v412 = vunpack.c.h.b16 %v105
    %v413 = vunpack.c.l.b16 %v106
    %v414 = vunpack.c.h.b16 %v106
    %v415 = vunpack.c.l.b16 %v107
    %v416 = vunpack.c.h.b16 %v107
    %v417 = vunpack.c.l.b16 %v108
    %v418 = vunpack.c.h.b16 %v108
    %v419 = vunpack.c.l.b16 %v109
    %v420 = vunpack.c.h.b16 %v109
    %v421 = vunpack.c.l.b16 %v110
    %v422 = vunpack.c.h.b16 %v110
    %v423 = vunpack.c.l.b16 %v111
    %v424 = vunpack.c.h.b16 %v111
    %v425 = vunpack.c.l.b16 %v112
    %v426 = vunpack.c.h.b16 %v112
    %v427 = vunpack.c.l.b16 %v113
    %v428 = vunpack.c.h.b16 %v113
    %v429 = vunpack.c.l.b16 %v114
    %v430 = vunpack.c.h.b16 %v114
    %v431 = vunpack.c.l.b16 %v115
    %v432 = vunpack.c.h.b16 %v115
    %v433 = vunpack.c.l.b16 %v116
    %v434 = vunpack.c.h.b16 %v116
    %v435 = vunpack.c.l.b16 %v117
    %v436 = vunpack.c.h.b16 %v117
    %v437 = vunpack.c.l.b16 %v118
    %v438 = vunpack.c.h.b16 %v118
    %v439 = vunpack.c.l.b16 %v119
    %v440 = vunpack.c.h.b16 %v119
    %v441 = vunpack.c.l.b16 %v120
    %v442 = vunpack.c.h.b16 %v120
    %v443 = vunpack.c.l.b16 %v121
    %v444 = vunpack.c.h.b16 %v121
    %v445 = vunpack.c.l.b16 %v122
    %v446 = vunpack.c.h.b16 %v122
    %v447 = vunpack.c.l.b16 %v123
    %v448 = vunpack.c.h.b16 %v123
    %v449 = vunpack.c.l.b16 %v124
    %v450 = vunpack.c.h.b16 %v124
    %v451 = vunpack.c.l.b16 %v125
    %v452 = vunpack.c.h.b16 %v125
    %v453 = vunpack.c.l.b16 %v126
    %v454 = vunpack.c.h.b16 %v126
    %v455 = vunpack.c.l.b16 %v127
    %v456 = vunpack.c.h.b16 %v127
    %v457 = vpack.c.b16 %v263, %v261
    %v458 = vpack.c.b16 %v264, %v262
    %v459 = vpack.c.b16 %v267, %v265
    %v460 = vpack.c.b16 %v268, %v266
    %v461 = vpack.c.b16 %v271, %v269
    %v462 = vpack.c.b16 %v272, %v270
    %v463 = vpack.c.b16 %v275, %v273
    %v464 = vpack.c.b16 %v276, %v274
    %v465 = vpack.c.b16 %v279, %v277
    %v466 = vpack.c.b16 %v280, %v278
    %v467 = vpack.c.b16 %v283, %v281
    %v468 = vpack.c.b16 %v284, %v282
    %v469 = vpack.c.b16 %v287, %v285
    %v470 = vpack.c.b16 %v288, %v286
    %v471 = vpack.c.b16 %v291, %v289
    %v472 = vpack.c.b16 %v292, %v290
    %v473 = vpack.c.b16 %v295, %v293
    %v474 = vpack.c.b16 %v296, %v294
    %v475 = vpack.c.b16 %v299, %v297
    %v476 = vpack.c.b16 %v300, %v298
    %v477 = vpack.c.b16 %v303, %v301
    %v478 = vpack.c.b16 %v304, %v302
    %v479 = vpack.c.b16 %v307, %v305
    %v480 = vpack.c.b16 %v308, %v306
    %v481 = vpack.c.b16 %v311, %v309
    %v482 = vpack.c.b16 %v312, %v310
    %v483 = vpack.c.b16 %v315, %v313
    %v484 = vpack.c.b16 %v316, %v314
    %v485 = vpack.c.b16 %v319, %v317
    %v486 = vpack.c.b16 %v320, %v318
    %v487 = vpack.c.b16 %v323, %v321
    %v488 = vpack.c.b16 %v324, %v322
    %v489 = vpack.c.b16 %v327, %v325
    %v490 = vpack.c.b16 %v328, %v326
    %v491 = vpack.c.b16 %v331, %v329
    %v492 = vpack.c.b16 %v332, %v330
    %v493 = vpack.c.b16 %v335, %v333
    %v494 = vpack.c.b16 %v336, %v334
    %v495 = vpack.c.b16 %v339, %v337
    %v496 = vpack.c.b16 %v340, %v338
    %v497 = vpack.c.b16 %v343, %v341
    %v498 = vpack.c.b16 %v344, %v342
    %v499 = vpack.c.b16 %v347, %v345
    %v500 = vpack.c.b16 %v348, %v346
    %v501 = vpack.c.b16 %v351, %v349
    %v502 = vpack.c.b16 %v352, %v350
    %v503 = vpack.c.b16 %v355, %v353
    %v504 = vpack.c.b16 %v356, %v354
    %v505 = vpack.c.b16 %v359, %v357
    %v506 = vpack.c.b16 %v360, %v358
    %v507 = vpack.c.b16 %v363, %v361
    %v508 = vpack.c.b16 %v364, %v362
    %v509 = vpack.c.b16 %v367, %v365
    %v510 = vpack.c.b16 %v368, %v366
    %v511 = vpack.c.b16 %v371, %v369
    %v512 = vpack.c.b16 %v372, %v370
    %v513 = vpack.c.b16 %v375, %v373
    %v514 = vpack.c.b16 %v376, %v374
    %v515 = vpack.c.b16 %v379, %v377
    %v516 = vpack.c.b16 %v380, %v378
    %v517 = vpack.c.b16 %v383, %v381
    %v518 = vpack.c.b16 %v384, %v382
    %v519 = vpack.c.b16 %v387, %v385
    %v520 = vpack.c.b16 %v388, %v386
    %v521 = vpack.c.b16 %v391, %v389
    %v522 = vpack.c.b16 %v392, %v390
    %v523 = vpack.c.b16 %v395, %v393
    %v524 = vpack.c.b16 %v396, %v394
    %v525 = vpack.c.b16 %v399, %v397
    %v526 = vpack.c.b16 %v400, %v398
    %v527 = vpack.c.b16 %v403, %v401
    %v528 = vpack.c.b16 %v404, %v402
    %v529 = vpack.c.b16 %v407, %v405
    %v530 = vpack.c.b16 %v408, %v406
    %v531 = vpack.c.b16 %v411, %v409
    %v532 = vpack.c.b16 %v412, %v410
    %v533 = vpack.c.b16 %v415, %v413
    %v534 = vpack.c.b16 %v416, %v414
    %v535 = vpack.c.b16 %v419, %v417
    %v536 = vpack.c.b16 %v420, %v418
    %v537 = vpack.c.b16 %v423, %v421
    %v538 = vpack.c.b16 %v424, %v422
    %v539 = vpack.c.b16 %v427, %v425
    %v540 = vpack.c.b16 %v428, %v426
    %v541 = vpack.c.b16 %v431, %v429
    %v542 = vpack.c.b16 %v432, %v430
    %v543 = vpack.c.b16 %v435, %v433
    %v544 = vpack.c.b16 %v436, %v434
    %v545 = vpack.c.b16 %v439, %v437
    %v546 = vpack.c.b16 %v440, %v438
    %v547 = vpack.c.b16 %v443, %v441
    %v548 = vpack.c.b16 %v444, %v442
    %v549 = vpack.c.b16 %v447, %v445
    %v550 = vpack.c.b16 %v448, %v446
    %v551 = vpack.c.b16 %v451, %v449
    %v552 = vpack.c.b16 %v452, %v450
    %v553 = vpack.c.b16 %v455, %v453
    %v554 = vpack.c.b16 %v456, %v454
    %vm653 = vcmask 130048
    %v655 = vsel %vm653, %v156, 0
    %657 = vmatprep.subr.bf16.mxu0 %v458
    %658 = vmatpush1.bf16.msra.mxu0 %v457
    %659 = vmatprep.subr.bf16.mxu0 %v460
    %660 = vmatpush1.bf16.msra.mxu0 %v459
    %661 = vmatprep.subr.bf16.mxu0 %v462
    %662 = vmatpush1.bf16.msra.mxu0 %v461
    %663 = vmatprep.subr.bf16.mxu0 %v464
    %664 = vmatpush1.bf16.msra.mxu0 %v463
    %665 = vmatprep.subr.bf16.mxu0 %v466
    %666 = vmatpush1.bf16.msra.mxu0 %v465
    %667 = vmatprep.subr.bf16.mxu0 %v468
    %668 = vmatpush1.bf16.msra.mxu0 %v467
    %669 = vmatprep.subr.bf16.mxu0 %v470
    %670 = vmatpush1.bf16.msra.mxu0 %v469
    %671 = vmatprep.subr.bf16.mxu0 %v472
    %672 = vmatpush1.bf16.msra.mxu0 %v471
    %673 = vmatprep.subr.bf16.mxu0 %v474
    %674 = vmatpush1.bf16.msra.mxu0 %v473
    %675 = vmatprep.subr.bf16.mxu0 %v476
    %676 = vmatpush1.bf16.msra.mxu0 %v475
    %677 = vmatprep.subr.bf16.mxu0 %v478
    %678 = vmatpush1.bf16.msra.mxu0 %v477
    %679 = vmatprep.subr.bf16.mxu0 %v480
    %680 = vmatpush1.bf16.msra.mxu0 %v479
    %681 = vmatprep.subr.bf16.mxu0 %v482
    %682 = vmatpush1.bf16.msra.mxu0 %v481
    %683 = vmatprep.subr.bf16.mxu0 %v484
    %684 = vmatpush1.bf16.msra.mxu0 %v483
    %685 = vmatprep.subr.bf16.mxu0 %v486
    %686 = vmatpush1.bf16.msra.mxu0 %v485
    %687 = vmatprep.subr.bf16.mxu0 %v488
    %688 = vmatpush1.bf16.msra.mxu0 %v487
    %689 = vmatprep.mubr.bf16.mxu0 %v151
    %690 = vmatmul.mubr.bf16.gmra.mrb[0].mxu0 %v150
    %v691 = vpop.f32.mrb[0].mxu0
    %v692 = vadd.f32 0.0, %v691
    %v693 = vpop.f32.mrb[0].mxu0
    %v694 = vadd.f32 0.0, %v693
    %v695 = vpop.f32.mrb[0].mxu0
    %v696 = vadd.f32 0.0, %v695
    %v697 = vpop.f32.mrb[0].mxu0
    %v698 = vadd.f32 0.0, %v697
    %699 = vdwg.mxu0
    %700 = vmatprep.subr.bf16.mxu0 %v490
    %701 = vmatpush1.bf16.msra.mxu0 %v489
    %702 = vmatprep.subr.bf16.mxu0 %v492
    %703 = vmatpush1.bf16.msra.mxu0 %v491
    %704 = vmatprep.subr.bf16.mxu0 %v494
    %705 = vmatpush1.bf16.msra.mxu0 %v493
    %706 = vmatprep.subr.bf16.mxu0 %v496
    %707 = vmatpush1.bf16.msra.mxu0 %v495
    %708 = vmatprep.subr.bf16.mxu0 %v498
    %709 = vmatpush1.bf16.msra.mxu0 %v497
    %710 = vmatprep.subr.bf16.mxu0 %v500
    %711 = vmatpush1.bf16.msra.mxu0 %v499
    %712 = vmatprep.subr.bf16.mxu0 %v502
    %713 = vmatpush1.bf16.msra.mxu0 %v501
    %714 = vmatprep.subr.bf16.mxu0 %v504
    %715 = vmatpush1.bf16.msra.mxu0 %v503
    %716 = vmatprep.subr.bf16.mxu0 %v506
    %717 = vmatpush1.bf16.msra.mxu0 %v505
    %718 = vmatprep.subr.bf16.mxu0 %v508
    %719 = vmatpush1.bf16.msra.mxu0 %v507
    %720 = vmatprep.subr.bf16.mxu0 %v510
    %721 = vmatpush1.bf16.msra.mxu0 %v509
    %722 = vmatprep.subr.bf16.mxu0 %v512
    %723 = vmatpush1.bf16.msra.mxu0 %v511
    %724 = vmatprep.subr.bf16.mxu0 %v514
    %725 = vmatpush1.bf16.msra.mxu0 %v513
    %726 = vmatprep.subr.bf16.mxu0 %v516
    %727 = vmatpush1.bf16.msra.mxu0 %v515
    %728 = vmatprep.subr.bf16.mxu0 %v518
    %729 = vmatpush1.bf16.msra.mxu0 %v517
    %730 = vmatprep.subr.bf16.mxu0 %v520
    %731 = vmatpush1.bf16.msra.mxu0 %v519
    %732 = vmatprep.mubr.bf16.mxu0 %v153
    %733 = vmatmul.mubr.bf16.gmra.mrb[0].mxu0 %v152
    %v734 = vpop.f32.mrb[0].mxu0
    %v735 = vadd.f32 %v692, %v734
    %v736 = vpop.f32.mrb[0].mxu0
    %v737 = vadd.f32 %v694, %v736
    %v738 = vpop.f32.mrb[0].mxu0
    %v739 = vadd.f32 %v696, %v738
    %v740 = vpop.f32.mrb[0].mxu0
    %v741 = vadd.f32 %v698, %v740
    %742 = vdwg.mxu0
    %743 = vmatprep.subr.bf16.mxu0 %v522
    %744 = vmatpush1.bf16.msra.mxu0 %v521
    %745 = vmatprep.subr.bf16.mxu0 %v524
    %746 = vmatpush1.bf16.msra.mxu0 %v523
    %747 = vmatprep.subr.bf16.mxu0 %v526
    %748 = vmatpush1.bf16.msra.mxu0 %v525
    %749 = vmatprep.subr.bf16.mxu0 %v528
    %750 = vmatpush1.bf16.msra.mxu0 %v527
    %751 = vmatprep.subr.bf16.mxu0 %v530
    %752 = vmatpush1.bf16.msra.mxu0 %v529
    %753 = vmatprep.subr.bf16.mxu0 %v532
    %754 = vmatpush1.bf16.msra.mxu0 %v531
    %755 = vmatprep.subr.bf16.mxu0 %v534
    %756 = vmatpush1.bf16.msra.mxu0 %v533
    %757 = vmatprep.subr.bf16.mxu0 %v536
    %758 = vmatpush1.bf16.msra.mxu0 %v535
    %759 = vmatprep.subr.bf16.mxu0 %v538
    %760 = vmatpush1.bf16.msra.mxu0 %v537
    %761 = vmatprep.subr.bf16.mxu0 %v540
    %762 = vmatpush1.bf16.msra.mxu0 %v539
    %763 = vmatprep.subr.bf16.mxu0 %v542
    %764 = vmatpush1.bf16.msra.mxu0 %v541
    %765 = vmatprep.subr.bf16.mxu0 %v544
    %766 = vmatpush1.bf16.msra.mxu0 %v543
    %767 = vmatprep.subr.bf16.mxu0 %v546
    %768 = vmatpush1.bf16.msra.mxu0 %v545
    %769 = vmatprep.subr.bf16.mxu0 %v548
    %770 = vmatpush1.bf16.msra.mxu0 %v547
    %771 = vmatprep.subr.bf16.mxu0 %v550
    %772 = vmatpush1.bf16.msra.mxu0 %v549
    %773 = vmatprep.subr.bf16.mxu0 %v552
    %774 = vmatpush1.bf16.msra.mxu0 %v551
    %775 = vmatprep.mubr.bf16.mxu0 %v155
    %776 = vmatmul.mubr.bf16.gmra.mrb[0].mxu0 %v154
    %v777 = vpop.f32.mrb[0].mxu0
    %v778 = vadd.f32 %v735, %v777
    %v779 = vpop.f32.mrb[0].mxu0
    %v780 = vadd.f32 %v737, %v779
    %v781 = vpop.f32.mrb[0].mxu0
    %v782 = vadd.f32 %v739, %v781
    %v783 = vpop.f32.mrb[0].mxu0
    %v784 = vadd.f32 %v741, %v783
    %785 = vdwg.mxu0
    %786 = vmatprep.subr.bf16.mxu0 %v554
    %787 = vmatpush1.bf16.msra.mxu0 %v553
    %788 = vmatprep.subr.bf16.mxu0 0
    %789 = vmatpush1.bf16.msra.mxu0 0
    %790 = vmatprep.subr.bf16.mxu0 0
    %791 = vmatpush1.bf16.msra.mxu0 0
    %792 = vmatprep.subr.bf16.mxu0 0
    %793 = vmatpush1.bf16.msra.mxu0 0
    %794 = vmatprep.subr.bf16.mxu0 0
    %795 = vmatpush1.bf16.msra.mxu0 0
    %796 = vmatprep.subr.bf16.mxu0 0
    %797 = vmatpush1.bf16.msra.mxu0 0
    %798 = vmatprep.subr.bf16.mxu0 0
    %799 = vmatpush1.bf16.msra.mxu0 0
    %800 = vmatprep.subr.bf16.mxu0 0
    %801 = vmatpush1.bf16.msra.mxu0 0
    %802 = vmatprep.subr.bf16.mxu0 0
    %803 = vmatpush1.bf16.msra.mxu0 0
    %804 = vmatprep.subr.bf16.mxu0 0
    %805 = vmatpush1.bf16.msra.mxu0 0
    %806 = vmatprep.subr.bf16.mxu0 0
    %807 = vmatpush1.bf16.msra.mxu0 0
    %808 = vmatprep.subr.bf16.mxu0 0
    %809 = vmatpush1.bf16.msra.mxu0 0
    %810 = vmatprep.subr.bf16.mxu0 0
    %811 = vmatpush1.bf16.msra.mxu0 0
    %812 = vmatprep.subr.bf16.mxu0 0
    %813 = vmatpush1.bf16.msra.mxu0 0
    %814 = vmatprep.subr.bf16.mxu0 0
    %815 = vmatpush1.bf16.msra.mxu0 0
    %816 = vmatprep.subr.bf16.mxu0 0
    %817 = vmatpush1.bf16.msra.mxu0 0
    %818 = vmatprep.mubr.bf16.mxu0 0
    %819 = vmatmul.mubr.bf16.gmra.mrb[0].mxu0 %v655
    %v820 = vpop.f32.mrb[0].mxu0
    %v821 = vadd.f32 %v778, %v820
    %v822 = vpop.f32.mrb[0].mxu0
    %v823 = vadd.f32 %v780, %v822
    %v824 = vpop.f32.mrb[0].mxu0
    %v825 = vadd.f32 %v782, %v824
    %v826 = vpop.f32.mrb[0].mxu0
    %v827 = vadd.f32 %v784, %v826
    %828 = vdwg.mxu0
    %s829 = scalar_lea.vmem %s1, 784
    %v830 = vld [vmem:[%s829] sm:$0xff]
    %v831 = vld [vmem:[%s829 + $0x8] sm:$0xff]
    %v832 = vld [vmem:[%s829 + $0x10] sm:$0xff]
    %v833 = vld [vmem:[%s829 + $0x18] sm:$0xff]
    %v834 = vld [vmem:[%s829 + $0x20] sm:$0xff]
    %v835 = vld [vmem:[%s829 + $0x28] sm:$0xff]
    %v836 = vld [vmem:[%s829 + $0x30] sm:$0xff]
    %v837 = vld [vmem:[%s829 + $0x38] sm:$0xff]
    %v838 = vld [vmem:[%s829 + $0x40] sm:$0xff]
    %v839 = vld [vmem:[%s829 + $0x48] sm:$0xff]
    %v840 = vld [vmem:[%s829 + $0x50] sm:$0xff]
    %v841 = vld [vmem:[%s829 + $0x58] sm:$0xff]
    %v842 = vld [vmem:[%s829 + $0x60] sm:$0xff]
    %v843 = vld [vmem:[%s829 + $0x68] sm:$0xff]
    %v844 = vld [vmem:[%s829 + $0x70] sm:$0xff]
    %v845 = vld [vmem:[%s829 + $0x78] sm:$0xff]
    %v846 = vld [vmem:[%s829 + $0x80] sm:$0xff]
    %v847 = vld [vmem:[%s829 + $0x88] sm:$0xff]
    %v848 = vld [vmem:[%s829 + $0x90] sm:$0xff]
    %v849 = vld [vmem:[%s829 + $0x98] sm:$0xff]
    %v850 = vld [vmem:[%s829 + $0xa0] sm:$0xff]
    %v851 = vld [vmem:[%s829 + $0xa8] sm:$0xff]
    %v852 = vld [vmem:[%s829 + $0xb0] sm:$0xff]
    %v853 = vld [vmem:[%s829 + $0xb8] sm:$0xff]
    %v854 = vld [vmem:[%s829 + $0xc0] sm:$0xff]
    %v855 = vld [vmem:[%s829 + $0xc8] sm:$0xff]
    %v856 = vld [vmem:[%s829 + $0xd0] sm:$0xff]
    %v857 = vld [vmem:[%s829 + $0xd8] sm:$0xff]
    %v858 = vld [vmem:[%s829 + $0xe0] sm:$0xff]
    %v859 = vld [vmem:[%s829 + $0xe8] sm:$0xff]
    %v860 = vld [vmem:[%s829 + $0xf0] sm:$0xff]
    %v861 = vld [vmem:[%s829 + $0xf8] sm:$0xff]
    %v862 = vld [vmem:[%s829 + $0x100] sm:$0xff]
    %v863 = vld [vmem:[%s829 + $0x108] sm:$0xff]
    %v864 = vld [vmem:[%s829 + $0x110] sm:$0xff]
    %v865 = vld [vmem:[%s829 + $0x118] sm:$0xff]
    %v866 = vld [vmem:[%s829 + $0x120] sm:$0xff]
    %v867 = vld [vmem:[%s829 + $0x128] sm:$0xff]
    %v868 = vld [vmem:[%s829 + $0x130] sm:$0xff]
    %v869 = vld [vmem:[%s829 + $0x138] sm:$0xff]
    %v870 = vld [vmem:[%s829 + $0x140] sm:$0xff]
    %v871 = vld [vmem:[%s829 + $0x148] sm:$0xff]
    %v872 = vld [vmem:[%s829 + $0x150] sm:$0xff]
    %v873 = vld [vmem:[%s829 + $0x158] sm:$0xff]
    %v874 = vld [vmem:[%s829 + $0x160] sm:$0xff]
    %v875 = vld [vmem:[%s829 + $0x168] sm:$0xff]
    %v876 = vld [vmem:[%s829 + $0x170] sm:$0xff]
    %v877 = vld [vmem:[%s829 + $0x178] sm:$0xff]
    %v878 = vld [vmem:[%s829 + $0x180] sm:$0xff]
    %v879 = vld [vmem:[%s829 + $0x188] sm:$0xff]
    %v880 = vld [vmem:[%s829 + $0x190] sm:$0xff]
    %v881 = vld [vmem:[%s829 + $0x198] sm:$0xff]
    %v882 = vld [vmem:[%s829 + $0x1a0] sm:$0xff]
    %v883 = vld [vmem:[%s829 + $0x1a8] sm:$0xff]
    %v884 = vld [vmem:[%s829 + $0x1b0] sm:$0xff]
    %v885 = vld [vmem:[%s829 + $0x1b8] sm:$0xff]
    %v886 = vld [vmem:[%s829 + $0x1c0] sm:$0xff]
    %v887 = vld [vmem:[%s829 + $0x1c8] sm:$0xff]
    %v888 = vld [vmem:[%s829 + $0x1d0] sm:$0xff]
    %v889 = vld [vmem:[%s829 + $0x1d8] sm:$0xff]
    %v890 = vld [vmem:[%s829 + $0x1e0] sm:$0xff]
    %v891 = vld [vmem:[%s829 + $0x1e8] sm:$0xff]
    %v892 = vld [vmem:[%s829 + $0x1f0] sm:$0xff]
    %v893 = vld [vmem:[%s829 + $0x1f8] sm:$0xff]
    %v894 = vld [vmem:[%s829 + $0x200] sm:$0xff]
    %v895 = vld [vmem:[%s829 + $0x208] sm:$0xff]
    %v896 = vld [vmem:[%s829 + $0x210] sm:$0xff]
    %v897 = vld [vmem:[%s829 + $0x218] sm:$0xff]
    %v898 = vld [vmem:[%s829 + $0x220] sm:$0xff]
    %v899 = vld [vmem:[%s829 + $0x228] sm:$0xff]
    %v900 = vld [vmem:[%s829 + $0x230] sm:$0xff]
    %v901 = vld [vmem:[%s829 + $0x238] sm:$0xff]
    %v902 = vld [vmem:[%s829 + $0x240] sm:$0xff]
    %v903 = vld [vmem:[%s829 + $0x248] sm:$0xff]
    %v904 = vld [vmem:[%s829 + $0x250] sm:$0xff]
    %v905 = vld [vmem:[%s829 + $0x258] sm:$0xff]
    %v906 = vld [vmem:[%s829 + $0x260] sm:$0xff]
    %v907 = vld [vmem:[%s829 + $0x268] sm:$0xff]
    %v908 = vld [vmem:[%s829 + $0x270] sm:$0xff]
    %v909 = vld [vmem:[%s829 + $0x278] sm:$0xff]
    %v910 = vld [vmem:[%s829 + $0x280] sm:$0xff]
    %v911 = vld [vmem:[%s829 + $0x288] sm:$0xff]
    %v912 = vld [vmem:[%s829 + $0x290] sm:$0xff]
    %v913 = vld [vmem:[%s829 + $0x298] sm:$0xff]
    %v914 = vld [vmem:[%s829 + $0x2a0] sm:$0xff]
    %v915 = vld [vmem:[%s829 + $0x2a8] sm:$0xff]
    %v916 = vld [vmem:[%s829 + $0x2b0] sm:$0xff]
    %v917 = vld [vmem:[%s829 + $0x2b8] sm:$0xff]
    %v918 = vld [vmem:[%s829 + $0x2c0] sm:$0xff]
    %v919 = vld [vmem:[%s829 + $0x2c8] sm:$0xff]
    %v920 = vld [vmem:[%s829 + $0x2d0] sm:$0xff]
    %v921 = vld [vmem:[%s829 + $0x2d8] sm:$0xff]
    %v922 = vld [vmem:[%s829 + $0x2e0] sm:$0xff]
    %v923 = vld [vmem:[%s829 + $0x2e8] sm:$0xff]
    %v924 = vld [vmem:[%s829 + $0x2f0] sm:$0xff]
    %v925 = vld [vmem:[%s829 + $0x2f8] sm:$0xff]
    %v926 = vld [vmem:[%s829 + $0x300] sm:$0xff]
    %v927 = vld [vmem:[%s829 + $0x308] sm:$0xff]
    %v1026 = vunpack.c.l.b16 %v830
    %v1027 = vunpack.c.h.b16 %v830
    %v1028 = vunpack.c.l.b16 %v831
    %v1029 = vunpack.c.h.b16 %v831
    %v1030 = vunpack.c.l.b16 %v832
    %v1031 = vunpack.c.h.b16 %v832
    %v1032 = vunpack.c.l.b16 %v833
    %v1033 = vunpack.c.h.b16 %v833
    %v1034 = vunpack.c.l.b16 %v834
    %v1035 = vunpack.c.h.b16 %v834
    %v1036 = vunpack.c.l.b16 %v835
    %v1037 = vunpack.c.h.b16 %v835
    %v1038 = vunpack.c.l.b16 %v836
    %v1039 = vunpack.c.h.b16 %v836
    %v1040 = vunpack.c.l.b16 %v837
    %v1041 = vunpack.c.h.b16 %v837
    %v1042 = vunpack.c.l.b16 %v838
    %v1043 = vunpack.c.h.b16 %v838
    %v1044 = vunpack.c.l.b16 %v839
    %v1045 = vunpack.c.h.b16 %v839
    %v1046 = vunpack.c.l.b16 %v840
    %v1047 = vunpack.c.h.b16 %v840
    %v1048 = vunpack.c.l.b16 %v841
    %v1049 = vunpack.c.h.b16 %v841
    %v1050 = vunpack.c.l.b16 %v842
    %v1051 = vunpack.c.h.b16 %v842
    %v1052 = vunpack.c.l.b16 %v843
    %v1053 = vunpack.c.h.b16 %v843
    %v1054 = vunpack.c.l.b16 %v844
    %v1055 = vunpack.c.h.b16 %v844
    %v1056 = vunpack.c.l.b16 %v845
    %v1057 = vunpack.c.h.b16 %v845
    %v1058 = vunpack.c.l.b16 %v846
    %v1059 = vunpack.c.h.b16 %v846
    %v1060 = vunpack.c.l.b16 %v847
    %v1061 = vunpack.c.h.b16 %v847
    %v1062 = vunpack.c.l.b16 %v848
    %v1063 = vunpack.c.h.b16 %v848
    %v1064 = vunpack.c.l.b16 %v849
    %v1065 = vunpack.c.h.b16 %v849
    %v1066 = vunpack.c.l.b16 %v850
    %v1067 = vunpack.c.h.b16 %v850
    %v1068 = vunpack.c.l.b16 %v851
    %v1069 = vunpack.c.h.b16 %v851
    %v1070 = vunpack.c.l.b16 %v852
    %v1071 = vunpack.c.h.b16 %v852
    %v1072 = vunpack.c.l.b16 %v853
    %v1073 = vunpack.c.h.b16 %v853
    %v1074 = vunpack.c.l.b16 %v854
    %v1075 = vunpack.c.h.b16 %v854
    %v1076 = vunpack.c.l.b16 %v855
    %v1077 = vunpack.c.h.b16 %v855
    %v1078 = vunpack.c.l.b16 %v856
    %v1079 = vunpack.c.h.b16 %v856
    %v1080 = vunpack.c.l.b16 %v857
    %v1081 = vunpack.c.h.b16 %v857
    %v1082 = vunpack.c.l.b16 %v858
    %v1083 = vunpack.c.h.b16 %v858
    %v1084 = vunpack.c.l.b16 %v859
    %v1085 = vunpack.c.h.b16 %v859
    %v1086 = vunpack.c.l.b16 %v860
    %v1087 = vunpack.c.h.b16 %v860
    %v1088 = vunpack.c.l.b16 %v861
    %v1089 = vunpack.c.h.b16 %v861
    %v1090 = vunpack.c.l.b16 %v862
    %v1091 = vunpack.c.h.b16 %v862
    %v1092 = vunpack.c.l.b16 %v863
    %v1093 = vunpack.c.h.b16 %v863
    %v1094 = vunpack.c.l.b16 %v864
    %v1095 = vunpack.c.h.b16 %v864
    %v1096 = vunpack.c.l.b16 %v865
    %v1097 = vunpack.c.h.b16 %v865
    %v1098 = vunpack.c.l.b16 %v866
    %v1099 = vunpack.c.h.b16 %v866
    %v1100 = vunpack.c.l.b16 %v867
    %v1101 = vunpack.c.h.b16 %v867
    %v1102 = vunpack.c.l.b16 %v868
    %v1103 = vunpack.c.h.b16 %v868
    %v1104 = vunpack.c.l.b16 %v869
    %v1105 = vunpack.c.h.b16 %v869
    %v1106 = vunpack.c.l.b16 %v870
    %v1107 = vunpack.c.h.b16 %v870
    %v1108 = vunpack.c.l.b16 %v871
    %v1109 = vunpack.c.h.b16 %v871
    %v1110 = vunpack.c.l.b16 %v872
    %v1111 = vunpack.c.h.b16 %v872
    %v1112 = vunpack.c.l.b16 %v873
    %v1113 = vunpack.c.h.b16 %v873
    %v1114 = vunpack.c.l.b16 %v874
    %v1115 = vunpack.c.h.b16 %v874
    %v1116 = vunpack.c.l.b16 %v875
    %v1117 = vunpack.c.h.b16 %v875
    %v1118 = vunpack.c.l.b16 %v876
    %v1119 = vunpack.c.h.b16 %v876
    %v1120 = vunpack.c.l.b16 %v877
    %v1121 = vunpack.c.h.b16 %v877
    %v1122 = vunpack.c.l.b16 %v878
    %v1123 = vunpack.c.h.b16 %v878
    %v1124 = vunpack.c.l.b16 %v879
    %v1125 = vunpack.c.h.b16 %v879
    %v1126 = vunpack.c.l.b16 %v880
    %v1127 = vunpack.c.h.b16 %v880
    %v1128 = vunpack.c.l.b16 %v881
    %v1129 = vunpack.c.h.b16 %v881
    %v1130 = vunpack.c.l.b16 %v882
    %v1131 = vunpack.c.h.b16 %v882
    %v1132 = vunpack.c.l.b16 %v883
    %v1133 = vunpack.c.h.b16 %v883
    %v1134 = vunpack.c.l.b16 %v884
    %v1135 = vunpack.c.h.b16 %v884
    %v1136 = vunpack.c.l.b16 %v885
    %v1137 = vunpack.c.h.b16 %v885
    %v1138 = vunpack.c.l.b16 %v886
    %v1139 = vunpack.c.h.b16 %v886
    %v1140 = vunpack.c.l.b16 %v887
    %v1141 = vunpack.c.h.b16 %v887
    %v1142 = vunpack.c.l.b16 %v888
    %v1143 = vunpack.c.h.b16 %v888
    %v1144 = vunpack.c.l.b16 %v889
    %v1145 = vunpack.c.h.b16 %v889
    %v1146 = vunpack.c.l.b16 %v890
    %v1147 = vunpack.c.h.b16 %v890
    %v1148 = vunpack.c.l.b16 %v891
    %v1149 = vunpack.c.h.b16 %v891
    %v1150 = vunpack.c.l.b16 %v892
    %v1151 = vunpack.c.h.b16 %v892
    %v1152 = vunpack.c.l.b16 %v893
    %v1153 = vunpack.c.h.b16 %v893
    %v1154 = vunpack.c.l.b16 %v894
    %v1155 = vunpack.c.h.b16 %v894
    %v1156 = vunpack.c.l.b16 %v895
    %v1157 = vunpack.c.h.b16 %v895
    %v1158 = vunpack.c.l.b16 %v896
    %v1159 = vunpack.c.h.b16 %v896
    %v1160 = vunpack.c.l.b16 %v897
    %v1161 = vunpack.c.h.b16 %v897
    %v1162 = vunpack.c.l.b16 %v898
    %v1163 = vunpack.c.h.b16 %v898
    %v1164 = vunpack.c.l.b16 %v899
    %v1165 = vunpack.c.h.b16 %v899
    %v1166 = vunpack.c.l.b16 %v900
    %v1167 = vunpack.c.h.b16 %v900
    %v1168 = vunpack.c.l.b16 %v901
    %v1169 = vunpack.c.h.b16 %v901
    %v1170 = vunpack.c.l.b16 %v902
    %v1171 = vunpack.c.h.b16 %v902
    %v1172 = vunpack.c.l.b16 %v903
    %v1173 = vunpack.c.h.b16 %v903
    %v1174 = vunpack.c.l.b16 %v904
    %v1175 = vunpack.c.h.b16 %v904
    %v1176 = vunpack.c.l.b16 %v905
    %v1177 = vunpack.c.h.b16 %v905
    %v1178 = vunpack.c.l.b16 %v906
    %v1179 = vunpack.c.h.b16 %v906
    %v1180 = vunpack.c.l.b16 %v907
    %v1181 = vunpack.c.h.b16 %v907
    %v1182 = vunpack.c.l.b16 %v908
    %v1183 = vunpack.c.h.b16 %v908
    %v1184 = vunpack.c.l.b16 %v909
    %v1185 = vunpack.c.h.b16 %v909
    %v1186 = vunpack.c.l.b16 %v910
    %v1187 = vunpack.c.h.b16 %v910
    %v1188 = vunpack.c.l.b16 %v911
    %v1189 = vunpack.c.h.b16 %v911
    %v1190 = vunpack.c.l.b16 %v912
    %v1191 = vunpack.c.h.b16 %v912
    %v1192 = vunpack.c.l.b16 %v913
    %v1193 = vunpack.c.h.b16 %v913
    %v1194 = vunpack.c.l.b16 %v914
    %v1195 = vunpack.c.h.b16 %v914
    %v1196 = vunpack.c.l.b16 %v915
    %v1197 = vunpack.c.h.b16 %v915
    %v1198 = vunpack.c.l.b16 %v916
    %v1199 = vunpack.c.h.b16 %v916
    %v1200 = vunpack.c.l.b16 %v917
    %v1201 = vunpack.c.h.b16 %v917
    %v1202 = vunpack.c.l.b16 %v918
    %v1203 = vunpack.c.h.b16 %v918
    %v1204 = vunpack.c.l.b16 %v919
    %v1205 = vunpack.c.h.b16 %v919
    %v1206 = vunpack.c.l.b16 %v920
    %v1207 = vunpack.c.h.b16 %v920
    %v1208 = vunpack.c.l.b16 %v921
    %v1209 = vunpack.c.h.b16 %v921
    %v1210 = vunpack.c.l.b16 %v922
    %v1211 = vunpack.c.h.b16 %v922
    %v1212 = vunpack.c.l.b16 %v923
    %v1213 = vunpack.c.h.b16 %v923
    %v1214 = vunpack.c.l.b16 %v924
    %v1215 = vunpack.c.h.b16 %v924
    %v1216 = vunpack.c.l.b16 %v925
    %v1217 = vunpack.c.h.b16 %v925
    %v1218 = vunpack.c.l.b16 %v926
    %v1219 = vunpack.c.h.b16 %v926
    %v1220 = vunpack.c.l.b16 %v927
    %v1221 = vunpack.c.h.b16 %v927
    %v1222 = vpack.c.b16 %v1028, %v1026
    %v1223 = vpack.c.b16 %v1029, %v1027
    %v1224 = vpack.c.b16 %v1032, %v1030
    %v1225 = vpack.c.b16 %v1033, %v1031
    %v1226 = vpack.c.b16 %v1036, %v1034
    %v1227 = vpack.c.b16 %v1037, %v1035
    %v1228 = vpack.c.b16 %v1040, %v1038
    %v1229 = vpack.c.b16 %v1041, %v1039
    %v1230 = vpack.c.b16 %v1044, %v1042
    %v1231 = vpack.c.b16 %v1045, %v1043
    %v1232 = vpack.c.b16 %v1048, %v1046
    %v1233 = vpack.c.b16 %v1049, %v1047
    %v1234 = vpack.c.b16 %v1052, %v1050
    %v1235 = vpack.c.b16 %v1053, %v1051
    %v1236 = vpack.c.b16 %v1056, %v1054
    %v1237 = vpack.c.b16 %v1057, %v1055
    %v1238 = vpack.c.b16 %v1060, %v1058
    %v1239 = vpack.c.b16 %v1061, %v1059
    %v1240 = vpack.c.b16 %v1064, %v1062
    %v1241 = vpack.c.b16 %v1065, %v1063
    %v1242 = vpack.c.b16 %v1068, %v1066
    %v1243 = vpack.c.b16 %v1069, %v1067
    %v1244 = vpack.c.b16 %v1072, %v1070
    %v1245 = vpack.c.b16 %v1073, %v1071
    %v1246 = vpack.c.b16 %v1076, %v1074
    %v1247 = vpack.c.b16 %v1077, %v1075
    %v1248 = vpack.c.b16 %v1080, %v1078
    %v1249 = vpack.c.b16 %v1081, %v1079
    %v1250 = vpack.c.b16 %v1084, %v1082
    %v1251 = vpack.c.b16 %v1085, %v1083
    %v1252 = vpack.c.b16 %v1088, %v1086
    %v1253 = vpack.c.b16 %v1089, %v1087
    %v1254 = vpack.c.b16 %v1092, %v1090
    %v1255 = vpack.c.b16 %v1093, %v1091
    %v1256 = vpack.c.b16 %v1096, %v1094
    %v1257 = vpack.c.b16 %v1097, %v1095
    %v1258 = vpack.c.b16 %v1100, %v1098
    %v1259 = vpack.c.b16 %v1101, %v1099
    %v1260 = vpack.c.b16 %v1104, %v1102
    %v1261 = vpack.c.b16 %v1105, %v1103
    %v1262 = vpack.c.b16 %v1108, %v1106
    %v1263 = vpack.c.b16 %v1109, %v1107
    %v1264 = vpack.c.b16 %v1112, %v1110
    %v1265 = vpack.c.b16 %v1113, %v1111
    %v1266 = vpack.c.b16 %v1116, %v1114
    %v1267 = vpack.c.b16 %v1117, %v1115
    %v1268 = vpack.c.b16 %v1120, %v1118
    %v1269 = vpack.c.b16 %v1121, %v1119
    %v1270 = vpack.c.b16 %v1124, %v1122
    %v1271 = vpack.c.b16 %v1125, %v1123
    %v1272 = vpack.c.b16 %v1128, %v1126
    %v1273 = vpack.c.b16 %v1129, %v1127
    %v1274 = vpack.c.b16 %v1132, %v1130
    %v1275 = vpack.c.b16 %v1133, %v1131
    %v1276 = vpack.c.b16 %v1136, %v1134
    %v1277 = vpack.c.b16 %v1137, %v1135
    %v1278 = vpack.c.b16 %v1140, %v1138
    %v1279 = vpack.c.b16 %v1141, %v1139
    %v1280 = vpack.c.b16 %v1144, %v1142
    %v1281 = vpack.c.b16 %v1145, %v1143
    %v1282 = vpack.c.b16 %v1148, %v1146
    %v1283 = vpack.c.b16 %v1149, %v1147
    %v1284 = vpack.c.b16 %v1152, %v1150
    %v1285 = vpack.c.b16 %v1153, %v1151
    %v1286 = vpack.c.b16 %v1156, %v1154
    %v1287 = vpack.c.b16 %v1157, %v1155
    %v1288 = vpack.c.b16 %v1160, %v1158
    %v1289 = vpack.c.b16 %v1161, %v1159
    %v1290 = vpack.c.b16 %v1164, %v1162
    %v1291 = vpack.c.b16 %v1165, %v1163
    %v1292 = vpack.c.b16 %v1168, %v1166
    %v1293 = vpack.c.b16 %v1169, %v1167
    %v1294 = vpack.c.b16 %v1172, %v1170
    %v1295 = vpack.c.b16 %v1173, %v1171
    %v1296 = vpack.c.b16 %v1176, %v1174
    %v1297 = vpack.c.b16 %v1177, %v1175
    %v1298 = vpack.c.b16 %v1180, %v1178
    %v1299 = vpack.c.b16 %v1181, %v1179
    %v1300 = vpack.c.b16 %v1184, %v1182
    %v1301 = vpack.c.b16 %v1185, %v1183
    %v1302 = vpack.c.b16 %v1188, %v1186
    %v1303 = vpack.c.b16 %v1189, %v1187
    %v1304 = vpack.c.b16 %v1192, %v1190
    %v1305 = vpack.c.b16 %v1193, %v1191
    %v1306 = vpack.c.b16 %v1196, %v1194
    %v1307 = vpack.c.b16 %v1197, %v1195
    %v1308 = vpack.c.b16 %v1200, %v1198
    %v1309 = vpack.c.b16 %v1201, %v1199
    %v1310 = vpack.c.b16 %v1204, %v1202
    %v1311 = vpack.c.b16 %v1205, %v1203
    %v1312 = vpack.c.b16 %v1208, %v1206
    %v1313 = vpack.c.b16 %v1209, %v1207
    %v1314 = vpack.c.b16 %v1212, %v1210
    %v1315 = vpack.c.b16 %v1213, %v1211
    %v1316 = vpack.c.b16 %v1216, %v1214
    %v1317 = vpack.c.b16 %v1217, %v1215
    %v1318 = vpack.c.b16 %v1220, %v1218
    %v1319 = vpack.c.b16 %v1221, %v1219
    %1418 = vmatprep.subr.bf16.mxu0 %v1223
    %1419 = vmatpush1.bf16.msra.mxu0 %v1222
    %1420 = vmatprep.subr.bf16.mxu0 %v1225
    %1421 = vmatpush1.bf16.msra.mxu0 %v1224
    %1422 = vmatprep.subr.bf16.mxu0 %v1227
    %1423 = vmatpush1.bf16.msra.mxu0 %v1226
    %1424 = vmatprep.subr.bf16.mxu0 %v1229
    %1425 = vmatpush1.bf16.msra.mxu0 %v1228
    %1426 = vmatprep.subr.bf16.mxu0 %v1231
    %1427 = vmatpush1.bf16.msra.mxu0 %v1230
    %1428 = vmatprep.subr.bf16.mxu0 %v1233
    %1429 = vmatpush1.bf16.msra.mxu0 %v1232
    %1430 = vmatprep.subr.bf16.mxu0 %v1235
    %1431 = vmatpush1.bf16.msra.mxu0 %v1234
    %1432 = vmatprep.subr.bf16.mxu0 %v1237
    %1433 = vmatpush1.bf16.msra.mxu0 %v1236
    %1434 = vmatprep.subr.bf16.mxu0 %v1239
    %1435 = vmatpush1.bf16.msra.mxu0 %v1238
    %1436 = vmatprep.subr.bf16.mxu0 %v1241
    %1437 = vmatpush1.bf16.msra.mxu0 %v1240
    %1438 = vmatprep.subr.bf16.mxu0 %v1243
    %1439 = vmatpush1.bf16.msra.mxu0 %v1242
    %1440 = vmatprep.subr.bf16.mxu0 %v1245
    %1441 = vmatpush1.bf16.msra.mxu0 %v1244
    %1442 = vmatprep.subr.bf16.mxu0 %v1247
    %1443 = vmatpush1.bf16.msra.mxu0 %v1246
    %1444 = vmatprep.subr.bf16.mxu0 %v1249
    %1445 = vmatpush1.bf16.msra.mxu0 %v1248
    %1446 = vmatprep.subr.bf16.mxu0 %v1251
    %1447 = vmatpush1.bf16.msra.mxu0 %v1250
    %1448 = vmatprep.subr.bf16.mxu0 %v1253
    %1449 = vmatpush1.bf16.msra.mxu0 %v1252
    %1450 = vmatprep.mubr.bf16.mxu0 %v151
    %1451 = vmatmul.mubr.bf16.gmra.mrb[0].mxu0 %v150
    %v1452 = vpop.f32.mrb[0].mxu0
    %v1453 = vadd.f32 0.0, %v1452
    %v1454 = vpop.f32.mrb[0].mxu0
    %v1455 = vadd.f32 0.0, %v1454
    %v1456 = vpop.f32.mrb[0].mxu0
    %v1457 = vadd.f32 0.0, %v1456
    %v1458 = vpop.f32.mrb[0].mxu0
    %v1459 = vadd.f32 0.0, %v1458
    %1460 = vdwg.mxu0
    %1461 = vmatprep.subr.bf16.mxu0 %v1255
    %1462 = vmatpush1.bf16.msra.mxu0 %v1254
    %1463 = vmatprep.subr.bf16.mxu0 %v1257
    %1464 = vmatpush1.bf16.msra.mxu0 %v1256
    %1465 = vmatprep.subr.bf16.mxu0 %v1259
    %1466 = vmatpush1.bf16.msra.mxu0 %v1258
    %1467 = vmatprep.subr.bf16.mxu0 %v1261
    %1468 = vmatpush1.bf16.msra.mxu0 %v1260
    %1469 = vmatprep.subr.bf16.mxu0 %v1263
    %1470 = vmatpush1.bf16.msra.mxu0 %v1262
    %1471 = vmatprep.subr.bf16.mxu0 %v1265
    %1472 = vmatpush1.bf16.msra.mxu0 %v1264
    %1473 = vmatprep.subr.bf16.mxu0 %v1267
    %1474 = vmatpush1.bf16.msra.mxu0 %v1266
    %1475 = vmatprep.subr.bf16.mxu0 %v1269
    %1476 = vmatpush1.bf16.msra.mxu0 %v1268
    %1477 = vmatprep.subr.bf16.mxu0 %v1271
    %1478 = vmatpush1.bf16.msra.mxu0 %v1270
    %1479 = vmatprep.subr.bf16.mxu0 %v1273
    %1480 = vmatpush1.bf16.msra.mxu0 %v1272
    %1481 = vmatprep.subr.bf16.mxu0 %v1275
    %1482 = vmatpush1.bf16.msra.mxu0 %v1274
    %1483 = vmatprep.subr.bf16.mxu0 %v1277
    %1484 = vmatpush1.bf16.msra.mxu0 %v1276
    %1485 = vmatprep.subr.bf16.mxu0 %v1279
    %1486 = vmatpush1.bf16.msra.mxu0 %v1278
    %1487 = vmatprep.subr.bf16.mxu0 %v1281
    %1488 = vmatpush1.bf16.msra.mxu0 %v1280
    %1489 = vmatprep.subr.bf16.mxu0 %v1283
    %1490 = vmatpush1.bf16.msra.mxu0 %v1282
    %1491 = vmatprep.subr.bf16.mxu0 %v1285
    %1492 = vmatpush1.bf16.msra.mxu0 %v1284
    %1493 = vmatprep.mubr.bf16.mxu0 %v153
    %1494 = vmatmul.mubr.bf16.gmra.mrb[0].mxu0 %v152
    %v1495 = vpop.f32.mrb[0].mxu0
    %v1496 = vadd.f32 %v1453, %v1495
    %v1497 = vpop.f32.mrb[0].mxu0
    %v1498 = vadd.f32 %v1455, %v1497
    %v1499 = vpop.f32.mrb[0].mxu0
    %v1500 = vadd.f32 %v1457, %v1499
    %v1501 = vpop.f32.mrb[0].mxu0
    %v1502 = vadd.f32 %v1459, %v1501
    %1503 = vdwg.mxu0
    %1504 = vmatprep.subr.bf16.mxu0 %v1287
    %1505 = vmatpush1.bf16.msra.mxu0 %v1286
    %1506 = vmatprep.subr.bf16.mxu0 %v1289
    %1507 = vmatpush1.bf16.msra.mxu0 %v1288
    %1508 = vmatprep.subr.bf16.mxu0 %v1291
    %1509 = vmatpush1.bf16.msra.mxu0 %v1290
    %1510 = vmatprep.subr.bf16.mxu0 %v1293
    %1511 = vmatpush1.bf16.msra.mxu0 %v1292
    %1512 = vmatprep.subr.bf16.mxu0 %v1295
    %1513 = vmatpush1.bf16.msra.mxu0 %v1294
    %1514 = vmatprep.subr.bf16.mxu0 %v1297
    %1515 = vmatpush1.bf16.msra.mxu0 %v1296
    %1516 = vmatprep.subr.bf16.mxu0 %v1299
    %1517 = vmatpush1.bf16.msra.mxu0 %v1298
    %1518 = vmatprep.subr.bf16.mxu0 %v1301
    %1519 = vmatpush1.bf16.msra.mxu0 %v1300
    %1520 = vmatprep.subr.bf16.mxu0 %v1303
    %1521 = vmatpush1.bf16.msra.mxu0 %v1302
    %1522 = vmatprep.subr.bf16.mxu0 %v1305
    %1523 = vmatpush1.bf16.msra.mxu0 %v1304
    %1524 = vmatprep.subr.bf16.mxu0 %v1307
    %1525 = vmatpush1.bf16.msra.mxu0 %v1306
    %1526 = vmatprep.subr.bf16.mxu0 %v1309
    %1527 = vmatpush1.bf16.msra.mxu0 %v1308
    %1528 = vmatprep.subr.bf16.mxu0 %v1311
    %1529 = vmatpush1.bf16.msra.mxu0 %v1310
    %1530 = vmatprep.subr.bf16.mxu0 %v1313
    %1531 = vmatpush1.bf16.msra.mxu0 %v1312
    %1532 = vmatprep.subr.bf16.mxu0 %v1315
    %1533 = vmatpush1.bf16.msra.mxu0 %v1314
    %1534 = vmatprep.subr.bf16.mxu0 %v1317
    %1535 = vmatpush1.bf16.msra.mxu0 %v1316
    %1536 = vmatprep.mubr.bf16.mxu0 %v155
    %1537 = vmatmul.mubr.bf16.gmra.mrb[0].mxu0 %v154
    %v1538 = vpop.f32.mrb[0].mxu0
    %v1539 = vadd.f32 %v1496, %v1538
    %v1540 = vpop.f32.mrb[0].mxu0
    %v1541 = vadd.f32 %v1498, %v1540
    %v1542 = vpop.f32.mrb[0].mxu0
    %v1543 = vadd.f32 %v1500, %v1542
    %v1544 = vpop.f32.mrb[0].mxu0
    %v1545 = vadd.f32 %v1502, %v1544
    %1546 = vdwg.mxu0
    %1547 = vmatprep.subr.bf16.mxu0 %v1319
    %1548 = vmatpush1.bf16.msra.mxu0 %v1318
    %1549 = vmatprep.subr.bf16.mxu0 0
    %1550 = vmatpush1.bf16.msra.mxu0 0
    %1551 = vmatprep.subr.bf16.mxu0 0
    %1552 = vmatpush1.bf16.msra.mxu0 0
    %1553 = vmatprep.subr.bf16.mxu0 0
    %1554 = vmatpush1.bf16.msra.mxu0 0
    %1555 = vmatprep.subr.bf16.mxu0 0
    %1556 = vmatpush1.bf16.msra.mxu0 0
    %1557 = vmatprep.subr.bf16.mxu0 0
    %1558 = vmatpush1.bf16.msra.mxu0 0
    %1559 = vmatprep.subr.bf16.mxu0 0
    %1560 = vmatpush1.bf16.msra.mxu0 0
    %1561 = vmatprep.subr.bf16.mxu0 0
    %1562 = vmatpush1.bf16.msra.mxu0 0
    %1563 = vmatprep.subr.bf16.mxu0 0
    %1564 = vmatpush1.bf16.msra.mxu0 0
    %1565 = vmatprep.subr.bf16.mxu0 0
    %1566 = vmatpush1.bf16.msra.mxu0 0
    %1567 = vmatprep.subr.bf16.mxu0 0
    %1568 = vmatpush1.bf16.msra.mxu0 0
    %1569 = vmatprep.subr.bf16.mxu0 0
    %1570 = vmatpush1.bf16.msra.mxu0 0
    %1571 = vmatprep.subr.bf16.mxu0 0
    %1572 = vmatpush1.bf16.msra.mxu0 0
    %1573 = vmatprep.subr.bf16.mxu0 0
    %1574 = vmatpush1.bf16.msra.mxu0 0
    %1575 = vmatprep.subr.bf16.mxu0 0
    %1576 = vmatpush1.bf16.msra.mxu0 0
    %1577 = vmatprep.subr.bf16.mxu0 0
    %1578 = vmatpush1.bf16.msra.mxu0 0
    %1579 = vmatprep.mubr.bf16.mxu0 0
    %1580 = vmatmul.mubr.bf16.gmra.mrb[0].mxu0 %v655
    %v1581 = vpop.f32.mrb[0].mxu0
    %v1582 = vadd.f32 %v1539, %v1581
    %v1583 = vpop.f32.mrb[0].mxu0
    %v1584 = vadd.f32 %v1541, %v1583
    %v1585 = vpop.f32.mrb[0].mxu0
    %v1586 = vadd.f32 %v1543, %v1585
    %v1587 = vpop.f32.mrb[0].mxu0
    %v1588 = vadd.f32 %v1545, %v1587
    %1589 = vdwg.mxu0
    %v1590 = vmax.f32 %v821, %v1582
    %v1591 = vmax.f32 %v823, %v1584
    %v1592 = vmax.f32 %v825, %v1586
    %v1593 = vmax.f32 %v827, %v1588
    %s1594 = scalar_lea.vmem %s1, 1568
    %v1595 = vld [vmem:[%s1594] sm:$0xff]
    %v1596 = vld [vmem:[%s1594 + $0x8] sm:$0xff]
    %v1597 = vld [vmem:[%s1594 + $0x10] sm:$0xff]
    %v1598 = vld [vmem:[%s1594 + $0x18] sm:$0xff]
    %v1599 = vld [vmem:[%s1594 + $0x20] sm:$0xff]
    %v1600 = vld [vmem:[%s1594 + $0x28] sm:$0xff]
    %v1601 = vld [vmem:[%s1594 + $0x30] sm:$0xff]
    %v1602 = vld [vmem:[%s1594 + $0x38] sm:$0xff]
    %v1603 = vld [vmem:[%s1594 + $0x40] sm:$0xff]
    %v1604 = vld [vmem:[%s1594 + $0x48] sm:$0xff]
    %v1605 = vld [vmem:[%s1594 + $0x50] sm:$0xff]
    %v1606 = vld [vmem:[%s1594 + $0x58] sm:$0xff]
    %v1607 = vld [vmem:[%s1594 + $0x60] sm:$0xff]
    %v1608 = vld [vmem:[%s1594 + $0x68] sm:$0xff]
    %v1609 = vld [vmem:[%s1594 + $0x70] sm:$0xff]
    %v1610 = vld [vmem:[%s1594 + $0x78] sm:$0xff]
    %v1611 = vld [vmem:[%s1594 + $0x80] sm:$0xff]
    %v1612 = vld [vmem:[%s1594 + $0x88] sm:$0xff]
    %v1613 = vld [vmem:[%s1594 + $0x90] sm:$0xff]
    %v1614 = vld [vmem:[%s1594 + $0x98] sm:$0xff]
    %v1615 = vld [vmem:[%s1594 + $0xa0] sm:$0xff]
    %v1616 = vld [vmem:[%s1594 + $0xa8] sm:$0xff]
    %v1617 = vld [vmem:[%s1594 + $0xb0] sm:$0xff]
    %v1618 = vld [vmem:[%s1594 + $0xb8] sm:$0xff]
    %v1619 = vld [vmem:[%s1594 + $0xc0] sm:$0xff]
    %v1620 = vld [vmem:[%s1594 + $0xc8] sm:$0xff]
    %v1621 = vld [vmem:[%s1594 + $0xd0] sm:$0xff]
    %v1622 = vld [vmem:[%s1594 + $0xd8] sm:$0xff]
    %v1623 = vld [vmem:[%s1594 + $0xe0] sm:$0xff]
    %v1624 = vld [vmem:[%s1594 + $0xe8] sm:$0xff]
    %v1625 = vld [vmem:[%s1594 + $0xf0] sm:$0xff]
    %v1626 = vld [vmem:[%s1594 + $0xf8] sm:$0xff]
    %v1627 = vld [vmem:[%s1594 + $0x100] sm:$0xff]
    %v1628 = vld [vmem:[%s1594 + $0x108] sm:$0xff]
    %v1629 = vld [vmem:[%s1594 + $0x110] sm:$0xff]
    %v1630 = vld [vmem:[%s1594 + $0x118] sm:$0xff]
    %v1631 = vld [vmem:[%s1594 + $0x120] sm:$0xff]
    %v1632 = vld [vmem:[%s1594 + $0x128] sm:$0xff]
    %v1633 = vld [vmem:[%s1594 + $0x130] sm:$0xff]
    %v1634 = vld [vmem:[%s1594 + $0x138] sm:$0xff]
    %v1635 = vld [vmem:[%s1594 + $0x140] sm:$0xff]
    %v1636 = vld [vmem:[%s1594 + $0x148] sm:$0xff]
    %v1637 = vld [vmem:[%s1594 + $0x150] sm:$0xff]
    %v1638 = vld [vmem:[%s1594 + $0x158] sm:$0xff]
    %v1639 = vld [vmem:[%s1594 + $0x160] sm:$0xff]
    %v1640 = vld [vmem:[%s1594 + $0x168] sm:$0xff]
    %v1641 = vld [vmem:[%s1594 + $0x170] sm:$0xff]
    %v1642 = vld [vmem:[%s1594 + $0x178] sm:$0xff]
    %v1643 = vld [vmem:[%s1594 + $0x180] sm:$0xff]
    %v1644 = vld [vmem:[%s1594 + $0x188] sm:$0xff]
    %v1645 = vld [vmem:[%s1594 + $0x190] sm:$0xff]
    %v1646 = vld [vmem:[%s1594 + $0x198] sm:$0xff]
    %v1647 = vld [vmem:[%s1594 + $0x1a0] sm:$0xff]
    %v1648 = vld [vmem:[%s1594 + $0x1a8] sm:$0xff]
    %v1649 = vld [vmem:[%s1594 + $0x1b0] sm:$0xff]
    %v1650 = vld [vmem:[%s1594 + $0x1b8] sm:$0xff]
    %v1651 = vld [vmem:[%s1594 + $0x1c0] sm:$0xff]
    %v1652 = vld [vmem:[%s1594 + $0x1c8] sm:$0xff]
    %v1653 = vld [vmem:[%s1594 + $0x1d0] sm:$0xff]
    %v1654 = vld [vmem:[%s1594 + $0x1d8] sm:$0xff]
    %v1655 = vld [vmem:[%s1594 + $0x1e0] sm:$0xff]
    %v1656 = vld [vmem:[%s1594 + $0x1e8] sm:$0xff]
    %v1657 = vld [vmem:[%s1594 + $0x1f0] sm:$0xff]
    %v1658 = vld [vmem:[%s1594 + $0x1f8] sm:$0xff]
    %v1659 = vld [vmem:[%s1594 + $0x200] sm:$0xff]
    %v1660 = vld [vmem:[%s1594 + $0x208] sm:$0xff]
    %v1661 = vld [vmem:[%s1594 + $0x210] sm:$0xff]
    %v1662 = vld [vmem:[%s1594 + $0x218] sm:$0xff]
    %v1663 = vld [vmem:[%s1594 + $0x220] sm:$0xff]
    %v1664 = vld [vmem:[%s1594 + $0x228] sm:$0xff]
    %v1665 = vld [vmem:[%s1594 + $0x230] sm:$0xff]
    %v1666 = vld [vmem:[%s1594 + $0x238] sm:$0xff]
    %v1667 = vld [vmem:[%s1594 + $0x240] sm:$0xff]
    %v1668 = vld [vmem:[%s1594 + $0x248] sm:$0xff]
    %v1669 = vld [vmem:[%s1594 + $0x250] sm:$0xff]
    %v1670 = vld [vmem:[%s1594 + $0x258] sm:$0xff]
    %v1671 = vld [vmem:[%s1594 + $0x260] sm:$0xff]
    %v1672 = vld [vmem:[%s1594 + $0x268] sm:$0xff]
    %v1673 = vld [vmem:[%s1594 + $0x270] sm:$0xff]
    %v1674 = vld [vmem:[%s1594 + $0x278] sm:$0xff]
    %v1675 = vld [vmem:[%s1594 + $0x280] sm:$0xff]
    %v1676 = vld [vmem:[%s1594 + $0x288] sm:$0xff]
    %v1677 = vld [vmem:[%s1594 + $0x290] sm:$0xff]
    %v1678 = vld [vmem:[%s1594 + $0x298] sm:$0xff]
    %v1679 = vld [vmem:[%s1594 + $0x2a0] sm:$0xff]
    %v1680 = vld [vmem:[%s1594 + $0x2a8] sm:$0xff]
    %v1681 = vld [vmem:[%s1594 + $0x2b0] sm:$0xff]
    %v1682 = vld [vmem:[%s1594 + $0x2b8] sm:$0xff]
    %v1683 = vld [vmem:[%s1594 + $0x2c0] sm:$0xff]
    %v1684 = vld [vmem:[%s1594 + $0x2c8] sm:$0xff]
    %v1685 = vld [vmem:[%s1594 + $0x2d0] sm:$0xff]
    %v1686 = vld [vmem:[%s1594 + $0x2d8] sm:$0xff]
    %v1687 = vld [vmem:[%s1594 + $0x2e0] sm:$0xff]
    %v1688 = vld [vmem:[%s1594 + $0x2e8] sm:$0xff]
    %v1689 = vld [vmem:[%s1594 + $0x2f0] sm:$0xff]
    %v1690 = vld [vmem:[%s1594 + $0x2f8] sm:$0xff]
    %v1691 = vld [vmem:[%s1594 + $0x300] sm:$0xff]
    %v1692 = vld [vmem:[%s1594 + $0x308] sm:$0xff]
    %v1791 = vunpack.c.l.b16 %v1595
    %v1792 = vunpack.c.h.b16 %v1595
    %v1793 = vunpack.c.l.b16 %v1596
    %v1794 = vunpack.c.h.b16 %v1596
    %v1795 = vunpack.c.l.b16 %v1597
    %v1796 = vunpack.c.h.b16 %v1597
    %v1797 = vunpack.c.l.b16 %v1598
    %v1798 = vunpack.c.h.b16 %v1598
    %v1799 = vunpack.c.l.b16 %v1599
    %v1800 = vunpack.c.h.b16 %v1599
    %v1801 = vunpack.c.l.b16 %v1600
    %v1802 = vunpack.c.h.b16 %v1600
    %v1803 = vunpack.c.l.b16 %v1601
    %v1804 = vunpack.c.h.b16 %v1601
    %v1805 = vunpack.c.l.b16 %v1602
    %v1806 = vunpack.c.h.b16 %v1602
    %v1807 = vunpack.c.l.b16 %v1603
    %v1808 = vunpack.c.h.b16 %v1603
    %v1809 = vunpack.c.l.b16 %v1604
    %v1810 = vunpack.c.h.b16 %v1604
    %v1811 = vunpack.c.l.b16 %v1605
    %v1812 = vunpack.c.h.b16 %v1605
    %v1813 = vunpack.c.l.b16 %v1606
    %v1814 = vunpack.c.h.b16 %v1606
    %v1815 = vunpack.c.l.b16 %v1607
    %v1816 = vunpack.c.h.b16 %v1607
    %v1817 = vunpack.c.l.b16 %v1608
    %v1818 = vunpack.c.h.b16 %v1608
    %v1819 = vunpack.c.l.b16 %v1609
    %v1820 = vunpack.c.h.b16 %v1609
    %v1821 = vunpack.c.l.b16 %v1610
    %v1822 = vunpack.c.h.b16 %v1610
    %v1823 = vunpack.c.l.b16 %v1611
    %v1824 = vunpack.c.h.b16 %v1611
    %v1825 = vunpack.c.l.b16 %v1612
    %v1826 = vunpack.c.h.b16 %v1612
    %v1827 = vunpack.c.l.b16 %v1613
    %v1828 = vunpack.c.h.b16 %v1613
    %v1829 = vunpack.c.l.b16 %v1614
    %v1830 = vunpack.c.h.b16 %v1614
    %v1831 = vunpack.c.l.b16 %v1615
    %v1832 = vunpack.c.h.b16 %v1615
    %v1833 = vunpack.c.l.b16 %v1616
    %v1834 = vunpack.c.h.b16 %v1616
    %v1835 = vunpack.c.l.b16 %v1617
    %v1836 = vunpack.c.h.b16 %v1617
    %v1837 = vunpack.c.l.b16 %v1618
    %v1838 = vunpack.c.h.b16 %v1618
    %v1839 = vunpack.c.l.b16 %v1619
    %v1840 = vunpack.c.h.b16 %v1619
    %v1841 = vunpack.c.l.b16 %v1620
    %v1842 = vunpack.c.h.b16 %v1620
    %v1843 = vunpack.c.l.b16 %v1621
    %v1844 = vunpack.c.h.b16 %v1621
    %v1845 = vunpack.c.l.b16 %v1622
    %v1846 = vunpack.c.h.b16 %v1622
    %v1847 = vunpack.c.l.b16 %v1623
    %v1848 = vunpack.c.h.b16 %v1623
    %v1849 = vunpack.c.l.b16 %v1624
    %v1850 = vunpack.c.h.b16 %v1624
    %v1851 = vunpack.c.l.b16 %v1625
    %v1852 = vunpack.c.h.b16 %v1625
    %v1853 = vunpack.c.l.b16 %v1626
    %v1854 = vunpack.c.h.b16 %v1626
    %v1855 = vunpack.c.l.b16 %v1627
    %v1856 = vunpack.c.h.b16 %v1627
    %v1857 = vunpack.c.l.b16 %v1628
    %v1858 = vunpack.c.h.b16 %v1628
    %v1859 = vunpack.c.l.b16 %v1629
    %v1860 = vunpack.c.h.b16 %v1629
    %v1861 = vunpack.c.l.b16 %v1630
    %v1862 = vunpack.c.h.b16 %v1630
    %v1863 = vunpack.c.l.b16 %v1631
    %v1864 = vunpack.c.h.b16 %v1631
    %v1865 = vunpack.c.l.b16 %v1632
    %v1866 = vunpack.c.h.b16 %v1632
    %v1867 = vunpack.c.l.b16 %v1633
    %v1868 = vunpack.c.h.b16 %v1633
    %v1869 = vunpack.c.l.b16 %v1634
    %v1870 = vunpack.c.h.b16 %v1634
    %v1871 = vunpack.c.l.b16 %v1635
    %v1872 = vunpack.c.h.b16 %v1635
    %v1873 = vunpack.c.l.b16 %v1636
    %v1874 = vunpack.c.h.b16 %v1636
    %v1875 = vunpack.c.l.b16 %v1637
    %v1876 = vunpack.c.h.b16 %v1637
    %v1877 = vunpack.c.l.b16 %v1638
    %v1878 = vunpack.c.h.b16 %v1638
    %v1879 = vunpack.c.l.b16 %v1639
    %v1880 = vunpack.c.h.b16 %v1639
    %v1881 = vunpack.c.l.b16 %v1640
    %v1882 = vunpack.c.h.b16 %v1640
    %v1883 = vunpack.c.l.b16 %v1641
    %v1884 = vunpack.c.h.b16 %v1641
    %v1885 = vunpack.c.l.b16 %v1642
    %v1886 = vunpack.c.h.b16 %v1642
    %v1887 = vunpack.c.l.b16 %v1643
    %v1888 = vunpack.c.h.b16 %v1643
    %v1889 = vunpack.c.l.b16 %v1644
    %v1890 = vunpack.c.h.b16 %v1644
    %v1891 = vunpack.c.l.b16 %v1645
    %v1892 = vunpack.c.h.b16 %v1645
    %v1893 = vunpack.c.l.b16 %v1646
    %v1894 = vunpack.c.h.b16 %v1646
    %v1895 = vunpack.c.l.b16 %v1647
    %v1896 = vunpack.c.h.b16 %v1647
    %v1897 = vunpack.c.l.b16 %v1648
    %v1898 = vunpack.c.h.b16 %v1648
    %v1899 = vunpack.c.l.b16 %v1649
    %v1900 = vunpack.c.h.b16 %v1649
    %v1901 = vunpack.c.l.b16 %v1650
    %v1902 = vunpack.c.h.b16 %v1650
    %v1903 = vunpack.c.l.b16 %v1651
    %v1904 = vunpack.c.h.b16 %v1651
    %v1905 = vunpack.c.l.b16 %v1652
    %v1906 = vunpack.c.h.b16 %v1652
    %v1907 = vunpack.c.l.b16 %v1653
    %v1908 = vunpack.c.h.b16 %v1653
    %v1909 = vunpack.c.l.b16 %v1654
    %v1910 = vunpack.c.h.b16 %v1654
    %v1911 = vunpack.c.l.b16 %v1655
    %v1912 = vunpack.c.h.b16 %v1655
    %v1913 = vunpack.c.l.b16 %v1656
    %v1914 = vunpack.c.h.b16 %v1656
    %v1915 = vunpack.c.l.b16 %v1657
    %v1916 = vunpack.c.h.b16 %v1657
    %v1917 = vunpack.c.l.b16 %v1658
    %v1918 = vunpack.c.h.b16 %v1658
    %v1919 = vunpack.c.l.b16 %v1659
    %v1920 = vunpack.c.h.b16 %v1659
    %v1921 = vunpack.c.l.b16 %v1660
    %v1922 = vunpack.c.h.b16 %v1660
    %v1923 = vunpack.c.l.b16 %v1661
    %v1924 = vunpack.c.h.b16 %v1661
    %v1925 = vunpack.c.l.b16 %v1662
    %v1926 = vunpack.c.h.b16 %v1662
    %v1927 = vunpack.c.l.b16 %v1663
    %v1928 = vunpack.c.h.b16 %v1663
    %v1929 = vunpack.c.l.b16 %v1664
    %v1930 = vunpack.c.h.b16 %v1664
    %v1931 = vunpack.c.l.b16 %v1665
    %v1932 = vunpack.c.h.b16 %v1665
    %v1933 = vunpack.c.l.b16 %v1666
    %v1934 = vunpack.c.h.b16 %v1666
    %v1935 = vunpack.c.l.b16 %v1667
    %v1936 = vunpack.c.h.b16 %v1667
    %v1937 = vunpack.c.l.b16 %v1668
    %v1938 = vunpack.c.h.b16 %v1668
    %v1939 = vunpack.c.l.b16 %v1669
    %v1940 = vunpack.c.h.b16 %v1669
    %v1941 = vunpack.c.l.b16 %v1670
    %v1942 = vunpack.c.h.b16 %v1670
    %v1943 = vunpack.c.l.b16 %v1671
    %v1944 = vunpack.c.h.b16 %v1671
    %v1945 = vunpack.c.l.b16 %v1672
    %v1946 = vunpack.c.h.b16 %v1672
    %v1947 = vunpack.c.l.b16 %v1673
    %v1948 = vunpack.c.h.b16 %v1673
    %v1949 = vunpack.c.l.b16 %v1674
    %v1950 = vunpack.c.h.b16 %v1674
    %v1951 = vunpack.c.l.b16 %v1675
    %v1952 = vunpack.c.h.b16 %v1675
    %v1953 = vunpack.c.l.b16 %v1676
    %v1954 = vunpack.c.h.b16 %v1676
    %v1955 = vunpack.c.l.b16 %v1677
    %v1956 = vunpack.c.h.b16 %v1677
    %v1957 = vunpack.c.l.b16 %v1678
    %v1958 = vunpack.c.h.b16 %v1678
    %v1959 = vunpack.c.l.b16 %v1679
    %v1960 = vunpack.c.h.b16 %v1679
    %v1961 = vunpack.c.l.b16 %v1680
    %v1962 = vunpack.c.h.b16 %v1680
    %v1963 = vunpack.c.l.b16 %v1681
    %v1964 = vunpack.c.h.b16 %v1681
    %v1965 = vunpack.c.l.b16 %v1682
    %v1966 = vunpack.c.h.b16 %v1682
    %v1967 = vunpack.c.l.b16 %v1683
    %v1968 = vunpack.c.h.b16 %v1683
    %v1969 = vunpack.c.l.b16 %v1684
    %v1970 = vunpack.c.h.b16 %v1684
    %v1971 = vunpack.c.l.b16 %v1685
    %v1972 = vunpack.c.h.b16 %v1685
    %v1973 = vunpack.c.l.b16 %v1686
    %v1974 = vunpack.c.h.b16 %v1686
    %v1975 = vunpack.c.l.b16 %v1687
    %v1976 = vunpack.c.h.b16 %v1687
    %v1977 = vunpack.c.l.b16 %v1688
    %v1978 = vunpack.c.h.b16 %v1688
    %v1979 = vunpack.c.l.b16 %v1689
    %v1980 = vunpack.c.h.b16 %v1689
    %v1981 = vunpack.c.l.b16 %v1690
    %v1982 = vunpack.c.h.b16 %v1690
    %v1983 = vunpack.c.l.b16 %v1691
    %v1984 = vunpack.c.h.b16 %v1691
    %v1985 = vunpack.c.l.b16 %v1692
    %v1986 = vunpack.c.h.b16 %v1692
    %v1987 = vpack.c.b16 %v1793, %v1791
    %v1988 = vpack.c.b16 %v1794, %v1792
    %v1989 = vpack.c.b16 %v1797, %v1795
    %v1990 = vpack.c.b16 %v1798, %v1796
    %v1991 = vpack.c.b16 %v1801, %v1799
    %v1992 = vpack.c.b16 %v1802, %v1800
    %v1993 = vpack.c.b16 %v1805, %v1803
    %v1994 = vpack.c.b16 %v1806, %v1804
    %v1995 = vpack.c.b16 %v1809, %v1807
    %v1996 = vpack.c.b16 %v1810, %v1808
    %v1997 = vpack.c.b16 %v1813, %v1811
    %v1998 = vpack.c.b16 %v1814, %v1812
    %v1999 = vpack.c.b16 %v1817, %v1815
    %v2000 = vpack.c.b16 %v1818, %v1816
    %v2001 = vpack.c.b16 %v1821, %v1819
    %v2002 = vpack.c.b16 %v1822, %v1820
    %v2003 = vpack.c.b16 %v1825, %v1823
    %v2004 = vpack.c.b16 %v1826, %v1824
    %v2005 = vpack.c.b16 %v1829, %v1827
    %v2006 = vpack.c.b16 %v1830, %v1828
    %v2007 = vpack.c.b16 %v1833, %v1831
    %v2008 = vpack.c.b16 %v1834, %v1832
    %v2009 = vpack.c.b16 %v1837, %v1835
    %v2010 = vpack.c.b16 %v1838, %v1836
    %v2011 = vpack.c.b16 %v1841, %v1839
    %v2012 = vpack.c.b16 %v1842, %v1840
    %v2013 = vpack.c.b16 %v1845, %v1843
    %v2014 = vpack.c.b16 %v1846, %v1844
    %v2015 = vpack.c.b16 %v1849, %v1847
    %v2016 = vpack.c.b16 %v1850, %v1848
    %v2017 = vpack.c.b16 %v1853, %v1851
    %v2018 = vpack.c.b16 %v1854, %v1852
    %v2019 = vpack.c.b16 %v1857, %v1855
    %v2020 = vpack.c.b16 %v1858, %v1856
    %v2021 = vpack.c.b16 %v1861, %v1859
    %v2022 = vpack.c.b16 %v1862, %v1860
    %v2023 = vpack.c.b16 %v1865, %v1863
    %v2024 = vpack.c.b16 %v1866, %v1864
    %v2025 = vpack.c.b16 %v1869, %v1867
    %v2026 = vpack.c.b16 %v1870, %v1868
    %v2027 = vpack.c.b16 %v1873, %v1871
    %v2028 = vpack.c.b16 %v1874, %v1872
    %v2029 = vpack.c.b16 %v1877, %v1875
    %v2030 = vpack.c.b16 %v1878, %v1876
    %v2031 = vpack.c.b16 %v1881, %v1879
    %v2032 = vpack.c.b16 %v1882, %v1880
    %v2033 = vpack.c.b16 %v1885, %v1883
    %v2034 = vpack.c.b16 %v1886, %v1884
    %v2035 = vpack.c.b16 %v1889, %v1887
    %v2036 = vpack.c.b16 %v1890, %v1888
    %v2037 = vpack.c.b16 %v1893, %v1891
    %v2038 = vpack.c.b16 %v1894, %v1892
    %v2039 = vpack.c.b16 %v1897, %v1895
    %v2040 = vpack.c.b16 %v1898, %v1896
    %v2041 = vpack.c.b16 %v1901, %v1899
    %v2042 = vpack.c.b16 %v1902, %v1900
    %v2043 = vpack.c.b16 %v1905, %v1903
    %v2044 = vpack.c.b16 %v1906, %v1904
    %v2045 = vpack.c.b16 %v1909, %v1907
    %v2046 = vpack.c.b16 %v1910, %v1908
    %v2047 = vpack.c.b16 %v1913, %v1911
    %v2048 = vpack.c.b16 %v1914, %v1912
    %v2049 = vpack.c.b16 %v1917, %v1915
    %v2050 = vpack.c.b16 %v1918, %v1916
    %v2051 = vpack.c.b16 %v1921, %v1919
    %v2052 = vpack.c.b16 %v1922, %v1920
    %v2053 = vpack.c.b16 %v1925, %v1923
    %v2054 = vpack.c.b16 %v1926, %v1924
    %v2055 = vpack.c.b16 %v1929, %v1927
    %v2056 = vpack.c.b16 %v1930, %v1928
    %v2057 = vpack.c.b16 %v1933, %v1931
    %v2058 = vpack.c.b16 %v1934, %v1932
    %v2059 = vpack.c.b16 %v1937, %v1935
    %v2060 = vpack.c.b16 %v1938, %v1936
    %v2061 = vpack.c.b16 %v1941, %v1939
    %v2062 = vpack.c.b16 %v1942, %v1940
    %v2063 = vpack.c.b16 %v1945, %v1943
    %v2064 = vpack.c.b16 %v1946, %v1944
    %v2065 = vpack.c.b16 %v1949, %v1947
    %v2066 = vpack.c.b16 %v1950, %v1948
    %v2067 = vpack.c.b16 %v1953, %v1951
    %v2068 = vpack.c.b16 %v1954, %v1952
    %v2069 = vpack.c.b16 %v1957, %v1955
    %v2070 = vpack.c.b16 %v1958, %v1956
    %v2071 = vpack.c.b16 %v1961, %v1959
    %v2072 = vpack.c.b16 %v1962, %v1960
    %v2073 = vpack.c.b16 %v1965, %v1963
    %v2074 = vpack.c.b16 %v1966, %v1964
    %v2075 = vpack.c.b16 %v1969, %v1967
    %v2076 = vpack.c.b16 %v1970, %v1968
    %v2077 = vpack.c.b16 %v1973, %v1971
    %v2078 = vpack.c.b16 %v1974, %v1972
    %v2079 = vpack.c.b16 %v1977, %v1975
    %v2080 = vpack.c.b16 %v1978, %v1976
    %v2081 = vpack.c.b16 %v1981, %v1979
    %v2082 = vpack.c.b16 %v1982, %v1980
    %v2083 = vpack.c.b16 %v1985, %v1983
    %v2084 = vpack.c.b16 %v1986, %v1984
    %2183 = vmatprep.subr.bf16.mxu0 %v1988
    %2184 = vmatpush1.bf16.msra.mxu0 %v1987
    %2185 = vmatprep.subr.bf16.mxu0 %v1990
    %2186 = vmatpush1.bf16.msra.mxu0 %v1989
    %2187 = vmatprep.subr.bf16.mxu0 %v1992
    %2188 = vmatpush1.bf16.msra.mxu0 %v1991
    %2189 = vmatprep.subr.bf16.mxu0 %v1994
    %2190 = vmatpush1.bf16.msra.mxu0 %v1993
    %2191 = vmatprep.subr.bf16.mxu0 %v1996
    %2192 = vmatpush1.bf16.msra.mxu0 %v1995
    %2193 = vmatprep.subr.bf16.mxu0 %v1998
    %2194 = vmatpush1.bf16.msra.mxu0 %v1997
    %2195 = vmatprep.subr.bf16.mxu0 %v2000
    %2196 = vmatpush1.bf16.msra.mxu0 %v1999
    %2197 = vmatprep.subr.bf16.mxu0 %v2002
    %2198 = vmatpush1.bf16.msra.mxu0 %v2001
    %2199 = vmatprep.subr.bf16.mxu0 %v2004
    %2200 = vmatpush1.bf16.msra.mxu0 %v2003
    %2201 = vmatprep.subr.bf16.mxu0 %v2006
    %2202 = vmatpush1.bf16.msra.mxu0 %v2005
    %2203 = vmatprep.subr.bf16.mxu0 %v2008
    %2204 = vmatpush1.bf16.msra.mxu0 %v2007
    %2205 = vmatprep.subr.bf16.mxu0 %v2010
    %2206 = vmatpush1.bf16.msra.mxu0 %v2009
    %2207 = vmatprep.subr.bf16.mxu0 %v2012
    %2208 = vmatpush1.bf16.msra.mxu0 %v2011
    %2209 = vmatprep.subr.bf16.mxu0 %v2014
    %2210 = vmatpush1.bf16.msra.mxu0 %v2013
    %2211 = vmatprep.subr.bf16.mxu0 %v2016
    %2212 = vmatpush1.bf16.msra.mxu0 %v2015
    %2213 = vmatprep.subr.bf16.mxu0 %v2018
    %2214 = vmatpush1.bf16.msra.mxu0 %v2017
    %2215 = vmatprep.mubr.bf16.mxu0 %v151
    %2216 = vmatmul.mubr.bf16.gmra.mrb[0].mxu0 %v150
    %v2217 = vpop.f32.mrb[0].mxu0
    %v2218 = vadd.f32 0.0, %v2217
    %v2219 = vpop.f32.mrb[0].mxu0
    %v2220 = vadd.f32 0.0, %v2219
    %v2221 = vpop.f32.mrb[0].mxu0
    %v2222 = vadd.f32 0.0, %v2221
    %v2223 = vpop.f32.mrb[0].mxu0
    %v2224 = vadd.f32 0.0, %v2223
    %2225 = vdwg.mxu0
    %2226 = vmatprep.subr.bf16.mxu0 %v2020
    %2227 = vmatpush1.bf16.msra.mxu0 %v2019
    %2228 = vmatprep.subr.bf16.mxu0 %v2022
    %2229 = vmatpush1.bf16.msra.mxu0 %v2021
    %2230 = vmatprep.subr.bf16.mxu0 %v2024
    %2231 = vmatpush1.bf16.msra.mxu0 %v2023
    %2232 = vmatprep.subr.bf16.mxu0 %v2026
    %2233 = vmatpush1.bf16.msra.mxu0 %v2025
    %2234 = vmatprep.subr.bf16.mxu0 %v2028
    %2235 = vmatpush1.bf16.msra.mxu0 %v2027
    %2236 = vmatprep.subr.bf16.mxu0 %v2030
    %2237 = vmatpush1.bf16.msra.mxu0 %v2029
    %2238 = vmatprep.subr.bf16.mxu0 %v2032
    %2239 = vmatpush1.bf16.msra.mxu0 %v2031
    %2240 = vmatprep.subr.bf16.mxu0 %v2034
    %2241 = vmatpush1.bf16.msra.mxu0 %v2033
    %2242 = vmatprep.subr.bf16.mxu0 %v2036
    %2243 = vmatpush1.bf16.msra.mxu0 %v2035
    %2244 = vmatprep.subr.bf16.mxu0 %v2038
    %2245 = vmatpush1.bf16.msra.mxu0 %v2037
    %2246 = vmatprep.subr.bf16.mxu0 %v2040
    %2247 = vmatpush1.bf16.msra.mxu0 %v2039
    %2248 = vmatprep.subr.bf16.mxu0 %v2042
    %2249 = vmatpush1.bf16.msra.mxu0 %v2041
    %2250 = vmatprep.subr.bf16.mxu0 %v2044
    %2251 = vmatpush1.bf16.msra.mxu0 %v2043
    %2252 = vmatprep.subr.bf16.mxu0 %v2046
    %2253 = vmatpush1.bf16.msra.mxu0 %v2045
    %2254 = vmatprep.subr.bf16.mxu0 %v2048
    %2255 = vmatpush1.bf16.msra.mxu0 %v2047
    %2256 = vmatprep.subr.bf16.mxu0 %v2050
    %2257 = vmatpush1.bf16.msra.mxu0 %v2049
    %2258 = vmatprep.mubr.bf16.mxu0 %v153
    %2259 = vmatmul.mubr.bf16.gmra.mrb[0].mxu0 %v152
    %v2260 = vpop.f32.mrb[0].mxu0
    %v2261 = vadd.f32 %v2218, %v2260
    %v2262 = vpop.f32.mrb[0].mxu0
    %v2263 = vadd.f32 %v2220, %v2262
    %v2264 = vpop.f32.mrb[0].mxu0
    %v2265 = vadd.f32 %v2222, %v2264
    %v2266 = vpop.f32.mrb[0].mxu0
    %v2267 = vadd.f32 %v2224, %v2266
    %2268 = vdwg.mxu0
    %2269 = vmatprep.subr.bf16.mxu0 %v2052
    %2270 = vmatpush1.bf16.msra.mxu0 %v2051
    %2271 = vmatprep.subr.bf16.mxu0 %v2054
    %2272 = vmatpush1.bf16.msra.mxu0 %v2053
    %2273 = vmatprep.subr.bf16.mxu0 %v2056
    %2274 = vmatpush1.bf16.msra.mxu0 %v2055
    %2275 = vmatprep.subr.bf16.mxu0 %v2058
    %2276 = vmatpush1.bf16.msra.mxu0 %v2057
    %2277 = vmatprep.subr.bf16.mxu0 %v2060
    %2278 = vmatpush1.bf16.msra.mxu0 %v2059
    %2279 = vmatprep.subr.bf16.mxu0 %v2062
    %2280 = vmatpush1.bf16.msra.mxu0 %v2061
    %2281 = vmatprep.subr.bf16.mxu0 %v2064
    %2282 = vmatpush1.bf16.msra.mxu0 %v2063
    %2283 = vmatprep.subr.bf16.mxu0 %v2066
    %2284 = vmatpush1.bf16.msra.mxu0 %v2065
    %2285 = vmatprep.subr.bf16.mxu0 %v2068
    %2286 = vmatpush1.bf16.msra.mxu0 %v2067
    %2287 = vmatprep.subr.bf16.mxu0 %v2070
    %2288 = vmatpush1.bf16.msra.mxu0 %v2069
    %2289 = vmatprep.subr.bf16.mxu0 %v2072
    %2290 = vmatpush1.bf16.msra.mxu0 %v2071
    %2291 = vmatprep.subr.bf16.mxu0 %v2074
    %2292 = vmatpush1.bf16.msra.mxu0 %v2073
    %2293 = vmatprep.subr.bf16.mxu0 %v2076
    %2294 = vmatpush1.bf16.msra.mxu0 %v2075
    %2295 = vmatprep.subr.bf16.mxu0 %v2078
    %2296 = vmatpush1.bf16.msra.mxu0 %v2077
    %2297 = vmatprep.subr.bf16.mxu0 %v2080
    %2298 = vmatpush1.bf16.msra.mxu0 %v2079
    %2299 = vmatprep.subr.bf16.mxu0 %v2082
    %2300 = vmatpush1.bf16.msra.mxu0 %v2081
    %2301 = vmatprep.mubr.bf16.mxu0 %v155
    %2302 = vmatmul.mubr.bf16.gmra.mrb[0].mxu0 %v154
    %v2303 = vpop.f32.mrb[0].mxu0
    %v2304 = vadd.f32 %v2261, %v2303
    %v2305 = vpop.f32.mrb[0].mxu0
    %v2306 = vadd.f32 %v2263, %v2305
    %v2307 = vpop.f32.mrb[0].mxu0
    %v2308 = vadd.f32 %v2265, %v2307
    %v2309 = vpop.f32.mrb[0].mxu0
    %v2310 = vadd.f32 %v2267, %v2309
    %2311 = vdwg.mxu0
    %2312 = vmatprep.subr.bf16.mxu0 %v2084
    %2313 = vmatpush1.bf16.msra.mxu0 %v2083
    %2314 = vmatprep.subr.bf16.mxu0 0
    %2315 = vmatpush1.bf16.msra.mxu0 0
    %2316 = vmatprep.subr.bf16.mxu0 0
    %2317 = vmatpush1.bf16.msra.mxu0 0
    %2318 = vmatprep.subr.bf16.mxu0 0
    %2319 = vmatpush1.bf16.msra.mxu0 0
    %2320 = vmatprep.subr.bf16.mxu0 0
    %2321 = vmatpush1.bf16.msra.mxu0 0
    %2322 = vmatprep.subr.bf16.mxu0 0
    %2323 = vmatpush1.bf16.msra.mxu0 0
    %2324 = vmatprep.subr.bf16.mxu0 0
    %2325 = vmatpush1.bf16.msra.mxu0 0
    %2326 = vmatprep.subr.bf16.mxu0 0
    %2327 = vmatpush1.bf16.msra.mxu0 0
    %2328 = vmatprep.subr.bf16.mxu0 0
    %2329 = vmatpush1.bf16.msra.mxu0 0
    %2330 = vmatprep.subr.bf16.mxu0 0
    %2331 = vmatpush1.bf16.msra.mxu0 0
    %2332 = vmatprep.subr.bf16.mxu0 0
    %2333 = vmatpush1.bf16.msra.mxu0 0
    %2334 = vmatprep.subr.bf16.mxu0 0
    %2335 = vmatpush1.bf16.msra.mxu0 0
    %2336 = vmatprep.subr.bf16.mxu0 0
    %2337 = vmatpush1.bf16.msra.mxu0 0
    %2338 = vmatprep.subr.bf16.mxu0 0
    %2339 = vmatpush1.bf16.msra.mxu0 0
    %2340 = vmatprep.subr.bf16.mxu0 0
    %2341 = vmatpush1.bf16.msra.mxu0 0
    %2342 = vmatprep.subr.bf16.mxu0 0
    %2343 = vmatpush1.bf16.msra.mxu0 0
    %2344 = vmatprep.mubr.bf16.mxu0 0
    %2345 = vmatmul.mubr.bf16.gmra.mrb[0].mxu0 %v655
    %v2346 = vpop.f32.mrb[0].mxu0
    %v2347 = vadd.f32 %v2304, %v2346
    %v2348 = vpop.f32.mrb[0].mxu0
    %v2349 = vadd.f32 %v2306, %v2348
    %v2350 = vpop.f32.mrb[0].mxu0
    %v2351 = vadd.f32 %v2308, %v2350
    %v2352 = vpop.f32.mrb[0].mxu0
    %v2353 = vadd.f32 %v2310, %v2352
    %2354 = vdwg.mxu0
    %v2355 = vmax.f32 %v1590, %v2347
    %v2356 = vmax.f32 %v1591, %v2349
    %v2357 = vmax.f32 %v1592, %v2351
    %v2358 = vmax.f32 %v1593, %v2353
    %s2359 = scalar_lea.vmem %s1, 2352
    %v2360 = vld [vmem:[%s2359] sm:$0xff]
    %v2361 = vld [vmem:[%s2359 + $0x8] sm:$0xff]
    %v2362 = vld [vmem:[%s2359 + $0x10] sm:$0xff]
    %v2363 = vld [vmem:[%s2359 + $0x18] sm:$0xff]
    %v2364 = vld [vmem:[%s2359 + $0x20] sm:$0xff]
    %v2365 = vld [vmem:[%s2359 + $0x28] sm:$0xff]
    %v2366 = vld [vmem:[%s2359 + $0x30] sm:$0xff]
    %v2367 = vld [vmem:[%s2359 + $0x38] sm:$0xff]
    %v2368 = vld [vmem:[%s2359 + $0x40] sm:$0xff]
    %v2369 = vld [vmem:[%s2359 + $0x48] sm:$0xff]
    %v2370 = vld [vmem:[%s2359 + $0x50] sm:$0xff]
    %v2371 = vld [vmem:[%s2359 + $0x58] sm:$0xff]
    %v2372 = vld [vmem:[%s2359 + $0x60] sm:$0xff]
    %v2373 = vld [vmem:[%s2359 + $0x68] sm:$0xff]
    %v2374 = vld [vmem:[%s2359 + $0x70] sm:$0xff]
    %v2375 = vld [vmem:[%s2359 + $0x78] sm:$0xff]
    %v2376 = vld [vmem:[%s2359 + $0x80] sm:$0xff]
    %v2377 = vld [vmem:[%s2359 + $0x88] sm:$0xff]
    %v2378 = vld [vmem:[%s2359 + $0x90] sm:$0xff]
    %v2379 = vld [vmem:[%s2359 + $0x98] sm:$0xff]
    %v2380 = vld [vmem:[%s2359 + $0xa0] sm:$0xff]
    %v2381 = vld [vmem:[%s2359 + $0xa8] sm:$0xff]
    %v2382 = vld [vmem:[%s2359 + $0xb0] sm:$0xff]
    %v2383 = vld [vmem:[%s2359 + $0xb8] sm:$0xff]
    %v2384 = vld [vmem:[%s2359 + $0xc0] sm:$0xff]
    %v2385 = vld [vmem:[%s2359 + $0xc8] sm:$0xff]
    %v2386 = vld [vmem:[%s2359 + $0xd0] sm:$0xff]
    %v2387 = vld [vmem:[%s2359 + $0xd8] sm:$0xff]
    %v2388 = vld [vmem:[%s2359 + $0xe0] sm:$0xff]
    %v2389 = vld [vmem:[%s2359 + $0xe8] sm:$0xff]
    %v2390 = vld [vmem:[%s2359 + $0xf0] sm:$0xff]
    %v2391 = vld [vmem:[%s2359 + $0xf8] sm:$0xff]
    %v2392 = vld [vmem:[%s2359 + $0x100] sm:$0xff]
    %v2393 = vld [vmem:[%s2359 + $0x108] sm:$0xff]
    %v2394 = vld [vmem:[%s2359 + $0x110] sm:$0xff]
    %v2395 = vld [vmem:[%s2359 + $0x118] sm:$0xff]
    %v2396 = vld [vmem:[%s2359 + $0x120] sm:$0xff]
    %v2397 = vld [vmem:[%s2359 + $0x128] sm:$0xff]
    %v2398 = vld [vmem:[%s2359 + $0x130] sm:$0xff]
    %v2399 = vld [vmem:[%s2359 + $0x138] sm:$0xff]
    %v2400 = vld [vmem:[%s2359 + $0x140] sm:$0xff]
    %v2401 = vld [vmem:[%s2359 + $0x148] sm:$0xff]
    %v2402 = vld [vmem:[%s2359 + $0x150] sm:$0xff]
    %v2403 = vld [vmem:[%s2359 + $0x158] sm:$0xff]
    %v2404 = vld [vmem:[%s2359 + $0x160] sm:$0xff]
    %v2405 = vld [vmem:[%s2359 + $0x168] sm:$0xff]
    %v2406 = vld [vmem:[%s2359 + $0x170] sm:$0xff]
    %v2407 = vld [vmem:[%s2359 + $0x178] sm:$0xff]
    %v2408 = vld [vmem:[%s2359 + $0x180] sm:$0xff]
    %v2409 = vld [vmem:[%s2359 + $0x188] sm:$0xff]
    %v2410 = vld [vmem:[%s2359 + $0x190] sm:$0xff]
    %v2411 = vld [vmem:[%s2359 + $0x198] sm:$0xff]
    %v2412 = vld [vmem:[%s2359 + $0x1a0] sm:$0xff]
    %v2413 = vld [vmem:[%s2359 + $0x1a8] sm:$0xff]
    %v2414 = vld [vmem:[%s2359 + $0x1b0] sm:$0xff]
    %v2415 = vld [vmem:[%s2359 + $0x1b8] sm:$0xff]
    %v2416 = vld [vmem:[%s2359 + $0x1c0] sm:$0xff]
    %v2417 = vld [vmem:[%s2359 + $0x1c8] sm:$0xff]
    %v2418 = vld [vmem:[%s2359 + $0x1d0] sm:$0xff]
    %v2419 = vld [vmem:[%s2359 + $0x1d8] sm:$0xff]
    %v2420 = vld [vmem:[%s2359 + $0x1e0] sm:$0xff]
    %v2421 = vld [vmem:[%s2359 + $0x1e8] sm:$0xff]
    %v2422 = vld [vmem:[%s2359 + $0x1f0] sm:$0xff]
    %v2423 = vld [vmem:[%s2359 + $0x1f8] sm:$0xff]
    %v2424 = vld [vmem:[%s2359 + $0x200] sm:$0xff]
    %v2425 = vld [vmem:[%s2359 + $0x208] sm:$0xff]
    %v2426 = vld [vmem:[%s2359 + $0x210] sm:$0xff]
    %v2427 = vld [vmem:[%s2359 + $0x218] sm:$0xff]
    %v2428 = vld [vmem:[%s2359 + $0x220] sm:$0xff]
    %v2429 = vld [vmem:[%s2359 + $0x228] sm:$0xff]
    %v2430 = vld [vmem:[%s2359 + $0x230] sm:$0xff]
    %v2431 = vld [vmem:[%s2359 + $0x238] sm:$0xff]
    %v2432 = vld [vmem:[%s2359 + $0x240] sm:$0xff]
    %v2433 = vld [vmem:[%s2359 + $0x248] sm:$0xff]
    %v2434 = vld [vmem:[%s2359 + $0x250] sm:$0xff]
    %v2435 = vld [vmem:[%s2359 + $0x258] sm:$0xff]
    %v2436 = vld [vmem:[%s2359 + $0x260] sm:$0xff]
    %v2437 = vld [vmem:[%s2359 + $0x268] sm:$0xff]
    %v2438 = vld [vmem:[%s2359 + $0x270] sm:$0xff]
    %v2439 = vld [vmem:[%s2359 + $0x278] sm:$0xff]
    %v2440 = vld [vmem:[%s2359 + $0x280] sm:$0xff]
    %v2441 = vld [vmem:[%s2359 + $0x288] sm:$0xff]
    %v2442 = vld [vmem:[%s2359 + $0x290] sm:$0xff]
    %v2443 = vld [vmem:[%s2359 + $0x298] sm:$0xff]
    %v2444 = vld [vmem:[%s2359 + $0x2a0] sm:$0xff]
    %v2445 = vld [vmem:[%s2359 + $0x2a8] sm:$0xff]
    %v2446 = vld [vmem:[%s2359 + $0x2b0] sm:$0xff]
    %v2447 = vld [vmem:[%s2359 + $0x2b8] sm:$0xff]
    %v2448 = vld [vmem:[%s2359 + $0x2c0] sm:$0xff]
    %v2449 = vld [vmem:[%s2359 + $0x2c8] sm:$0xff]
    %v2450 = vld [vmem:[%s2359 + $0x2d0] sm:$0xff]
    %v2451 = vld [vmem:[%s2359 + $0x2d8] sm:$0xff]
    %v2452 = vld [vmem:[%s2359 + $0x2e0] sm:$0xff]
    %v2453 = vld [vmem:[%s2359 + $0x2e8] sm:$0xff]
    %v2454 = vld [vmem:[%s2359 + $0x2f0] sm:$0xff]
    %v2455 = vld [vmem:[%s2359 + $0x2f8] sm:$0xff]
    %v2456 = vld [vmem:[%s2359 + $0x300] sm:$0xff]
    %v2457 = vld [vmem:[%s2359 + $0x308] sm:$0xff]
    %v2556 = vunpack.c.l.b16 %v2360
    %v2557 = vunpack.c.h.b16 %v2360
    %v2558 = vunpack.c.l.b16 %v2361
    %v2559 = vunpack.c.h.b16 %v2361
    %v2560 = vunpack.c.l.b16 %v2362
    %v2561 = vunpack.c.h.b16 %v2362
    %v2562 = vunpack.c.l.b16 %v2363
    %v2563 = vunpack.c.h.b16 %v2363
    %v2564 = vunpack.c.l.b16 %v2364
    %v2565 = vunpack.c.h.b16 %v2364
    %v2566 = vunpack.c.l.b16 %v2365
    %v2567 = vunpack.c.h.b16 %v2365
    %v2568 = vunpack.c.l.b16 %v2366
    %v2569 = vunpack.c.h.b16 %v2366
    %v2570 = vunpack.c.l.b16 %v2367
    %v2571 = vunpack.c.h.b16 %v2367
    %v2572 = vunpack.c.l.b16 %v2368
    %v2573 = vunpack.c.h.b16 %v2368
    %v2574 = vunpack.c.l.b16 %v2369
    %v2575 = vunpack.c.h.b16 %v2369
    %v2576 = vunpack.c.l.b16 %v2370
    %v2577 = vunpack.c.h.b16 %v2370
    %v2578 = vunpack.c.l.b16 %v2371
    %v2579 = vunpack.c.h.b16 %v2371
    %v2580 = vunpack.c.l.b16 %v2372
    %v2581 = vunpack.c.h.b16 %v2372
    %v2582 = vunpack.c.l.b16 %v2373
    %v2583 = vunpack.c.h.b16 %v2373
    %v2584 = vunpack.c.l.b16 %v2374
    %v2585 = vunpack.c.h.b16 %v2374
    %v2586 = vunpack.c.l.b16 %v2375
    %v2587 = vunpack.c.h.b16 %v2375
    %v2588 = vunpack.c.l.b16 %v2376
    %v2589 = vunpack.c.h.b16 %v2376
    %v2590 = vunpack.c.l.b16 %v2377
    %v2591 = vunpack.c.h.b16 %v2377
    %v2592 = vunpack.c.l.b16 %v2378
    %v2593 = vunpack.c.h.b16 %v2378
    %v2594 = vunpack.c.l.b16 %v2379
    %v2595 = vunpack.c.h.b16 %v2379
    %v2596 = vunpack.c.l.b16 %v2380
    %v2597 = vunpack.c.h.b16 %v2380
    %v2598 = vunpack.c.l.b16 %v2381
    %v2599 = vunpack.c.h.b16 %v2381
    %v2600 = vunpack.c.l.b16 %v2382
    %v2601 = vunpack.c.h.b16 %v2382
    %v2602 = vunpack.c.l.b16 %v2383
    %v2603 = vunpack.c.h.b16 %v2383
    %v2604 = vunpack.c.l.b16 %v2384
    %v2605 = vunpack.c.h.b16 %v2384
    %v2606 = vunpack.c.l.b16 %v2385
    %v2607 = vunpack.c.h.b16 %v2385
    %v2608 = vunpack.c.l.b16 %v2386
    %v2609 = vunpack.c.h.b16 %v2386
    %v2610 = vunpack.c.l.b16 %v2387
    %v2611 = vunpack.c.h.b16 %v2387
    %v2612 = vunpack.c.l.b16 %v2388
    %v2613 = vunpack.c.h.b16 %v2388
    %v2614 = vunpack.c.l.b16 %v2389
    %v2615 = vunpack.c.h.b16 %v2389
    %v2616 = vunpack.c.l.b16 %v2390
    %v2617 = vunpack.c.h.b16 %v2390
    %v2618 = vunpack.c.l.b16 %v2391
    %v2619 = vunpack.c.h.b16 %v2391
    %v2620 = vunpack.c.l.b16 %v2392
    %v2621 = vunpack.c.h.b16 %v2392
    %v2622 = vunpack.c.l.b16 %v2393
    %v2623 = vunpack.c.h.b16 %v2393
    %v2624 = vunpack.c.l.b16 %v2394
    %v2625 = vunpack.c.h.b16 %v2394
    %v2626 = vunpack.c.l.b16 %v2395
    %v2627 = vunpack.c.h.b16 %v2395
    %v2628 = vunpack.c.l.b16 %v2396
    %v2629 = vunpack.c.h.b16 %v2396
    %v2630 = vunpack.c.l.b16 %v2397
    %v2631 = vunpack.c.h.b16 %v2397
    %v2632 = vunpack.c.l.b16 %v2398
    %v2633 = vunpack.c.h.b16 %v2398
    %v2634 = vunpack.c.l.b16 %v2399
    %v2635 = vunpack.c.h.b16 %v2399
    %v2636 = vunpack.c.l.b16 %v2400
    %v2637 = vunpack.c.h.b16 %v2400
    %v2638 = vunpack.c.l.b16 %v2401
    %v2639 = vunpack.c.h.b16 %v2401
    %v2640 = vunpack.c.l.b16 %v2402
    %v2641 = vunpack.c.h.b16 %v2402
    %v2642 = vunpack.c.l.b16 %v2403
    %v2643 = vunpack.c.h.b16 %v2403
    %v2644 = vunpack.c.l.b16 %v2404
    %v2645 = vunpack.c.h.b16 %v2404
    %v2646 = vunpack.c.l.b16 %v2405
    %v2647 = vunpack.c.h.b16 %v2405
    %v2648 = vunpack.c.l.b16 %v2406
    %v2649 = vunpack.c.h.b16 %v2406
    %v2650 = vunpack.c.l.b16 %v2407
    %v2651 = vunpack.c.h.b16 %v2407
    %v2652 = vunpack.c.l.b16 %v2408
    %v2653 = vunpack.c.h.b16 %v2408
    %v2654 = vunpack.c.l.b16 %v2409
    %v2655 = vunpack.c.h.b16 %v2409
    %v2656 = vunpack.c.l.b16 %v2410
    %v2657 = vunpack.c.h.b16 %v2410
    %v2658 = vunpack.c.l.b16 %v2411
    %v2659 = vunpack.c.h.b16 %v2411
    %v2660 = vunpack.c.l.b16 %v2412
    %v2661 = vunpack.c.h.b16 %v2412
    %v2662 = vunpack.c.l.b16 %v2413
    %v2663 = vunpack.c.h.b16 %v2413
    %v2664 = vunpack.c.l.b16 %v2414
    %v2665 = vunpack.c.h.b16 %v2414
    %v2666 = vunpack.c.l.b16 %v2415
    %v2667 = vunpack.c.h.b16 %v2415
    %v2668 = vunpack.c.l.b16 %v2416
    %v2669 = vunpack.c.h.b16 %v2416
    %v2670 = vunpack.c.l.b16 %v2417
    %v2671 = vunpack.c.h.b16 %v2417
    %v2672 = vunpack.c.l.b16 %v2418
    %v2673 = vunpack.c.h.b16 %v2418
    %v2674 = vunpack.c.l.b16 %v2419
    %v2675 = vunpack.c.h.b16 %v2419
    %v2676 = vunpack.c.l.b16 %v2420
    %v2677 = vunpack.c.h.b16 %v2420
    %v2678 = vunpack.c.l.b16 %v2421
    %v2679 = vunpack.c.h.b16 %v2421
    %v2680 = vunpack.c.l.b16 %v2422
    %v2681 = vunpack.c.h.b16 %v2422
    %v2682 = vunpack.c.l.b16 %v2423
    %v2683 = vunpack.c.h.b16 %v2423
    %v2684 = vunpack.c.l.b16 %v2424
    %v2685 = vunpack.c.h.b16 %v2424
    %v2686 = vunpack.c.l.b16 %v2425
    %v2687 = vunpack.c.h.b16 %v2425
    %v2688 = vunpack.c.l.b16 %v2426
    %v2689 = vunpack.c.h.b16 %v2426
    %v2690 = vunpack.c.l.b16 %v2427
    %v2691 = vunpack.c.h.b16 %v2427
    %v2692 = vunpack.c.l.b16 %v2428
    %v2693 = vunpack.c.h.b16 %v2428
    %v2694 = vunpack.c.l.b16 %v2429
    %v2695 = vunpack.c.h.b16 %v2429
    %v2696 = vunpack.c.l.b16 %v2430
    %v2697 = vunpack.c.h.b16 %v2430
    %v2698 = vunpack.c.l.b16 %v2431
    %v2699 = vunpack.c.h.b16 %v2431
    %v2700 = vunpack.c.l.b16 %v2432
    %v2701 = vunpack.c.h.b16 %v2432
    %v2702 = vunpack.c.l.b16 %v2433
    %v2703 = vunpack.c.h.b16 %v2433
    %v2704 = vunpack.c.l.b16 %v2434
    %v2705 = vunpack.c.h.b16 %v2434
    %v2706 = vunpack.c.l.b16 %v2435
    %v2707 = vunpack.c.h.b16 %v2435
    %v2708 = vunpack.c.l.b16 %v2436
    %v2709 = vunpack.c.h.b16 %v2436
    %v2710 = vunpack.c.l.b16 %v2437
    %v2711 = vunpack.c.h.b16 %v2437
    %v2712 = vunpack.c.l.b16 %v2438
    %v2713 = vunpack.c.h.b16 %v2438
    %v2714 = vunpack.c.l.b16 %v2439
    %v2715 = vunpack.c.h.b16 %v2439
    %v2716 = vunpack.c.l.b16 %v2440
    %v2717 = vunpack.c.h.b16 %v2440
    %v2718 = vunpack.c.l.b16 %v2441
    %v2719 = vunpack.c.h.b16 %v2441
    %v2720 = vunpack.c.l.b16 %v2442
    %v2721 = vunpack.c.h.b16 %v2442
    %v2722 = vunpack.c.l.b16 %v2443
    %v2723 = vunpack.c.h.b16 %v2443
    %v2724 = vunpack.c.l.b16 %v2444
    %v2725 = vunpack.c.h.b16 %v2444
    %v2726 = vunpack.c.l.b16 %v2445
    %v2727 = vunpack.c.h.b16 %v2445
    %v2728 = vunpack.c.l.b16 %v2446
    %v2729 = vunpack.c.h.b16 %v2446
    %v2730 = vunpack.c.l.b16 %v2447
    %v2731 = vunpack.c.h.b16 %v2447
    %v2732 = vunpack.c.l.b16 %v2448
    %v2733 = vunpack.c.h.b16 %v2448
    %v2734 = vunpack.c.l.b16 %v2449
    %v2735 = vunpack.c.h.b16 %v2449
    %v2736 = vunpack.c.l.b16 %v2450
    %v2737 = vunpack.c.h.b16 %v2450
    %v2738 = vunpack.c.l.b16 %v2451
    %v2739 = vunpack.c.h.b16 %v2451
    %v2740 = vunpack.c.l.b16 %v2452
    %v2741 = vunpack.c.h.b16 %v2452
    %v2742 = vunpack.c.l.b16 %v2453
    %v2743 = vunpack.c.h.b16 %v2453
    %v2744 = vunpack.c.l.b16 %v2454
    %v2745 = vunpack.c.h.b16 %v2454
    %v2746 = vunpack.c.l.b16 %v2455
    %v2747 = vunpack.c.h.b16 %v2455
    %v2748 = vunpack.c.l.b16 %v2456
    %v2749 = vunpack.c.h.b16 %v2456
    %v2750 = vunpack.c.l.b16 %v2457
    %v2751 = vunpack.c.h.b16 %v2457
    %v2752 = vpack.c.b16 %v2558, %v2556
    %v2753 = vpack.c.b16 %v2559, %v2557
    %v2754 = vpack.c.b16 %v2562, %v2560
    %v2755 = vpack.c.b16 %v2563, %v2561
    %v2756 = vpack.c.b16 %v2566, %v2564
    %v2757 = vpack.c.b16 %v2567, %v2565
    %v2758 = vpack.c.b16 %v2570, %v2568
    %v2759 = vpack.c.b16 %v2571, %v2569
    %v2760 = vpack.c.b16 %v2574, %v2572
    %v2761 = vpack.c.b16 %v2575, %v2573
    %v2762 = vpack.c.b16 %v2578, %v2576
    %v2763 = vpack.c.b16 %v2579, %v2577
    %v2764 = vpack.c.b16 %v2582, %v2580
    %v2765 = vpack.c.b16 %v2583, %v2581
    %v2766 = vpack.c.b16 %v2586, %v2584
    %v2767 = vpack.c.b16 %v2587, %v2585
    %v2768 = vpack.c.b16 %v2590, %v2588
    %v2769 = vpack.c.b16 %v2591, %v2589
    %v2770 = vpack.c.b16 %v2594, %v2592
    %v2771 = vpack.c.b16 %v2595, %v2593
    %v2772 = vpack.c.b16 %v2598, %v2596
    %v2773 = vpack.c.b16 %v2599, %v2597
    %v2774 = vpack.c.b16 %v2602, %v2600
    %v2775 = vpack.c.b16 %v2603, %v2601
    %v2776 = vpack.c.b16 %v2606, %v2604
    %v2777 = vpack.c.b16 %v2607, %v2605
    %v2778 = vpack.c.b16 %v2610, %v2608
    %v2779 = vpack.c.b16 %v2611, %v2609
    %v2780 = vpack.c.b16 %v2614, %v2612
    %v2781 = vpack.c.b16 %v2615, %v2613
    %v2782 = vpack.c.b16 %v2618, %v2616
    %v2783 = vpack.c.b16 %v2619, %v2617
    %v2784 = vpack.c.b16 %v2622, %v2620
    %v2785 = vpack.c.b16 %v2623, %v2621
    %v2786 = vpack.c.b16 %v2626, %v2624
    %v2787 = vpack.c.b16 %v2627, %v2625
    %v2788 = vpack.c.b16 %v2630, %v2628
    %v2789 = vpack.c.b16 %v2631, %v2629
    %v2790 = vpack.c.b16 %v2634, %v2632
    %v2791 = vpack.c.b16 %v2635, %v2633
    %v2792 = vpack.c.b16 %v2638, %v2636
    %v2793 = vpack.c.b16 %v2639, %v2637
    %v2794 = vpack.c.b16 %v2642, %v2640
    %v2795 = vpack.c.b16 %v2643, %v2641
    %v2796 = vpack.c.b16 %v2646, %v2644
    %v2797 = vpack.c.b16 %v2647, %v2645
    %v2798 = vpack.c.b16 %v2650, %v2648
    %v2799 = vpack.c.b16 %v2651, %v2649
    %v2800 = vpack.c.b16 %v2654, %v2652
    %v2801 = vpack.c.b16 %v2655, %v2653
    %v2802 = vpack.c.b16 %v2658, %v2656
    %v2803 = vpack.c.b16 %v2659, %v2657
    %v2804 = vpack.c.b16 %v2662, %v2660
    %v2805 = vpack.c.b16 %v2663, %v2661
    %v2806 = vpack.c.b16 %v2666, %v2664
    %v2807 = vpack.c.b16 %v2667, %v2665
    %v2808 = vpack.c.b16 %v2670, %v2668
    %v2809 = vpack.c.b16 %v2671, %v2669
    %v2810 = vpack.c.b16 %v2674, %v2672
    %v2811 = vpack.c.b16 %v2675, %v2673
    %v2812 = vpack.c.b16 %v2678, %v2676
    %v2813 = vpack.c.b16 %v2679, %v2677
    %v2814 = vpack.c.b16 %v2682, %v2680
    %v2815 = vpack.c.b16 %v2683, %v2681
    %v2816 = vpack.c.b16 %v2686, %v2684
    %v2817 = vpack.c.b16 %v2687, %v2685
    %v2818 = vpack.c.b16 %v2690, %v2688
    %v2819 = vpack.c.b16 %v2691, %v2689
    %v2820 = vpack.c.b16 %v2694, %v2692
    %v2821 = vpack.c.b16 %v2695, %v2693
    %v2822 = vpack.c.b16 %v2698, %v2696
    %v2823 = vpack.c.b16 %v2699, %v2697
    %v2824 = vpack.c.b16 %v2702, %v2700
    %v2825 = vpack.c.b16 %v2703, %v2701
    %v2826 = vpack.c.b16 %v2706, %v2704
    %v2827 = vpack.c.b16 %v2707, %v2705
    %v2828 = vpack.c.b16 %v2710, %v2708
    %v2829 = vpack.c.b16 %v2711, %v2709
    %v2830 = vpack.c.b16 %v2714, %v2712
    %v2831 = vpack.c.b16 %v2715, %v2713
    %v2832 = vpack.c.b16 %v2718, %v2716
    %v2833 = vpack.c.b16 %v2719, %v2717
    %v2834 = vpack.c.b16 %v2722, %v2720
    %v2835 = vpack.c.b16 %v2723, %v2721
    %v2836 = vpack.c.b16 %v2726, %v2724
    %v2837 = vpack.c.b16 %v2727, %v2725
    %v2838 = vpack.c.b16 %v2730, %v2728
    %v2839 = vpack.c.b16 %v2731, %v2729
    %v2840 = vpack.c.b16 %v2734, %v2732
    %v2841 = vpack.c.b16 %v2735, %v2733
    %v2842 = vpack.c.b16 %v2738, %v2736
    %v2843 = vpack.c.b16 %v2739, %v2737
    %v2844 = vpack.c.b16 %v2742, %v2740
    %v2845 = vpack.c.b16 %v2743, %v2741
    %v2846 = vpack.c.b16 %v2746, %v2744
    %v2847 = vpack.c.b16 %v2747, %v2745
    %v2848 = vpack.c.b16 %v2750, %v2748
    %v2849 = vpack.c.b16 %v2751, %v2749
    %2948 = vmatprep.subr.bf16.mxu0 %v2753
    %2949 = vmatpush1.bf16.msra.mxu0 %v2752
    %2950 = vmatprep.subr.bf16.mxu0 %v2755
    %2951 = vmatpush1.bf16.msra.mxu0 %v2754
    %2952 = vmatprep.subr.bf16.mxu0 %v2757
    %2953 = vmatpush1.bf16.msra.mxu0 %v2756
    %2954 = vmatprep.subr.bf16.mxu0 %v2759
    %2955 = vmatpush1.bf16.msra.mxu0 %v2758
    %2956 = vmatprep.subr.bf16.mxu0 %v2761
    %2957 = vmatpush1.bf16.msra.mxu0 %v2760
    %2958 = vmatprep.subr.bf16.mxu0 %v2763
    %2959 = vmatpush1.bf16.msra.mxu0 %v2762
    %2960 = vmatprep.subr.bf16.mxu0 %v2765
    %2961 = vmatpush1.bf16.msra.mxu0 %v2764
    %2962 = vmatprep.subr.bf16.mxu0 %v2767
    %2963 = vmatpush1.bf16.msra.mxu0 %v2766
    %2964 = vmatprep.subr.bf16.mxu0 %v2769
    %2965 = vmatpush1.bf16.msra.mxu0 %v2768
    %2966 = vmatprep.subr.bf16.mxu0 %v2771
    %2967 = vmatpush1.bf16.msra.mxu0 %v2770
    %2968 = vmatprep.subr.bf16.mxu0 %v2773
    %2969 = vmatpush1.bf16.msra.mxu0 %v2772
    %2970 = vmatprep.subr.bf16.mxu0 %v2775
    %2971 = vmatpush1.bf16.msra.mxu0 %v2774
    %2972 = vmatprep.subr.bf16.mxu0 %v2777
    %2973 = vmatpush1.bf16.msra.mxu0 %v2776
    %2974 = vmatprep.subr.bf16.mxu0 %v2779
    %2975 = vmatpush1.bf16.msra.mxu0 %v2778
    %2976 = vmatprep.subr.bf16.mxu0 %v2781
    %2977 = vmatpush1.bf16.msra.mxu0 %v2780
    %2978 = vmatprep.subr.bf16.mxu0 %v2783
    %2979 = vmatpush1.bf16.msra.mxu0 %v2782
    %2980 = vmatprep.mubr.bf16.mxu0 %v151
    %2981 = vmatmul.mubr.bf16.gmra.mrb[0].mxu0 %v150
    %v2982 = vpop.f32.mrb[0].mxu0
    %v2983 = vadd.f32 0.0, %v2982
    %v2984 = vpop.f32.mrb[0].mxu0
    %v2985 = vadd.f32 0.0, %v2984
    %v2986 = vpop.f32.mrb[0].mxu0
    %v2987 = vadd.f32 0.0, %v2986
    %v2988 = vpop.f32.mrb[0].mxu0
    %v2989 = vadd.f32 0.0, %v2988
    %2990 = vdwg.mxu0
    %2991 = vmatprep.subr.bf16.mxu0 %v2785
    %2992 = vmatpush1.bf16.msra.mxu0 %v2784
    %2993 = vmatprep.subr.bf16.mxu0 %v2787
    %2994 = vmatpush1.bf16.msra.mxu0 %v2786
    %2995 = vmatprep.subr.bf16.mxu0 %v2789
    %2996 = vmatpush1.bf16.msra.mxu0 %v2788
    %2997 = vmatprep.subr.bf16.mxu0 %v2791
    %2998 = vmatpush1.bf16.msra.mxu0 %v2790
    %2999 = vmatprep.subr.bf16.mxu0 %v2793
    %3000 = vmatpush1.bf16.msra.mxu0 %v2792
    %3001 = vmatprep.subr.bf16.mxu0 %v2795
    %3002 = vmatpush1.bf16.msra.mxu0 %v2794
    %3003 = vmatprep.subr.bf16.mxu0 %v2797
    %3004 = vmatpush1.bf16.msra.mxu0 %v2796
    %3005 = vmatprep.subr.bf16.mxu0 %v2799
    %3006 = vmatpush1.bf16.msra.mxu0 %v2798
    %3007 = vmatprep.subr.bf16.mxu0 %v2801
    %3008 = vmatpush1.bf16.msra.mxu0 %v2800
    %3009 = vmatprep.subr.bf16.mxu0 %v2803
    %3010 = vmatpush1.bf16.msra.mxu0 %v2802
    %3011 = vmatprep.subr.bf16.mxu0 %v2805
    %3012 = vmatpush1.bf16.msra.mxu0 %v2804
    %3013 = vmatprep.subr.bf16.mxu0 %v2807
    %3014 = vmatpush1.bf16.msra.mxu0 %v2806
    %3015 = vmatprep.subr.bf16.mxu0 %v2809
    %3016 = vmatpush1.bf16.msra.mxu0 %v2808
    %3017 = vmatprep.subr.bf16.mxu0 %v2811
    %3018 = vmatpush1.bf16.msra.mxu0 %v2810
    %3019 = vmatprep.subr.bf16.mxu0 %v2813
    %3020 = vmatpush1.bf16.msra.mxu0 %v2812
    %3021 = vmatprep.subr.bf16.mxu0 %v2815
    %3022 = vmatpush1.bf16.msra.mxu0 %v2814
    %3023 = vmatprep.mubr.bf16.mxu0 %v153
    %3024 = vmatmul.mubr.bf16.gmra.mrb[0].mxu0 %v152
    %v3025 = vpop.f32.mrb[0].mxu0
    %v3026 = vadd.f32 %v2983, %v3025
    %v3027 = vpop.f32.mrb[0].mxu0
    %v3028 = vadd.f32 %v2985, %v3027
    %v3029 = vpop.f32.mrb[0].mxu0
    %v3030 = vadd.f32 %v2987, %v3029
    %v3031 = vpop.f32.mrb[0].mxu0
    %v3032 = vadd.f32 %v2989, %v3031
    %3033 = vdwg.mxu0
    %3034 = vmatprep.subr.bf16.mxu0 %v2817
    %3035 = vmatpush1.bf16.msra.mxu0 %v2816
    %3036 = vmatprep.subr.bf16.mxu0 %v2819
    %3037 = vmatpush1.bf16.msra.mxu0 %v2818
    %3038 = vmatprep.subr.bf16.mxu0 %v2821
    %3039 = vmatpush1.bf16.msra.mxu0 %v2820
    %3040 = vmatprep.subr.bf16.mxu0 %v2823
    %3041 = vmatpush1.bf16.msra.mxu0 %v2822
    %3042 = vmatprep.subr.bf16.mxu0 %v2825
    %3043 = vmatpush1.bf16.msra.mxu0 %v2824
    %3044 = vmatprep.subr.bf16.mxu0 %v2827
    %3045 = vmatpush1.bf16.msra.mxu0 %v2826
    %3046 = vmatprep.subr.bf16.mxu0 %v2829
    %3047 = vmatpush1.bf16.msra.mxu0 %v2828
    %3048 = vmatprep.subr.bf16.mxu0 %v2831
    %3049 = vmatpush1.bf16.msra.mxu0 %v2830
    %3050 = vmatprep.subr.bf16.mxu0 %v2833
    %3051 = vmatpush1.bf16.msra.mxu0 %v2832
    %3052 = vmatprep.subr.bf16.mxu0 %v2835
    %3053 = vmatpush1.bf16.msra.mxu0 %v2834
    %3054 = vmatprep.subr.bf16.mxu0 %v2837
    %3055 = vmatpush1.bf16.msra.mxu0 %v2836
    %3056 = vmatprep.subr.bf16.mxu0 %v2839
    %3057 = vmatpush1.bf16.msra.mxu0 %v2838
    %3058 = vmatprep.subr.bf16.mxu0 %v2841
    %3059 = vmatpush1.bf16.msra.mxu0 %v2840
    %3060 = vmatprep.subr.bf16.mxu0 %v2843
    %3061 = vmatpush1.bf16.msra.mxu0 %v2842
    %3062 = vmatprep.subr.bf16.mxu0 %v2845
    %3063 = vmatpush1.bf16.msra.mxu0 %v2844
    %3064 = vmatprep.subr.bf16.mxu0 %v2847
    %3065 = vmatpush1.bf16.msra.mxu0 %v2846
    %3066 = vmatprep.mubr.bf16.mxu0 %v155
    %3067 = vmatmul.mubr.bf16.gmra.mrb[0].mxu0 %v154
    %v3068 = vpop.f32.mrb[0].mxu0
    %v3069 = vadd.f32 %v3026, %v3068
    %v3070 = vpop.f32.mrb[0].mxu0
    %v3071 = vadd.f32 %v3028, %v3070
    %v3072 = vpop.f32.mrb[0].mxu0
    %v3073 = vadd.f32 %v3030, %v3072
    %v3074 = vpop.f32.mrb[0].mxu0
    %v3075 = vadd.f32 %v3032, %v3074
    %3076 = vdwg.mxu0
    %3077 = vmatprep.subr.bf16.mxu0 %v2849
    %3078 = vmatpush1.bf16.msra.mxu0 %v2848
    %3079 = vmatprep.subr.bf16.mxu0 0
    %3080 = vmatpush1.bf16.msra.mxu0 0
    %3081 = vmatprep.subr.bf16.mxu0 0
    %3082 = vmatpush1.bf16.msra.mxu0 0
    %3083 = vmatprep.subr.bf16.mxu0 0
    %3084 = vmatpush1.bf16.msra.mxu0 0
    %3085 = vmatprep.subr.bf16.mxu0 0
    %3086 = vmatpush1.bf16.msra.mxu0 0
    %3087 = vmatprep.subr.bf16.mxu0 0
    %3088 = vmatpush1.bf16.msra.mxu0 0
    %3089 = vmatprep.subr.bf16.mxu0 0
    %3090 = vmatpush1.bf16.msra.mxu0 0
    %3091 = vmatprep.subr.bf16.mxu0 0
    %3092 = vmatpush1.bf16.msra.mxu0 0
    %3093 = vmatprep.subr.bf16.mxu0 0
    %3094 = vmatpush1.bf16.msra.mxu0 0
    %3095 = vmatprep.subr.bf16.mxu0 0
    %3096 = vmatpush1.bf16.msra.mxu0 0
    %3097 = vmatprep.subr.bf16.mxu0 0
    %3098 = vmatpush1.bf16.msra.mxu0 0
    %3099 = vmatprep.subr.bf16.mxu0 0
    %3100 = vmatpush1.bf16.msra.mxu0 0
    %3101 = vmatprep.subr.bf16.mxu0 0
    %3102 = vmatpush1.bf16.msra.mxu0 0
    %3103 = vmatprep.subr.bf16.mxu0 0
    %3104 = vmatpush1.bf16.msra.mxu0 0
    %3105 = vmatprep.subr.bf16.mxu0 0
    %3106 = vmatpush1.bf16.msra.mxu0 0
    %3107 = vmatprep.subr.bf16.mxu0 0
    %3108 = vmatpush1.bf16.msra.mxu0 0
    %3109 = vmatprep.mubr.bf16.mxu0 0
    %3110 = vmatmul.mubr.bf16.gmra.mrb[0].mxu0 %v655
    %v3111 = vpop.f32.mrb[0].mxu0
    %v3112 = vadd.f32 %v3069, %v3111
    %v3113 = vpop.f32.mrb[0].mxu0
    %v3114 = vadd.f32 %v3071, %v3113
    %v3115 = vpop.f32.mrb[0].mxu0
    %v3116 = vadd.f32 %v3073, %v3115
    %v3117 = vpop.f32.mrb[0].mxu0
    %v3118 = vadd.f32 %v3075, %v3117
    %3119 = vdwg.mxu0
    %v3120 = vmax.f32 %v2355, %v3112
    %v3121 = vmax.f32 %v2356, %v3114
    %v3122 = vmax.f32 %v2357, %v3116
    %v3123 = vmax.f32 %v2358, %v3118
    %s3124 = scalar_lea.vmem %s1, 3136
    %v3125 = vld [vmem:[%s3124] sm:$0xff]
    %v3126 = vld [vmem:[%s3124 + $0x8] sm:$0xff]
    %v3127 = vld [vmem:[%s3124 + $0x10] sm:$0xff]
    %v3128 = vld [vmem:[%s3124 + $0x18] sm:$0xff]
    %v3129 = vld [vmem:[%s3124 + $0x20] sm:$0xff]
    %v3130 = vld [vmem:[%s3124 + $0x28] sm:$0xff]
    %v3131 = vld [vmem:[%s3124 + $0x30] sm:$0xff]
    %v3132 = vld [vmem:[%s3124 + $0x38] sm:$0xff]
    %v3133 = vld [vmem:[%s3124 + $0x40] sm:$0xff]
    %v3134 = vld [vmem:[%s3124 + $0x48] sm:$0xff]
    %v3135 = vld [vmem:[%s3124 + $0x50] sm:$0xff]
    %v3136 = vld [vmem:[%s3124 + $0x58] sm:$0xff]
    %v3137 = vld [vmem:[%s3124 + $0x60] sm:$0xff]
    %v3138 = vld [vmem:[%s3124 + $0x68] sm:$0xff]
    %v3139 = vld [vmem:[%s3124 + $0x70] sm:$0xff]
    %v3140 = vld [vmem:[%s3124 + $0x78] sm:$0xff]
    %v3141 = vld [vmem:[%s3124 + $0x80] sm:$0xff]
    %v3142 = vld [vmem:[%s3124 + $0x88] sm:$0xff]
    %v3143 = vld [vmem:[%s3124 + $0x90] sm:$0xff]
    %v3144 = vld [vmem:[%s3124 + $0x98] sm:$0xff]
    %v3145 = vld [vmem:[%s3124 + $0xa0] sm:$0xff]
    %v3146 = vld [vmem:[%s3124 + $0xa8] sm:$0xff]
    %v3147 = vld [vmem:[%s3124 + $0xb0] sm:$0xff]
    %v3148 = vld [vmem:[%s3124 + $0xb8] sm:$0xff]
    %v3149 = vld [vmem:[%s3124 + $0xc0] sm:$0xff]
    %v3150 = vld [vmem:[%s3124 + $0xc8] sm:$0xff]
    %v3151 = vld [vmem:[%s3124 + $0xd0] sm:$0xff]
    %v3152 = vld [vmem:[%s3124 + $0xd8] sm:$0xff]
    %v3153 = vld [vmem:[%s3124 + $0xe0] sm:$0xff]
    %v3154 = vld [vmem:[%s3124 + $0xe8] sm:$0xff]
    %v3155 = vld [vmem:[%s3124 + $0xf0] sm:$0xff]
    %v3156 = vld [vmem:[%s3124 + $0xf8] sm:$0xff]
    %v3157 = vld [vmem:[%s3124 + $0x100] sm:$0xff]
    %v3158 = vld [vmem:[%s3124 + $0x108] sm:$0xff]
    %v3159 = vld [vmem:[%s3124 + $0x110] sm:$0xff]
    %v3160 = vld [vmem:[%s3124 + $0x118] sm:$0xff]
    %v3161 = vld [vmem:[%s3124 + $0x120] sm:$0xff]
    %v3162 = vld [vmem:[%s3124 + $0x128] sm:$0xff]
    %v3163 = vld [vmem:[%s3124 + $0x130] sm:$0xff]
    %v3164 = vld [vmem:[%s3124 + $0x138] sm:$0xff]
    %v3165 = vld [vmem:[%s3124 + $0x140] sm:$0xff]
    %v3166 = vld [vmem:[%s3124 + $0x148] sm:$0xff]
    %v3167 = vld [vmem:[%s3124 + $0x150] sm:$0xff]
    %v3168 = vld [vmem:[%s3124 + $0x158] sm:$0xff]
    %v3169 = vld [vmem:[%s3124 + $0x160] sm:$0xff]
    %v3170 = vld [vmem:[%s3124 + $0x168] sm:$0xff]
    %v3171 = vld [vmem:[%s3124 + $0x170] sm:$0xff]
    %v3172 = vld [vmem:[%s3124 + $0x178] sm:$0xff]
    %v3173 = vld [vmem:[%s3124 + $0x180] sm:$0xff]
    %v3174 = vld [vmem:[%s3124 + $0x188] sm:$0xff]
    %v3175 = vld [vmem:[%s3124 + $0x190] sm:$0xff]
    %v3176 = vld [vmem:[%s3124 + $0x198] sm:$0xff]
    %v3177 = vld [vmem:[%s3124 + $0x1a0] sm:$0xff]
    %v3178 = vld [vmem:[%s3124 + $0x1a8] sm:$0xff]
    %v3179 = vld [vmem:[%s3124 + $0x1b0] sm:$0xff]
    %v3180 = vld [vmem:[%s3124 + $0x1b8] sm:$0xff]
    %v3181 = vld [vmem:[%s3124 + $0x1c0] sm:$0xff]
    %v3182 = vld [vmem:[%s3124 + $0x1c8] sm:$0xff]
    %v3183 = vld [vmem:[%s3124 + $0x1d0] sm:$0xff]
    %v3184 = vld [vmem:[%s3124 + $0x1d8] sm:$0xff]
    %v3185 = vld [vmem:[%s3124 + $0x1e0] sm:$0xff]
    %v3186 = vld [vmem:[%s3124 + $0x1e8] sm:$0xff]
    %v3187 = vld [vmem:[%s3124 + $0x1f0] sm:$0xff]
    %v3188 = vld [vmem:[%s3124 + $0x1f8] sm:$0xff]
    %v3189 = vld [vmem:[%s3124 + $0x200] sm:$0xff]
    %v3190 = vld [vmem:[%s3124 + $0x208] sm:$0xff]
    %v3191 = vld [vmem:[%s3124 + $0x210] sm:$0xff]
    %v3192 = vld [vmem:[%s3124 + $0x218] sm:$0xff]
    %v3193 = vld [vmem:[%s3124 + $0x220] sm:$0xff]
    %v3194 = vld [vmem:[%s3124 + $0x228] sm:$0xff]
    %v3195 = vld [vmem:[%s3124 + $0x230] sm:$0xff]
    %v3196 = vld [vmem:[%s3124 + $0x238] sm:$0xff]
    %v3197 = vld [vmem:[%s3124 + $0x240] sm:$0xff]
    %v3198 = vld [vmem:[%s3124 + $0x248] sm:$0xff]
    %v3199 = vld [vmem:[%s3124 + $0x250] sm:$0xff]
    %v3200 = vld [vmem:[%s3124 + $0x258] sm:$0xff]
    %v3201 = vld [vmem:[%s3124 + $0x260] sm:$0xff]
    %v3202 = vld [vmem:[%s3124 + $0x268] sm:$0xff]
    %v3203 = vld [vmem:[%s3124 + $0x270] sm:$0xff]
    %v3204 = vld [vmem:[%s3124 + $0x278] sm:$0xff]
    %v3205 = vld [vmem:[%s3124 + $0x280] sm:$0xff]
    %v3206 = vld [vmem:[%s3124 + $0x288] sm:$0xff]
    %v3207 = vld [vmem:[%s3124 + $0x290] sm:$0xff]
    %v3208 = vld [vmem:[%s3124 + $0x298] sm:$0xff]
    %v3209 = vld [vmem:[%s3124 + $0x2a0] sm:$0xff]
    %v3210 = vld [vmem:[%s3124 + $0x2a8] sm:$0xff]
    %v3211 = vld [vmem:[%s3124 + $0x2b0] sm:$0xff]
    %v3212 = vld [vmem:[%s3124 + $0x2b8] sm:$0xff]
    %v3213 = vld [vmem:[%s3124 + $0x2c0] sm:$0xff]
    %v3214 = vld [vmem:[%s3124 + $0x2c8] sm:$0xff]
    %v3215 = vld [vmem:[%s3124 + $0x2d0] sm:$0xff]
    %v3216 = vld [vmem:[%s3124 + $0x2d8] sm:$0xff]
    %v3217 = vld [vmem:[%s3124 + $0x2e0] sm:$0xff]
    %v3218 = vld [vmem:[%s3124 + $0x2e8] sm:$0xff]
    %v3219 = vld [vmem:[%s3124 + $0x2f0] sm:$0xff]
    %v3220 = vld [vmem:[%s3124 + $0x2f8] sm:$0xff]
    %v3221 = vld [vmem:[%s3124 + $0x300] sm:$0xff]
    %v3222 = vld [vmem:[%s3124 + $0x308] sm:$0xff]
    %v3321 = vunpack.c.l.b16 %v3125
    %v3322 = vunpack.c.h.b16 %v3125
    %v3323 = vunpack.c.l.b16 %v3126
    %v3324 = vunpack.c.h.b16 %v3126
    %v3325 = vunpack.c.l.b16 %v3127
    %v3326 = vunpack.c.h.b16 %v3127
    %v3327 = vunpack.c.l.b16 %v3128
    %v3328 = vunpack.c.h.b16 %v3128
    %v3329 = vunpack.c.l.b16 %v3129
    %v3330 = vunpack.c.h.b16 %v3129
    %v3331 = vunpack.c.l.b16 %v3130
    %v3332 = vunpack.c.h.b16 %v3130
    %v3333 = vunpack.c.l.b16 %v3131
    %v3334 = vunpack.c.h.b16 %v3131
    %v3335 = vunpack.c.l.b16 %v3132
    %v3336 = vunpack.c.h.b16 %v3132
    %v3337 = vunpack.c.l.b16 %v3133
    %v3338 = vunpack.c.h.b16 %v3133
    %v3339 = vunpack.c.l.b16 %v3134
    %v3340 = vunpack.c.h.b16 %v3134
    %v3341 = vunpack.c.l.b16 %v3135
    %v3342 = vunpack.c.h.b16 %v3135
    %v3343 = vunpack.c.l.b16 %v3136
    %v3344 = vunpack.c.h.b16 %v3136
    %v3345 = vunpack.c.l.b16 %v3137
    %v3346 = vunpack.c.h.b16 %v3137
    %v3347 = vunpack.c.l.b16 %v3138
    %v3348 = vunpack.c.h.b16 %v3138
    %v3349 = vunpack.c.l.b16 %v3139
    %v3350 = vunpack.c.h.b16 %v3139
    %v3351 = vunpack.c.l.b16 %v3140
    %v3352 = vunpack.c.h.b16 %v3140
    %v3353 = vunpack.c.l.b16 %v3141
    %v3354 = vunpack.c.h.b16 %v3141
    %v3355 = vunpack.c.l.b16 %v3142
    %v3356 = vunpack.c.h.b16 %v3142
    %v3357 = vunpack.c.l.b16 %v3143
    %v3358 = vunpack.c.h.b16 %v3143
    %v3359 = vunpack.c.l.b16 %v3144
    %v3360 = vunpack.c.h.b16 %v3144
    %v3361 = vunpack.c.l.b16 %v3145
    %v3362 = vunpack.c.h.b16 %v3145
    %v3363 = vunpack.c.l.b16 %v3146
    %v3364 = vunpack.c.h.b16 %v3146
    %v3365 = vunpack.c.l.b16 %v3147
    %v3366 = vunpack.c.h.b16 %v3147
    %v3367 = vunpack.c.l.b16 %v3148
    %v3368 = vunpack.c.h.b16 %v3148
    %v3369 = vunpack.c.l.b16 %v3149
    %v3370 = vunpack.c.h.b16 %v3149
    %v3371 = vunpack.c.l.b16 %v3150
    %v3372 = vunpack.c.h.b16 %v3150
    %v3373 = vunpack.c.l.b16 %v3151
    %v3374 = vunpack.c.h.b16 %v3151
    %v3375 = vunpack.c.l.b16 %v3152
    %v3376 = vunpack.c.h.b16 %v3152
    %v3377 = vunpack.c.l.b16 %v3153
    %v3378 = vunpack.c.h.b16 %v3153
    %v3379 = vunpack.c.l.b16 %v3154
    %v3380 = vunpack.c.h.b16 %v3154
    %v3381 = vunpack.c.l.b16 %v3155
    %v3382 = vunpack.c.h.b16 %v3155
    %v3383 = vunpack.c.l.b16 %v3156
    %v3384 = vunpack.c.h.b16 %v3156
    %v3385 = vunpack.c.l.b16 %v3157
    %v3386 = vunpack.c.h.b16 %v3157
    %v3387 = vunpack.c.l.b16 %v3158
    %v3388 = vunpack.c.h.b16 %v3158
    %v3389 = vunpack.c.l.b16 %v3159
    %v3390 = vunpack.c.h.b16 %v3159
    %v3391 = vunpack.c.l.b16 %v3160
    %v3392 = vunpack.c.h.b16 %v3160
    %v3393 = vunpack.c.l.b16 %v3161
    %v3394 = vunpack.c.h.b16 %v3161
    %v3395 = vunpack.c.l.b16 %v3162
    %v3396 = vunpack.c.h.b16 %v3162
    %v3397 = vunpack.c.l.b16 %v3163
    %v3398 = vunpack.c.h.b16 %v3163
    %v3399 = vunpack.c.l.b16 %v3164
    %v3400 = vunpack.c.h.b16 %v3164
    %v3401 = vunpack.c.l.b16 %v3165
    %v3402 = vunpack.c.h.b16 %v3165
    %v3403 = vunpack.c.l.b16 %v3166
    %v3404 = vunpack.c.h.b16 %v3166
    %v3405 = vunpack.c.l.b16 %v3167
    %v3406 = vunpack.c.h.b16 %v3167
    %v3407 = vunpack.c.l.b16 %v3168
    %v3408 = vunpack.c.h.b16 %v3168
    %v3409 = vunpack.c.l.b16 %v3169
    %v3410 = vunpack.c.h.b16 %v3169
    %v3411 = vunpack.c.l.b16 %v3170
    %v3412 = vunpack.c.h.b16 %v3170
    %v3413 = vunpack.c.l.b16 %v3171
    %v3414 = vunpack.c.h.b16 %v3171
    %v3415 = vunpack.c.l.b16 %v3172
    %v3416 = vunpack.c.h.b16 %v3172
    %v3417 = vunpack.c.l.b16 %v3173
    %v3418 = vunpack.c.h.b16 %v3173
    %v3419 = vunpack.c.l.b16 %v3174
    %v3420 = vunpack.c.h.b16 %v3174
    %v3421 = vunpack.c.l.b16 %v3175
    %v3422 = vunpack.c.h.b16 %v3175
    %v3423 = vunpack.c.l.b16 %v3176
    %v3424 = vunpack.c.h.b16 %v3176
    %v3425 = vunpack.c.l.b16 %v3177
    %v3426 = vunpack.c.h.b16 %v3177
    %v3427 = vunpack.c.l.b16 %v3178
    %v3428 = vunpack.c.h.b16 %v3178
    %v3429 = vunpack.c.l.b16 %v3179
    %v3430 = vunpack.c.h.b16 %v3179
    %v3431 = vunpack.c.l.b16 %v3180
    %v3432 = vunpack.c.h.b16 %v3180
    %v3433 = vunpack.c.l.b16 %v3181
    %v3434 = vunpack.c.h.b16 %v3181
    %v3435 = vunpack.c.l.b16 %v3182
    %v3436 = vunpack.c.h.b16 %v3182
    %v3437 = vunpack.c.l.b16 %v3183
    %v3438 = vunpack.c.h.b16 %v3183
    %v3439 = vunpack.c.l.b16 %v3184
    %v3440 = vunpack.c.h.b16 %v3184
    %v3441 = vunpack.c.l.b16 %v3185
    %v3442 = vunpack.c.h.b16 %v3185
    %v3443 = vunpack.c.l.b16 %v3186
    %v3444 = vunpack.c.h.b16 %v3186
    %v3445 = vunpack.c.l.b16 %v3187
    %v3446 = vunpack.c.h.b16 %v3187
    %v3447 = vunpack.c.l.b16 %v3188
    %v3448 = vunpack.c.h.b16 %v3188
    %v3449 = vunpack.c.l.b16 %v3189
    %v3450 = vunpack.c.h.b16 %v3189
    %v3451 = vunpack.c.l.b16 %v3190
    %v3452 = vunpack.c.h.b16 %v3190
    %v3453 = vunpack.c.l.b16 %v3191
    %v3454 = vunpack.c.h.b16 %v3191
    %v3455 = vunpack.c.l.b16 %v3192
    %v3456 = vunpack.c.h.b16 %v3192
    %v3457 = vunpack.c.l.b16 %v3193
    %v3458 = vunpack.c.h.b16 %v3193
    %v3459 = vunpack.c.l.b16 %v3194
    %v3460 = vunpack.c.h.b16 %v3194
    %v3461 = vunpack.c.l.b16 %v3195
    %v3462 = vunpack.c.h.b16 %v3195
    %v3463 = vunpack.c.l.b16 %v3196
    %v3464 = vunpack.c.h.b16 %v3196
    %v3465 = vunpack.c.l.b16 %v3197
    %v3466 = vunpack.c.h.b16 %v3197
    %v3467 = vunpack.c.l.b16 %v3198
    %v3468 = vunpack.c.h.b16 %v3198
    %v3469 = vunpack.c.l.b16 %v3199
    %v3470 = vunpack.c.h.b16 %v3199
    %v3471 = vunpack.c.l.b16 %v3200
    %v3472 = vunpack.c.h.b16 %v3200
    %v3473 = vunpack.c.l.b16 %v3201
    %v3474 = vunpack.c.h.b16 %v3201
    %v3475 = vunpack.c.l.b16 %v3202
    %v3476 = vunpack.c.h.b16 %v3202
    %v3477 = vunpack.c.l.b16 %v3203
    %v3478 = vunpack.c.h.b16 %v3203
    %v3479 = vunpack.c.l.b16 %v3204
    %v3480 = vunpack.c.h.b16 %v3204
    %v3481 = vunpack.c.l.b16 %v3205
    %v3482 = vunpack.c.h.b16 %v3205
    %v3483 = vunpack.c.l.b16 %v3206
    %v3484 = vunpack.c.h.b16 %v3206
    %v3485 = vunpack.c.l.b16 %v3207
    %v3486 = vunpack.c.h.b16 %v3207
    %v3487 = vunpack.c.l.b16 %v3208
    %v3488 = vunpack.c.h.b16 %v3208
    %v3489 = vunpack.c.l.b16 %v3209
    %v3490 = vunpack.c.h.b16 %v3209
    %v3491 = vunpack.c.l.b16 %v3210
    %v3492 = vunpack.c.h.b16 %v3210
    %v3493 = vunpack.c.l.b16 %v3211
    %v3494 = vunpack.c.h.b16 %v3211
    %v3495 = vunpack.c.l.b16 %v3212
    %v3496 = vunpack.c.h.b16 %v3212
    %v3497 = vunpack.c.l.b16 %v3213
    %v3498 = vunpack.c.h.b16 %v3213
    %v3499 = vunpack.c.l.b16 %v3214
    %v3500 = vunpack.c.h.b16 %v3214
    %v3501 = vunpack.c.l.b16 %v3215
    %v3502 = vunpack.c.h.b16 %v3215
    %v3503 = vunpack.c.l.b16 %v3216
    %v3504 = vunpack.c.h.b16 %v3216
    %v3505 = vunpack.c.l.b16 %v3217
    %v3506 = vunpack.c.h.b16 %v3217
    %v3507 = vunpack.c.l.b16 %v3218
    %v3508 = vunpack.c.h.b16 %v3218
    %v3509 = vunpack.c.l.b16 %v3219
    %v3510 = vunpack.c.h.b16 %v3219
    %v3511 = vunpack.c.l.b16 %v3220
    %v3512 = vunpack.c.h.b16 %v3220
    %v3513 = vunpack.c.l.b16 %v3221
    %v3514 = vunpack.c.h.b16 %v3221
    %v3515 = vunpack.c.l.b16 %v3222
    %v3516 = vunpack.c.h.b16 %v3222
    %v3517 = vpack.c.b16 %v3323, %v3321
    %v3518 = vpack.c.b16 %v3324, %v3322
    %v3519 = vpack.c.b16 %v3327, %v3325
    %v3520 = vpack.c.b16 %v3328, %v3326
    %v3521 = vpack.c.b16 %v3331, %v3329
    %v3522 = vpack.c.b16 %v3332, %v3330
    %v3523 = vpack.c.b16 %v3335, %v3333
    %v3524 = vpack.c.b16 %v3336, %v3334
    %v3525 = vpack.c.b16 %v3339, %v3337
    %v3526 = vpack.c.b16 %v3340, %v3338
    %v3527 = vpack.c.b16 %v3343, %v3341
    %v3528 = vpack.c.b16 %v3344, %v3342
    %v3529 = vpack.c.b16 %v3347, %v3345
    %v3530 = vpack.c.b16 %v3348, %v3346
    %v3531 = vpack.c.b16 %v3351, %v3349
    %v3532 = vpack.c.b16 %v3352, %v3350
    %v3533 = vpack.c.b16 %v3355, %v3353
    %v3534 = vpack.c.b16 %v3356, %v3354
    %v3535 = vpack.c.b16 %v3359, %v3357
    %v3536 = vpack.c.b16 %v3360, %v3358
    %v3537 = vpack.c.b16 %v3363, %v3361
    %v3538 = vpack.c.b16 %v3364, %v3362
    %v3539 = vpack.c.b16 %v3367, %v3365
    %v3540 = vpack.c.b16 %v3368, %v3366
    %v3541 = vpack.c.b16 %v3371, %v3369
    %v3542 = vpack.c.b16 %v3372, %v3370
    %v3543 = vpack.c.b16 %v3375, %v3373
    %v3544 = vpack.c.b16 %v3376, %v3374
    %v3545 = vpack.c.b16 %v3379, %v3377
    %v3546 = vpack.c.b16 %v3380, %v3378
    %v3547 = vpack.c.b16 %v3383, %v3381
    %v3548 = vpack.c.b16 %v3384, %v3382
    %v3549 = vpack.c.b16 %v3387, %v3385
    %v3550 = vpack.c.b16 %v3388, %v3386
    %v3551 = vpack.c.b16 %v3391, %v3389
    %v3552 = vpack.c.b16 %v3392, %v3390
    %v3553 = vpack.c.b16 %v3395, %v3393
    %v3554 = vpack.c.b16 %v3396, %v3394
    %v3555 = vpack.c.b16 %v3399, %v3397
    %v3556 = vpack.c.b16 %v3400, %v3398
    %v3557 = vpack.c.b16 %v3403, %v3401
    %v3558 = vpack.c.b16 %v3404, %v3402
    %v3559 = vpack.c.b16 %v3407, %v3405
    %v3560 = vpack.c.b16 %v3408, %v3406
    %v3561 = vpack.c.b16 %v3411, %v3409
    %v3562 = vpack.c.b16 %v3412, %v3410
    %v3563 = vpack.c.b16 %v3415, %v3413
    %v3564 = vpack.c.b16 %v3416, %v3414
    %v3565 = vpack.c.b16 %v3419, %v3417
    %v3566 = vpack.c.b16 %v3420, %v3418
    %v3567 = vpack.c.b16 %v3423, %v3421
    %v3568 = vpack.c.b16 %v3424, %v3422
    %v3569 = vpack.c.b16 %v3427, %v3425
    %v3570 = vpack.c.b16 %v3428, %v3426
    %v3571 = vpack.c.b16 %v3431, %v3429
    %v3572 = vpack.c.b16 %v3432, %v3430
    %v3573 = vpack.c.b16 %v3435, %v3433
    %v3574 = vpack.c.b16 %v3436, %v3434
    %v3575 = vpack.c.b16 %v3439, %v3437
    %v3576 = vpack.c.b16 %v3440, %v3438
    %v3577 = vpack.c.b16 %v3443, %v3441
    %v3578 = vpack.c.b16 %v3444, %v3442
    %v3579 = vpack.c.b16 %v3447, %v3445
    %v3580 = vpack.c.b16 %v3448, %v3446
    %v3581 = vpack.c.b16 %v3451, %v3449
    %v3582 = vpack.c.b16 %v3452, %v3450
    %v3583 = vpack.c.b16 %v3455, %v3453
    %v3584 = vpack.c.b16 %v3456, %v3454
    %v3585 = vpack.c.b16 %v3459, %v3457
    %v3586 = vpack.c.b16 %v3460, %v3458
    %v3587 = vpack.c.b16 %v3463, %v3461
    %v3588 = vpack.c.b16 %v3464, %v3462
    %v3589 = vpack.c.b16 %v3467, %v3465
    %v3590 = vpack.c.b16 %v3468, %v3466
    %v3591 = vpack.c.b16 %v3471, %v3469
    %v3592 = vpack.c.b16 %v3472, %v3470
    %v3593 = vpack.c.b16 %v3475, %v3473
    %v3594 = vpack.c.b16 %v3476, %v3474
    %v3595 = vpack.c.b16 %v3479, %v3477
    %v3596 = vpack.c.b16 %v3480, %v3478
    %v3597 = vpack.c.b16 %v3483, %v3481
    %v3598 = vpack.c.b16 %v3484, %v3482
    %v3599 = vpack.c.b16 %v3487, %v3485
    %v3600 = vpack.c.b16 %v3488, %v3486
    %v3601 = vpack.c.b16 %v3491, %v3489
    %v3602 = vpack.c.b16 %v3492, %v3490
    %v3603 = vpack.c.b16 %v3495, %v3493
    %v3604 = vpack.c.b16 %v3496, %v3494
    %v3605 = vpack.c.b16 %v3499, %v3497
    %v3606 = vpack.c.b16 %v3500, %v3498
    %v3607 = vpack.c.b16 %v3503, %v3501
    %v3608 = vpack.c.b16 %v3504, %v3502
    %v3609 = vpack.c.b16 %v3507, %v3505
    %v3610 = vpack.c.b16 %v3508, %v3506
    %v3611 = vpack.c.b16 %v3511, %v3509
    %v3612 = vpack.c.b16 %v3512, %v3510
    %v3613 = vpack.c.b16 %v3515, %v3513
    %v3614 = vpack.c.b16 %v3516, %v3514
    %3713 = vmatprep.subr.bf16.mxu0 %v3518
    %3714 = vmatpush1.bf16.msra.mxu0 %v3517
    %3715 = vmatprep.subr.bf16.mxu0 %v3520
    %3716 = vmatpush1.bf16.msra.mxu0 %v3519
    %3717 = vmatprep.subr.bf16.mxu0 %v3522
    %3718 = vmatpush1.bf16.msra.mxu0 %v3521
    %3719 = vmatprep.subr.bf16.mxu0 %v3524
    %3720 = vmatpush1.bf16.msra.mxu0 %v3523
    %3721 = vmatprep.subr.bf16.mxu0 %v3526
    %3722 = vmatpush1.bf16.msra.mxu0 %v3525
    %3723 = vmatprep.subr.bf16.mxu0 %v3528
    %3724 = vmatpush1.bf16.msra.mxu0 %v3527
    %3725 = vmatprep.subr.bf16.mxu0 %v3530
    %3726 = vmatpush1.bf16.msra.mxu0 %v3529
    %3727 = vmatprep.subr.bf16.mxu0 %v3532
    %3728 = vmatpush1.bf16.msra.mxu0 %v3531
    %3729 = vmatprep.subr.bf16.mxu0 %v3534
    %3730 = vmatpush1.bf16.msra.mxu0 %v3533
    %3731 = vmatprep.subr.bf16.mxu0 %v3536
    %3732 = vmatpush1.bf16.msra.mxu0 %v3535
    %3733 = vmatprep.subr.bf16.mxu0 %v3538
    %3734 = vmatpush1.bf16.msra.mxu0 %v3537
    %3735 = vmatprep.subr.bf16.mxu0 %v3540
    %3736 = vmatpush1.bf16.msra.mxu0 %v3539
    %3737 = vmatprep.subr.bf16.mxu0 %v3542
    %3738 = vmatpush1.bf16.msra.mxu0 %v3541
    %3739 = vmatprep.subr.bf16.mxu0 %v3544
    %3740 = vmatpush1.bf16.msra.mxu0 %v3543
    %3741 = vmatprep.subr.bf16.mxu0 %v3546
    %3742 = vmatpush1.bf16.msra.mxu0 %v3545
    %3743 = vmatprep.subr.bf16.mxu0 %v3548
    %3744 = vmatpush1.bf16.msra.mxu0 %v3547
    %3745 = vmatprep.mubr.bf16.mxu0 %v151
    %3746 = vmatmul.mubr.bf16.gmra.mrb[0].mxu0 %v150
    %v3747 = vpop.f32.mrb[0].mxu0
    %v3748 = vadd.f32 0.0, %v3747
    %v3749 = vpop.f32.mrb[0].mxu0
    %v3750 = vadd.f32 0.0, %v3749
    %v3751 = vpop.f32.mrb[0].mxu0
    %v3752 = vadd.f32 0.0, %v3751
    %v3753 = vpop.f32.mrb[0].mxu0
    %v3754 = vadd.f32 0.0, %v3753
    %3755 = vdwg.mxu0
    %3756 = vmatprep.subr.bf16.mxu0 %v3550
    %3757 = vmatpush1.bf16.msra.mxu0 %v3549
    %3758 = vmatprep.subr.bf16.mxu0 %v3552
    %3759 = vmatpush1.bf16.msra.mxu0 %v3551
    %3760 = vmatprep.subr.bf16.mxu0 %v3554
    %3761 = vmatpush1.bf16.msra.mxu0 %v3553
    %3762 = vmatprep.subr.bf16.mxu0 %v3556
    %3763 = vmatpush1.bf16.msra.mxu0 %v3555
    %3764 = vmatprep.subr.bf16.mxu0 %v3558
    %3765 = vmatpush1.bf16.msra.mxu0 %v3557
    %3766 = vmatprep.subr.bf16.mxu0 %v3560
    %3767 = vmatpush1.bf16.msra.mxu0 %v3559
    %3768 = vmatprep.subr.bf16.mxu0 %v3562
    %3769 = vmatpush1.bf16.msra.mxu0 %v3561
    %3770 = vmatprep.subr.bf16.mxu0 %v3564
    %3771 = vmatpush1.bf16.msra.mxu0 %v3563
    %3772 = vmatprep.subr.bf16.mxu0 %v3566
    %3773 = vmatpush1.bf16.msra.mxu0 %v3565
    %3774 = vmatprep.subr.bf16.mxu0 %v3568
    %3775 = vmatpush1.bf16.msra.mxu0 %v3567
    %3776 = vmatprep.subr.bf16.mxu0 %v3570
    %3777 = vmatpush1.bf16.msra.mxu0 %v3569
    %3778 = vmatprep.subr.bf16.mxu0 %v3572
    %3779 = vmatpush1.bf16.msra.mxu0 %v3571
    %3780 = vmatprep.subr.bf16.mxu0 %v3574
    %3781 = vmatpush1.bf16.msra.mxu0 %v3573
    %3782 = vmatprep.subr.bf16.mxu0 %v3576
    %3783 = vmatpush1.bf16.msra.mxu0 %v3575
    %3784 = vmatprep.subr.bf16.mxu0 %v3578
    %3785 = vmatpush1.bf16.msra.mxu0 %v3577
    %3786 = vmatprep.subr.bf16.mxu0 %v3580
    %3787 = vmatpush1.bf16.msra.mxu0 %v3579
    %3788 = vmatprep.mubr.bf16.mxu0 %v153
    %3789 = vmatmul.mubr.bf16.gmra.mrb[0].mxu0 %v152
    %v3790 = vpop.f32.mrb[0].mxu0
    %v3791 = vadd.f32 %v3748, %v3790
    %v3792 = vpop.f32.mrb[0].mxu0
    %v3793 = vadd.f32 %v3750, %v3792
    %v3794 = vpop.f32.mrb[0].mxu0
    %v3795 = vadd.f32 %v3752, %v3794
    %v3796 = vpop.f32.mrb[0].mxu0
    %v3797 = vadd.f32 %v3754, %v3796
    %3798 = vdwg.mxu0
    %3799 = vmatprep.subr.bf16.mxu0 %v3582
    %3800 = vmatpush1.bf16.msra.mxu0 %v3581
    %3801 = vmatprep.subr.bf16.mxu0 %v3584
    %3802 = vmatpush1.bf16.msra.mxu0 %v3583
    %3803 = vmatprep.subr.bf16.mxu0 %v3586
    %3804 = vmatpush1.bf16.msra.mxu0 %v3585
    %3805 = vmatprep.subr.bf16.mxu0 %v3588
    %3806 = vmatpush1.bf16.msra.mxu0 %v3587
    %3807 = vmatprep.subr.bf16.mxu0 %v3590
    %3808 = vmatpush1.bf16.msra.mxu0 %v3589
    %3809 = vmatprep.subr.bf16.mxu0 %v3592
    %3810 = vmatpush1.bf16.msra.mxu0 %v3591
    %3811 = vmatprep.subr.bf16.mxu0 %v3594
    %3812 = vmatpush1.bf16.msra.mxu0 %v3593
    %3813 = vmatprep.subr.bf16.mxu0 %v3596
    %3814 = vmatpush1.bf16.msra.mxu0 %v3595
    %3815 = vmatprep.subr.bf16.mxu0 %v3598
    %3816 = vmatpush1.bf16.msra.mxu0 %v3597
    %3817 = vmatprep.subr.bf16.mxu0 %v3600
    %3818 = vmatpush1.bf16.msra.mxu0 %v3599
    %3819 = vmatprep.subr.bf16.mxu0 %v3602
    %3820 = vmatpush1.bf16.msra.mxu0 %v3601
    %3821 = vmatprep.subr.bf16.mxu0 %v3604
    %3822 = vmatpush1.bf16.msra.mxu0 %v3603
    %3823 = vmatprep.subr.bf16.mxu0 %v3606
    %3824 = vmatpush1.bf16.msra.mxu0 %v3605
    %3825 = vmatprep.subr.bf16.mxu0 %v3608
    %3826 = vmatpush1.bf16.msra.mxu0 %v3607
    %3827 = vmatprep.subr.bf16.mxu0 %v3610
    %3828 = vmatpush1.bf16.msra.mxu0 %v3609
    %3829 = vmatprep.subr.bf16.mxu0 %v3612
    %3830 = vmatpush1.bf16.msra.mxu0 %v3611
    %3831 = vmatprep.mubr.bf16.mxu0 %v155
    %3832 = vmatmul.mubr.bf16.gmra.mrb[0].mxu0 %v154
    %v3833 = vpop.f32.mrb[0].mxu0
    %v3834 = vadd.f32 %v3791, %v3833
    %v3835 = vpop.f32.mrb[0].mxu0
    %v3836 = vadd.f32 %v3793, %v3835
    %v3837 = vpop.f32.mrb[0].mxu0
    %v3838 = vadd.f32 %v3795, %v3837
    %v3839 = vpop.f32.mrb[0].mxu0
    %v3840 = vadd.f32 %v3797, %v3839
    %3841 = vdwg.mxu0
    %3842 = vmatprep.subr.bf16.mxu0 %v3614
    %3843 = vmatpush1.bf16.msra.mxu0 %v3613
    %3844 = vmatprep.subr.bf16.mxu0 0
    %3845 = vmatpush1.bf16.msra.mxu0 0
    %3846 = vmatprep.subr.bf16.mxu0 0
    %3847 = vmatpush1.bf16.msra.mxu0 0
    %3848 = vmatprep.subr.bf16.mxu0 0
    %3849 = vmatpush1.bf16.msra.mxu0 0
    %3850 = vmatprep.subr.bf16.mxu0 0
    %3851 = vmatpush1.bf16.msra.mxu0 0
    %3852 = vmatprep.subr.bf16.mxu0 0
    %3853 = vmatpush1.bf16.msra.mxu0 0
    %3854 = vmatprep.subr.bf16.mxu0 0
    %3855 = vmatpush1.bf16.msra.mxu0 0
    %3856 = vmatprep.subr.bf16.mxu0 0
    %3857 = vmatpush1.bf16.msra.mxu0 0
    %3858 = vmatprep.subr.bf16.mxu0 0
    %3859 = vmatpush1.bf16.msra.mxu0 0
    %3860 = vmatprep.subr.bf16.mxu0 0
    %3861 = vmatpush1.bf16.msra.mxu0 0
    %3862 = vmatprep.subr.bf16.mxu0 0
    %3863 = vmatpush1.bf16.msra.mxu0 0
    %3864 = vmatprep.subr.bf16.mxu0 0
    %3865 = vmatpush1.bf16.msra.mxu0 0
    %3866 = vmatprep.subr.bf16.mxu0 0
    %3867 = vmatpush1.bf16.msra.mxu0 0
    %3868 = vmatprep.subr.bf16.mxu0 0
    %3869 = vmatpush1.bf16.msra.mxu0 0
    %3870 = vmatprep.subr.bf16.mxu0 0
    %3871 = vmatpush1.bf16.msra.mxu0 0
    %3872 = vmatprep.subr.bf16.mxu0 0
    %3873 = vmatpush1.bf16.msra.mxu0 0
    %3874 = vmatprep.mubr.bf16.mxu0 0
    %3875 = vmatmul.mubr.bf16.gmra.mrb[0].mxu0 %v655
    %v3876 = vpop.f32.mrb[0].mxu0
    %v3877 = vadd.f32 %v3834, %v3876
    %v3878 = vpop.f32.mrb[0].mxu0
    %v3879 = vadd.f32 %v3836, %v3878
    %v3880 = vpop.f32.mrb[0].mxu0
    %v3881 = vadd.f32 %v3838, %v3880
    %v3882 = vpop.f32.mrb[0].mxu0
    %v3883 = vadd.f32 %v3840, %v3882
    %3884 = vdwg.mxu0
    %v3885 = vmax.f32 %v3120, %v3877
    %v3886 = vmax.f32 %v3121, %v3879
    %v3887 = vmax.f32 %v3122, %v3881
    %v3888 = vmax.f32 %v3123, %v3883
    %s3889 = scalar_lea.vmem %s1, 3920
    %v3890 = vld [vmem:[%s3889] sm:$0xff]
    %v3891 = vld [vmem:[%s3889 + $0x8] sm:$0xff]
    %v3892 = vld [vmem:[%s3889 + $0x10] sm:$0xff]
    %v3893 = vld [vmem:[%s3889 + $0x18] sm:$0xff]
    %v3894 = vld [vmem:[%s3889 + $0x20] sm:$0xff]
    %v3895 = vld [vmem:[%s3889 + $0x28] sm:$0xff]
    %v3896 = vld [vmem:[%s3889 + $0x30] sm:$0xff]
    %v3897 = vld [vmem:[%s3889 + $0x38] sm:$0xff]
    %v3898 = vld [vmem:[%s3889 + $0x40] sm:$0xff]
    %v3899 = vld [vmem:[%s3889 + $0x48] sm:$0xff]
    %v3900 = vld [vmem:[%s3889 + $0x50] sm:$0xff]
    %v3901 = vld [vmem:[%s3889 + $0x58] sm:$0xff]
    %v3902 = vld [vmem:[%s3889 + $0x60] sm:$0xff]
    %v3903 = vld [vmem:[%s3889 + $0x68] sm:$0xff]
    %v3904 = vld [vmem:[%s3889 + $0x70] sm:$0xff]
    %v3905 = vld [vmem:[%s3889 + $0x78] sm:$0xff]
    %v3906 = vld [vmem:[%s3889 + $0x80] sm:$0xff]
    %v3907 = vld [vmem:[%s3889 + $0x88] sm:$0xff]
    %v3908 = vld [vmem:[%s3889 + $0x90] sm:$0xff]
    %v3909 = vld [vmem:[%s3889 + $0x98] sm:$0xff]
    %v3910 = vld [vmem:[%s3889 + $0xa0] sm:$0xff]
    %v3911 = vld [vmem:[%s3889 + $0xa8] sm:$0xff]
    %v3912 = vld [vmem:[%s3889 + $0xb0] sm:$0xff]
    %v3913 = vld [vmem:[%s3889 + $0xb8] sm:$0xff]
    %v3914 = vld [vmem:[%s3889 + $0xc0] sm:$0xff]
    %v3915 = vld [vmem:[%s3889 + $0xc8] sm:$0xff]
    %v3916 = vld [vmem:[%s3889 + $0xd0] sm:$0xff]
    %v3917 = vld [vmem:[%s3889 + $0xd8] sm:$0xff]
    %v3918 = vld [vmem:[%s3889 + $0xe0] sm:$0xff]
    %v3919 = vld [vmem:[%s3889 + $0xe8] sm:$0xff]
    %v3920 = vld [vmem:[%s3889 + $0xf0] sm:$0xff]
    %v3921 = vld [vmem:[%s3889 + $0xf8] sm:$0xff]
    %v3922 = vld [vmem:[%s3889 + $0x100] sm:$0xff]
    %v3923 = vld [vmem:[%s3889 + $0x108] sm:$0xff]
    %v3924 = vld [vmem:[%s3889 + $0x110] sm:$0xff]
    %v3925 = vld [vmem:[%s3889 + $0x118] sm:$0xff]
    %v3926 = vld [vmem:[%s3889 + $0x120] sm:$0xff]
    %v3927 = vld [vmem:[%s3889 + $0x128] sm:$0xff]
    %v3928 = vld [vmem:[%s3889 + $0x130] sm:$0xff]
    %v3929 = vld [vmem:[%s3889 + $0x138] sm:$0xff]
    %v3930 = vld [vmem:[%s3889 + $0x140] sm:$0xff]
    %v3931 = vld [vmem:[%s3889 + $0x148] sm:$0xff]
    %v3932 = vld [vmem:[%s3889 + $0x150] sm:$0xff]
    %v3933 = vld [vmem:[%s3889 + $0x158] sm:$0xff]
    %v3934 = vld [vmem:[%s3889 + $0x160] sm:$0xff]
    %v3935 = vld [vmem:[%s3889 + $0x168] sm:$0xff]
    %v3936 = vld [vmem:[%s3889 + $0x170] sm:$0xff]
    %v3937 = vld [vmem:[%s3889 + $0x178] sm:$0xff]
    %v3938 = vld [vmem:[%s3889 + $0x180] sm:$0xff]
    %v3939 = vld [vmem:[%s3889 + $0x188] sm:$0xff]
    %v3940 = vld [vmem:[%s3889 + $0x190] sm:$0xff]
    %v3941 = vld [vmem:[%s3889 + $0x198] sm:$0xff]
    %v3942 = vld [vmem:[%s3889 + $0x1a0] sm:$0xff]
    %v3943 = vld [vmem:[%s3889 + $0x1a8] sm:$0xff]
    %v3944 = vld [vmem:[%s3889 + $0x1b0] sm:$0xff]
    %v3945 = vld [vmem:[%s3889 + $0x1b8] sm:$0xff]
    %v3946 = vld [vmem:[%s3889 + $0x1c0] sm:$0xff]
    %v3947 = vld [vmem:[%s3889 + $0x1c8] sm:$0xff]
    %v3948 = vld [vmem:[%s3889 + $0x1d0] sm:$0xff]
    %v3949 = vld [vmem:[%s3889 + $0x1d8] sm:$0xff]
    %v3950 = vld [vmem:[%s3889 + $0x1e0] sm:$0xff]
    %v3951 = vld [vmem:[%s3889 + $0x1e8] sm:$0xff]
    %v3952 = vld [vmem:[%s3889 + $0x1f0] sm:$0xff]
    %v3953 = vld [vmem:[%s3889 + $0x1f8] sm:$0xff]
    %v3954 = vld [vmem:[%s3889 + $0x200] sm:$0xff]
    %v3955 = vld [vmem:[%s3889 + $0x208] sm:$0xff]
    %v3956 = vld [vmem:[%s3889 + $0x210] sm:$0xff]
    %v3957 = vld [vmem:[%s3889 + $0x218] sm:$0xff]
    %v3958 = vld [vmem:[%s3889 + $0x220] sm:$0xff]
    %v3959 = vld [vmem:[%s3889 + $0x228] sm:$0xff]
    %v3960 = vld [vmem:[%s3889 + $0x230] sm:$0xff]
    %v3961 = vld [vmem:[%s3889 + $0x238] sm:$0xff]
    %v3962 = vld [vmem:[%s3889 + $0x240] sm:$0xff]
    %v3963 = vld [vmem:[%s3889 + $0x248] sm:$0xff]
    %v3964 = vld [vmem:[%s3889 + $0x250] sm:$0xff]
    %v3965 = vld [vmem:[%s3889 + $0x258] sm:$0xff]
    %v3966 = vld [vmem:[%s3889 + $0x260] sm:$0xff]
    %v3967 = vld [vmem:[%s3889 + $0x268] sm:$0xff]
    %v3968 = vld [vmem:[%s3889 + $0x270] sm:$0xff]
    %v3969 = vld [vmem:[%s3889 + $0x278] sm:$0xff]
    %v3970 = vld [vmem:[%s3889 + $0x280] sm:$0xff]
    %v3971 = vld [vmem:[%s3889 + $0x288] sm:$0xff]
    %v3972 = vld [vmem:[%s3889 + $0x290] sm:$0xff]
    %v3973 = vld [vmem:[%s3889 + $0x298] sm:$0xff]
    %v3974 = vld [vmem:[%s3889 + $0x2a0] sm:$0xff]
    %v3975 = vld [vmem:[%s3889 + $0x2a8] sm:$0xff]
    %v3976 = vld [vmem:[%s3889 + $0x2b0] sm:$0xff]
    %v3977 = vld [vmem:[%s3889 + $0x2b8] sm:$0xff]
    %v3978 = vld [vmem:[%s3889 + $0x2c0] sm:$0xff]
    %v3979 = vld [vmem:[%s3889 + $0x2c8] sm:$0xff]
    %v3980 = vld [vmem:[%s3889 + $0x2d0] sm:$0xff]
    %v3981 = vld [vmem:[%s3889 + $0x2d8] sm:$0xff]
    %v3982 = vld [vmem:[%s3889 + $0x2e0] sm:$0xff]
    %v3983 = vld [vmem:[%s3889 + $0x2e8] sm:$0xff]
    %v3984 = vld [vmem:[%s3889 + $0x2f0] sm:$0xff]
    %v3985 = vld [vmem:[%s3889 + $0x2f8] sm:$0xff]
    %v3986 = vld [vmem:[%s3889 + $0x300] sm:$0xff]
    %v3987 = vld [vmem:[%s3889 + $0x308] sm:$0xff]
    %v4086 = vunpack.c.l.b16 %v3890
    %v4087 = vunpack.c.h.b16 %v3890
    %v4088 = vunpack.c.l.b16 %v3891
    %v4089 = vunpack.c.h.b16 %v3891
    %v4090 = vunpack.c.l.b16 %v3892
    %v4091 = vunpack.c.h.b16 %v3892
    %v4092 = vunpack.c.l.b16 %v3893
    %v4093 = vunpack.c.h.b16 %v3893
    %v4094 = vunpack.c.l.b16 %v3894
    %v4095 = vunpack.c.h.b16 %v3894
    %v4096 = vunpack.c.l.b16 %v3895
    %v4097 = vunpack.c.h.b16 %v3895
    %v4098 = vunpack.c.l.b16 %v3896
    %v4099 = vunpack.c.h.b16 %v3896
    %v4100 = vunpack.c.l.b16 %v3897
    %v4101 = vunpack.c.h.b16 %v3897
    %v4102 = vunpack.c.l.b16 %v3898
    %v4103 = vunpack.c.h.b16 %v3898
    %v4104 = vunpack.c.l.b16 %v3899
    %v4105 = vunpack.c.h.b16 %v3899
    %v4106 = vunpack.c.l.b16 %v3900
    %v4107 = vunpack.c.h.b16 %v3900
    %v4108 = vunpack.c.l.b16 %v3901
    %v4109 = vunpack.c.h.b16 %v3901
    %v4110 = vunpack.c.l.b16 %v3902
    %v4111 = vunpack.c.h.b16 %v3902
    %v4112 = vunpack.c.l.b16 %v3903
    %v4113 = vunpack.c.h.b16 %v3903
    %v4114 = vunpack.c.l.b16 %v3904
    %v4115 = vunpack.c.h.b16 %v3904
    %v4116 = vunpack.c.l.b16 %v3905
    %v4117 = vunpack.c.h.b16 %v3905
    %v4118 = vunpack.c.l.b16 %v3906
    %v4119 = vunpack.c.h.b16 %v3906
    %v4120 = vunpack.c.l.b16 %v3907
    %v4121 = vunpack.c.h.b16 %v3907
    %v4122 = vunpack.c.l.b16 %v3908
    %v4123 = vunpack.c.h.b16 %v3908
    %v4124 = vunpack.c.l.b16 %v3909
    %v4125 = vunpack.c.h.b16 %v3909
    %v4126 = vunpack.c.l.b16 %v3910
    %v4127 = vunpack.c.h.b16 %v3910
    %v4128 = vunpack.c.l.b16 %v3911
    %v4129 = vunpack.c.h.b16 %v3911
    %v4130 = vunpack.c.l.b16 %v3912
    %v4131 = vunpack.c.h.b16 %v3912
    %v4132 = vunpack.c.l.b16 %v3913
    %v4133 = vunpack.c.h.b16 %v3913
    %v4134 = vunpack.c.l.b16 %v3914
    %v4135 = vunpack.c.h.b16 %v3914
    %v4136 = vunpack.c.l.b16 %v3915
    %v4137 = vunpack.c.h.b16 %v3915
    %v4138 = vunpack.c.l.b16 %v3916
    %v4139 = vunpack.c.h.b16 %v3916
    %v4140 = vunpack.c.l.b16 %v3917
    %v4141 = vunpack.c.h.b16 %v3917
    %v4142 = vunpack.c.l.b16 %v3918
    %v4143 = vunpack.c.h.b16 %v3918
    %v4144 = vunpack.c.l.b16 %v3919
    %v4145 = vunpack.c.h.b16 %v3919
    %v4146 = vunpack.c.l.b16 %v3920
    %v4147 = vunpack.c.h.b16 %v3920
    %v4148 = vunpack.c.l.b16 %v3921
    %v4149 = vunpack.c.h.b16 %v3921
    %v4150 = vunpack.c.l.b16 %v3922
    %v4151 = vunpack.c.h.b16 %v3922
    %v4152 = vunpack.c.l.b16 %v3923
    %v4153 = vunpack.c.h.b16 %v3923
    %v4154 = vunpack.c.l.b16 %v3924
    %v4155 = vunpack.c.h.b16 %v3924
    %v4156 = vunpack.c.l.b16 %v3925
    %v4157 = vunpack.c.h.b16 %v3925
    %v4158 = vunpack.c.l.b16 %v3926
    %v4159 = vunpack.c.h.b16 %v3926
    %v4160 = vunpack.c.l.b16 %v3927
    %v4161 = vunpack.c.h.b16 %v3927
    %v4162 = vunpack.c.l.b16 %v3928
    %v4163 = vunpack.c.h.b16 %v3928
    %v4164 = vunpack.c.l.b16 %v3929
    %v4165 = vunpack.c.h.b16 %v3929
    %v4166 = vunpack.c.l.b16 %v3930
    %v4167 = vunpack.c.h.b16 %v3930
    %v4168 = vunpack.c.l.b16 %v3931
    %v4169 = vunpack.c.h.b16 %v3931
    %v4170 = vunpack.c.l.b16 %v3932
    %v4171 = vunpack.c.h.b16 %v3932
    %v4172 = vunpack.c.l.b16 %v3933
    %v4173 = vunpack.c.h.b16 %v3933
    %v4174 = vunpack.c.l.b16 %v3934
    %v4175 = vunpack.c.h.b16 %v3934
    %v4176 = vunpack.c.l.b16 %v3935
    %v4177 = vunpack.c.h.b16 %v3935
    %v4178 = vunpack.c.l.b16 %v3936
    %v4179 = vunpack.c.h.b16 %v3936
    %v4180 = vunpack.c.l.b16 %v3937
    %v4181 = vunpack.c.h.b16 %v3937
    %v4182 = vunpack.c.l.b16 %v3938
    %v4183 = vunpack.c.h.b16 %v3938
    %v4184 = vunpack.c.l.b16 %v3939
    %v4185 = vunpack.c.h.b16 %v3939
    %v4186 = vunpack.c.l.b16 %v3940
    %v4187 = vunpack.c.h.b16 %v3940
    %v4188 = vunpack.c.l.b16 %v3941
    %v4189 = vunpack.c.h.b16 %v3941
    %v4190 = vunpack.c.l.b16 %v3942
    %v4191 = vunpack.c.h.b16 %v3942
    %v4192 = vunpack.c.l.b16 %v3943
    %v4193 = vunpack.c.h.b16 %v3943
    %v4194 = vunpack.c.l.b16 %v3944
    %v4195 = vunpack.c.h.b16 %v3944
    %v4196 = vunpack.c.l.b16 %v3945
    %v4197 = vunpack.c.h.b16 %v3945
    %v4198 = vunpack.c.l.b16 %v3946
    %v4199 = vunpack.c.h.b16 %v3946
    %v4200 = vunpack.c.l.b16 %v3947
    %v4201 = vunpack.c.h.b16 %v3947
    %v4202 = vunpack.c.l.b16 %v3948
    %v4203 = vunpack.c.h.b16 %v3948
    %v4204 = vunpack.c.l.b16 %v3949
    %v4205 = vunpack.c.h.b16 %v3949
    %v4206 = vunpack.c.l.b16 %v3950
    %v4207 = vunpack.c.h.b16 %v3950
    %v4208 = vunpack.c.l.b16 %v3951
    %v4209 = vunpack.c.h.b16 %v3951
    %v4210 = vunpack.c.l.b16 %v3952
    %v4211 = vunpack.c.h.b16 %v3952
    %v4212 = vunpack.c.l.b16 %v3953
    %v4213 = vunpack.c.h.b16 %v3953
    %v4214 = vunpack.c.l.b16 %v3954
    %v4215 = vunpack.c.h.b16 %v3954
    %v4216 = vunpack.c.l.b16 %v3955
    %v4217 = vunpack.c.h.b16 %v3955
    %v4218 = vunpack.c.l.b16 %v3956
    %v4219 = vunpack.c.h.b16 %v3956
    %v4220 = vunpack.c.l.b16 %v3957
    %v4221 = vunpack.c.h.b16 %v3957
    %v4222 = vunpack.c.l.b16 %v3958
    %v4223 = vunpack.c.h.b16 %v3958
    %v4224 = vunpack.c.l.b16 %v3959
    %v4225 = vunpack.c.h.b16 %v3959
    %v4226 = vunpack.c.l.b16 %v3960
    %v4227 = vunpack.c.h.b16 %v3960
    %v4228 = vunpack.c.l.b16 %v3961
    %v4229 = vunpack.c.h.b16 %v3961
    %v4230 = vunpack.c.l.b16 %v3962
    %v4231 = vunpack.c.h.b16 %v3962
    %v4232 = vunpack.c.l.b16 %v3963
    %v4233 = vunpack.c.h.b16 %v3963
    %v4234 = vunpack.c.l.b16 %v3964
    %v4235 = vunpack.c.h.b16 %v3964
    %v4236 = vunpack.c.l.b16 %v3965
    %v4237 = vunpack.c.h.b16 %v3965
    %v4238 = vunpack.c.l.b16 %v3966
    %v4239 = vunpack.c.h.b16 %v3966
    %v4240 = vunpack.c.l.b16 %v3967
    %v4241 = vunpack.c.h.b16 %v3967
    %v4242 = vunpack.c.l.b16 %v3968
    %v4243 = vunpack.c.h.b16 %v3968
    %v4244 = vunpack.c.l.b16 %v3969
    %v4245 = vunpack.c.h.b16 %v3969
    %v4246 = vunpack.c.l.b16 %v3970
    %v4247 = vunpack.c.h.b16 %v3970
    %v4248 = vunpack.c.l.b16 %v3971
    %v4249 = vunpack.c.h.b16 %v3971
    %v4250 = vunpack.c.l.b16 %v3972
    %v4251 = vunpack.c.h.b16 %v3972
    %v4252 = vunpack.c.l.b16 %v3973
    %v4253 = vunpack.c.h.b16 %v3973
    %v4254 = vunpack.c.l.b16 %v3974
    %v4255 = vunpack.c.h.b16 %v3974
    %v4256 = vunpack.c.l.b16 %v3975
    %v4257 = vunpack.c.h.b16 %v3975
    %v4258 = vunpack.c.l.b16 %v3976
    %v4259 = vunpack.c.h.b16 %v3976
    %v4260 = vunpack.c.l.b16 %v3977
    %v4261 = vunpack.c.h.b16 %v3977
    %v4262 = vunpack.c.l.b16 %v3978
    %v4263 = vunpack.c.h.b16 %v3978
    %v4264 = vunpack.c.l.b16 %v3979
    %v4265 = vunpack.c.h.b16 %v3979
    %v4266 = vunpack.c.l.b16 %v3980
    %v4267 = vunpack.c.h.b16 %v3980
    %v4268 = vunpack.c.l.b16 %v3981
    %v4269 = vunpack.c.h.b16 %v3981
    %v4270 = vunpack.c.l.b16 %v3982
    %v4271 = vunpack.c.h.b16 %v3982
    %v4272 = vunpack.c.l.b16 %v3983
    %v4273 = vunpack.c.h.b16 %v3983
    %v4274 = vunpack.c.l.b16 %v3984
    %v4275 = vunpack.c.h.b16 %v3984
    %v4276 = vunpack.c.l.b16 %v3985
    %v4277 = vunpack.c.h.b16 %v3985
    %v4278 = vunpack.c.l.b16 %v3986
    %v4279 = vunpack.c.h.b16 %v3986
    %v4280 = vunpack.c.l.b16 %v3987
    %v4281 = vunpack.c.h.b16 %v3987
    %v4282 = vpack.c.b16 %v4088, %v4086
    %v4283 = vpack.c.b16 %v4089, %v4087
    %v4284 = vpack.c.b16 %v4092, %v4090
    %v4285 = vpack.c.b16 %v4093, %v4091
    %v4286 = vpack.c.b16 %v4096, %v4094
    %v4287 = vpack.c.b16 %v4097, %v4095
    %v4288 = vpack.c.b16 %v4100, %v4098
    %v4289 = vpack.c.b16 %v4101, %v4099
    %v4290 = vpack.c.b16 %v4104, %v4102
    %v4291 = vpack.c.b16 %v4105, %v4103
    %v4292 = vpack.c.b16 %v4108, %v4106
    %v4293 = vpack.c.b16 %v4109, %v4107
    %v4294 = vpack.c.b16 %v4112, %v4110
    %v4295 = vpack.c.b16 %v4113, %v4111
    %v4296 = vpack.c.b16 %v4116, %v4114
    %v4297 = vpack.c.b16 %v4117, %v4115
    %v4298 = vpack.c.b16 %v4120, %v4118
    %v4299 = vpack.c.b16 %v4121, %v4119
    %v4300 = vpack.c.b16 %v4124, %v4122
    %v4301 = vpack.c.b16 %v4125, %v4123
    %v4302 = vpack.c.b16 %v4128, %v4126
    %v4303 = vpack.c.b16 %v4129, %v4127
    %v4304 = vpack.c.b16 %v4132, %v4130
    %v4305 = vpack.c.b16 %v4133, %v4131
    %v4306 = vpack.c.b16 %v4136, %v4134
    %v4307 = vpack.c.b16 %v4137, %v4135
    %v4308 = vpack.c.b16 %v4140, %v4138
    %v4309 = vpack.c.b16 %v4141, %v4139
    %v4310 = vpack.c.b16 %v4144, %v4142
    %v4311 = vpack.c.b16 %v4145, %v4143
    %v4312 = vpack.c.b16 %v4148, %v4146
    %v4313 = vpack.c.b16 %v4149, %v4147
    %v4314 = vpack.c.b16 %v4152, %v4150
    %v4315 = vpack.c.b16 %v4153, %v4151
    %v4316 = vpack.c.b16 %v4156, %v4154
    %v4317 = vpack.c.b16 %v4157, %v4155
    %v4318 = vpack.c.b16 %v4160, %v4158
    %v4319 = vpack.c.b16 %v4161, %v4159
    %v4320 = vpack.c.b16 %v4164, %v4162
    %v4321 = vpack.c.b16 %v4165, %v4163
    %v4322 = vpack.c.b16 %v4168, %v4166
    %v4323 = vpack.c.b16 %v4169, %v4167
    %v4324 = vpack.c.b16 %v4172, %v4170
    %v4325 = vpack.c.b16 %v4173, %v4171
    %v4326 = vpack.c.b16 %v4176, %v4174
    %v4327 = vpack.c.b16 %v4177, %v4175
    %v4328 = vpack.c.b16 %v4180, %v4178
    %v4329 = vpack.c.b16 %v4181, %v4179
    %v4330 = vpack.c.b16 %v4184, %v4182
    %v4331 = vpack.c.b16 %v4185, %v4183
    %v4332 = vpack.c.b16 %v4188, %v4186
    %v4333 = vpack.c.b16 %v4189, %v4187
    %v4334 = vpack.c.b16 %v4192, %v4190
    %v4335 = vpack.c.b16 %v4193, %v4191
    %v4336 = vpack.c.b16 %v4196, %v4194
    %v4337 = vpack.c.b16 %v4197, %v4195
    %v4338 = vpack.c.b16 %v4200, %v4198
    %v4339 = vpack.c.b16 %v4201, %v4199
    %v4340 = vpack.c.b16 %v4204, %v4202
    %v4341 = vpack.c.b16 %v4205, %v4203
    %v4342 = vpack.c.b16 %v4208, %v4206
    %v4343 = vpack.c.b16 %v4209, %v4207
    %v4344 = vpack.c.b16 %v4212, %v4210
    %v4345 = vpack.c.b16 %v4213, %v4211
    %v4346 = vpack.c.b16 %v4216, %v4214
    %v4347 = vpack.c.b16 %v4217, %v4215
    %v4348 = vpack.c.b16 %v4220, %v4218
    %v4349 = vpack.c.b16 %v4221, %v4219
    %v4350 = vpack.c.b16 %v4224, %v4222
    %v4351 = vpack.c.b16 %v4225, %v4223
    %v4352 = vpack.c.b16 %v4228, %v4226
    %v4353 = vpack.c.b16 %v4229, %v4227
    %v4354 = vpack.c.b16 %v4232, %v4230
    %v4355 = vpack.c.b16 %v4233, %v4231
    %v4356 = vpack.c.b16 %v4236, %v4234
    %v4357 = vpack.c.b16 %v4237, %v4235
    %v4358 = vpack.c.b16 %v4240, %v4238
    %v4359 = vpack.c.b16 %v4241, %v4239
    %v4360 = vpack.c.b16 %v4244, %v4242
    %v4361 = vpack.c.b16 %v4245, %v4243
    %v4362 = vpack.c.b16 %v4248, %v4246
    %v4363 = vpack.c.b16 %v4249, %v4247
    %v4364 = vpack.c.b16 %v4252, %v4250
    %v4365 = vpack.c.b16 %v4253, %v4251
    %v4366 = vpack.c.b16 %v4256, %v4254
    %v4367 = vpack.c.b16 %v4257, %v4255
    %v4368 = vpack.c.b16 %v4260, %v4258
    %v4369 = vpack.c.b16 %v4261, %v4259
    %v4370 = vpack.c.b16 %v4264, %v4262
    %v4371 = vpack.c.b16 %v4265, %v4263
    %v4372 = vpack.c.b16 %v4268, %v4266
    %v4373 = vpack.c.b16 %v4269, %v4267
    %v4374 = vpack.c.b16 %v4272, %v4270
    %v4375 = vpack.c.b16 %v4273, %v4271
    %v4376 = vpack.c.b16 %v4276, %v4274
    %v4377 = vpack.c.b16 %v4277, %v4275
    %v4378 = vpack.c.b16 %v4280, %v4278
    %v4379 = vpack.c.b16 %v4281, %v4279
    %4478 = vmatprep.subr.bf16.mxu0 %v4283
    %4479 = vmatpush1.bf16.msra.mxu0 %v4282
    %4480 = vmatprep.subr.bf16.mxu0 %v4285
    %4481 = vmatpush1.bf16.msra.mxu0 %v4284
    %4482 = vmatprep.subr.bf16.mxu0 %v4287
    %4483 = vmatpush1.bf16.msra.mxu0 %v4286
    %4484 = vmatprep.subr.bf16.mxu0 %v4289
    %4485 = vmatpush1.bf16.msra.mxu0 %v4288
    %4486 = vmatprep.subr.bf16.mxu0 %v4291
    %4487 = vmatpush1.bf16.msra.mxu0 %v4290
    %4488 = vmatprep.subr.bf16.mxu0 %v4293
    %4489 = vmatpush1.bf16.msra.mxu0 %v4292
    %4490 = vmatprep.subr.bf16.mxu0 %v4295
    %4491 = vmatpush1.bf16.msra.mxu0 %v4294
    %4492 = vmatprep.subr.bf16.mxu0 %v4297
    %4493 = vmatpush1.bf16.msra.mxu0 %v4296
    %4494 = vmatprep.subr.bf16.mxu0 %v4299
    %4495 = vmatpush1.bf16.msra.mxu0 %v4298
    %4496 = vmatprep.subr.bf16.mxu0 %v4301
    %4497 = vmatpush1.bf16.msra.mxu0 %v4300
    %4498 = vmatprep.subr.bf16.mxu0 %v4303
    %4499 = vmatpush1.bf16.msra.mxu0 %v4302
    %4500 = vmatprep.subr.bf16.mxu0 %v4305
    %4501 = vmatpush1.bf16.msra.mxu0 %v4304
    %4502 = vmatprep.subr.bf16.mxu0 %v4307
    %4503 = vmatpush1.bf16.msra.mxu0 %v4306
    %4504 = vmatprep.subr.bf16.mxu0 %v4309
    %4505 = vmatpush1.bf16.msra.mxu0 %v4308
    %4506 = vmatprep.subr.bf16.mxu0 %v4311
    %4507 = vmatpush1.bf16.msra.mxu0 %v4310
    %4508 = vmatprep.subr.bf16.mxu0 %v4313
    %4509 = vmatpush1.bf16.msra.mxu0 %v4312
    %4510 = vmatprep.mubr.bf16.mxu0 %v151
    %4511 = vmatmul.mubr.bf16.gmra.mrb[0].mxu0 %v150
    %v4512 = vpop.f32.mrb[0].mxu0
    %v4513 = vadd.f32 0.0, %v4512
    %v4514 = vpop.f32.mrb[0].mxu0
    %v4515 = vadd.f32 0.0, %v4514
    %v4516 = vpop.f32.mrb[0].mxu0
    %v4517 = vadd.f32 0.0, %v4516
    %v4518 = vpop.f32.mrb[0].mxu0
    %v4519 = vadd.f32 0.0, %v4518
    %4520 = vdwg.mxu0
    %4521 = vmatprep.subr.bf16.mxu0 %v4315
    %4522 = vmatpush1.bf16.msra.mxu0 %v4314
    %4523 = vmatprep.subr.bf16.mxu0 %v4317
    %4524 = vmatpush1.bf16.msra.mxu0 %v4316
    %4525 = vmatprep.subr.bf16.mxu0 %v4319
    %4526 = vmatpush1.bf16.msra.mxu0 %v4318
    %4527 = vmatprep.subr.bf16.mxu0 %v4321
    %4528 = vmatpush1.bf16.msra.mxu0 %v4320
    %4529 = vmatprep.subr.bf16.mxu0 %v4323
    %4530 = vmatpush1.bf16.msra.mxu0 %v4322
    %4531 = vmatprep.subr.bf16.mxu0 %v4325
    %4532 = vmatpush1.bf16.msra.mxu0 %v4324
    %4533 = vmatprep.subr.bf16.mxu0 %v4327
    %4534 = vmatpush1.bf16.msra.mxu0 %v4326
    %4535 = vmatprep.subr.bf16.mxu0 %v4329
    %4536 = vmatpush1.bf16.msra.mxu0 %v4328
    %4537 = vmatprep.subr.bf16.mxu0 %v4331
    %4538 = vmatpush1.bf16.msra.mxu0 %v4330
    %4539 = vmatprep.subr.bf16.mxu0 %v4333
    %4540 = vmatpush1.bf16.msra.mxu0 %v4332
    %4541 = vmatprep.subr.bf16.mxu0 %v4335
    %4542 = vmatpush1.bf16.msra.mxu0 %v4334
    %4543 = vmatprep.subr.bf16.mxu0 %v4337
    %4544 = vmatpush1.bf16.msra.mxu0 %v4336
    %4545 = vmatprep.subr.bf16.mxu0 %v4339
    %4546 = vmatpush1.bf16.msra.mxu0 %v4338
    %4547 = vmatprep.subr.bf16.mxu0 %v4341
    %4548 = vmatpush1.bf16.msra.mxu0 %v4340
    %4549 = vmatprep.subr.bf16.mxu0 %v4343
    %4550 = vmatpush1.bf16.msra.mxu0 %v4342
    %4551 = vmatprep.subr.bf16.mxu0 %v4345
    %4552 = vmatpush1.bf16.msra.mxu0 %v4344
    %4553 = vmatprep.mubr.bf16.mxu0 %v153
    %4554 = vmatmul.mubr.bf16.gmra.mrb[0].mxu0 %v152
    %v4555 = vpop.f32.mrb[0].mxu0
    %v4556 = vadd.f32 %v4513, %v4555
    %v4557 = vpop.f32.mrb[0].mxu0
    %v4558 = vadd.f32 %v4515, %v4557
    %v4559 = vpop.f32.mrb[0].mxu0
    %v4560 = vadd.f32 %v4517, %v4559
    %v4561 = vpop.f32.mrb[0].mxu0
    %v4562 = vadd.f32 %v4519, %v4561
    %4563 = vdwg.mxu0
    %4564 = vmatprep.subr.bf16.mxu0 %v4347
    %4565 = vmatpush1.bf16.msra.mxu0 %v4346
    %4566 = vmatprep.subr.bf16.mxu0 %v4349
    %4567 = vmatpush1.bf16.msra.mxu0 %v4348
    %4568 = vmatprep.subr.bf16.mxu0 %v4351
    %4569 = vmatpush1.bf16.msra.mxu0 %v4350
    %4570 = vmatprep.subr.bf16.mxu0 %v4353
    %4571 = vmatpush1.bf16.msra.mxu0 %v4352
    %4572 = vmatprep.subr.bf16.mxu0 %v4355
    %4573 = vmatpush1.bf16.msra.mxu0 %v4354
    %4574 = vmatprep.subr.bf16.mxu0 %v4357
    %4575 = vmatpush1.bf16.msra.mxu0 %v4356
    %4576 = vmatprep.subr.bf16.mxu0 %v4359
    %4577 = vmatpush1.bf16.msra.mxu0 %v4358
    %4578 = vmatprep.subr.bf16.mxu0 %v4361
    %4579 = vmatpush1.bf16.msra.mxu0 %v4360
    %4580 = vmatprep.subr.bf16.mxu0 %v4363
    %4581 = vmatpush1.bf16.msra.mxu0 %v4362
    %4582 = vmatprep.subr.bf16.mxu0 %v4365
    %4583 = vmatpush1.bf16.msra.mxu0 %v4364
    %4584 = vmatprep.subr.bf16.mxu0 %v4367
    %4585 = vmatpush1.bf16.msra.mxu0 %v4366
    %4586 = vmatprep.subr.bf16.mxu0 %v4369
    %4587 = vmatpush1.bf16.msra.mxu0 %v4368
    %4588 = vmatprep.subr.bf16.mxu0 %v4371
    %4589 = vmatpush1.bf16.msra.mxu0 %v4370
    %4590 = vmatprep.subr.bf16.mxu0 %v4373
    %4591 = vmatpush1.bf16.msra.mxu0 %v4372
    %4592 = vmatprep.subr.bf16.mxu0 %v4375
    %4593 = vmatpush1.bf16.msra.mxu0 %v4374
    %4594 = vmatprep.subr.bf16.mxu0 %v4377
    %4595 = vmatpush1.bf16.msra.mxu0 %v4376
    %4596 = vmatprep.mubr.bf16.mxu0 %v155
    %4597 = vmatmul.mubr.bf16.gmra.mrb[0].mxu0 %v154
    %v4598 = vpop.f32.mrb[0].mxu0
    %v4599 = vadd.f32 %v4556, %v4598
    %v4600 = vpop.f32.mrb[0].mxu0
    %v4601 = vadd.f32 %v4558, %v4600
    %v4602 = vpop.f32.mrb[0].mxu0
    %v4603 = vadd.f32 %v4560, %v4602
    %v4604 = vpop.f32.mrb[0].mxu0
    %v4605 = vadd.f32 %v4562, %v4604
    %4606 = vdwg.mxu0
    %4607 = vmatprep.subr.bf16.mxu0 %v4379
    %4608 = vmatpush1.bf16.msra.mxu0 %v4378
    %4609 = vmatprep.subr.bf16.mxu0 0
    %4610 = vmatpush1.bf16.msra.mxu0 0
    %4611 = vmatprep.subr.bf16.mxu0 0
    %4612 = vmatpush1.bf16.msra.mxu0 0
    %4613 = vmatprep.subr.bf16.mxu0 0
    %4614 = vmatpush1.bf16.msra.mxu0 0
    %4615 = vmatprep.subr.bf16.mxu0 0
    %4616 = vmatpush1.bf16.msra.mxu0 0
    %4617 = vmatprep.subr.bf16.mxu0 0
    %4618 = vmatpush1.bf16.msra.mxu0 0
    %4619 = vmatprep.subr.bf16.mxu0 0
    %4620 = vmatpush1.bf16.msra.mxu0 0
    %4621 = vmatprep.subr.bf16.mxu0 0
    %4622 = vmatpush1.bf16.msra.mxu0 0
    %4623 = vmatprep.subr.bf16.mxu0 0
    %4624 = vmatpush1.bf16.msra.mxu0 0
    %4625 = vmatprep.subr.bf16.mxu0 0
    %4626 = vmatpush1.bf16.msra.mxu0 0
    %4627 = vmatprep.subr.bf16.mxu0 0
    %4628 = vmatpush1.bf16.msra.mxu0 0
    %4629 = vmatprep.subr.bf16.mxu0 0
    %4630 = vmatpush1.bf16.msra.mxu0 0
    %4631 = vmatprep.subr.bf16.mxu0 0
    %4632 = vmatpush1.bf16.msra.mxu0 0
    %4633 = vmatprep.subr.bf16.mxu0 0
    %4634 = vmatpush1.bf16.msra.mxu0 0
    %4635 = vmatprep.subr.bf16.mxu0 0
    %4636 = vmatpush1.bf16.msra.mxu0 0
    %4637 = vmatprep.subr.bf16.mxu0 0
    %4638 = vmatpush1.bf16.msra.mxu0 0
    %4639 = vmatprep.mubr.bf16.mxu0 0
    %4640 = vmatmul.mubr.bf16.gmra.mrb[0].mxu0 %v655
    %v4641 = vpop.f32.mrb[0].mxu0
    %v4642 = vadd.f32 %v4599, %v4641
    %v4643 = vpop.f32.mrb[0].mxu0
    %v4644 = vadd.f32 %v4601, %v4643
    %v4645 = vpop.f32.mrb[0].mxu0
    %v4646 = vadd.f32 %v4603, %v4645
    %v4647 = vpop.f32.mrb[0].mxu0
    %v4648 = vadd.f32 %v4605, %v4647
    %4649 = vdwg.mxu0
    %v4650 = vmax.f32 %v3885, %v4642
    %v4651 = vmax.f32 %v3886, %v4644
    %v4652 = vmax.f32 %v3887, %v4646
    %v4653 = vmax.f32 %v3888, %v4648
    %s4654 = scalar_lea.vmem %s1, 4704
    %v4655 = vld [vmem:[%s4654] sm:$0xff]
    %v4656 = vld [vmem:[%s4654 + $0x8] sm:$0xff]
    %v4657 = vld [vmem:[%s4654 + $0x10] sm:$0xff]
    %v4658 = vld [vmem:[%s4654 + $0x18] sm:$0xff]
    %v4659 = vld [vmem:[%s4654 + $0x20] sm:$0xff]
    %v4660 = vld [vmem:[%s4654 + $0x28] sm:$0xff]
    %v4661 = vld [vmem:[%s4654 + $0x30] sm:$0xff]
    %v4662 = vld [vmem:[%s4654 + $0x38] sm:$0xff]
    %v4663 = vld [vmem:[%s4654 + $0x40] sm:$0xff]
    %v4664 = vld [vmem:[%s4654 + $0x48] sm:$0xff]
    %v4665 = vld [vmem:[%s4654 + $0x50] sm:$0xff]
    %v4666 = vld [vmem:[%s4654 + $0x58] sm:$0xff]
    %v4667 = vld [vmem:[%s4654 + $0x60] sm:$0xff]
    %v4668 = vld [vmem:[%s4654 + $0x68] sm:$0xff]
    %v4669 = vld [vmem:[%s4654 + $0x70] sm:$0xff]
    %v4670 = vld [vmem:[%s4654 + $0x78] sm:$0xff]
    %v4671 = vld [vmem:[%s4654 + $0x80] sm:$0xff]
    %v4672 = vld [vmem:[%s4654 + $0x88] sm:$0xff]
    %v4673 = vld [vmem:[%s4654 + $0x90] sm:$0xff]
    %v4674 = vld [vmem:[%s4654 + $0x98] sm:$0xff]
    %v4675 = vld [vmem:[%s4654 + $0xa0] sm:$0xff]
    %v4676 = vld [vmem:[%s4654 + $0xa8] sm:$0xff]
    %v4677 = vld [vmem:[%s4654 + $0xb0] sm:$0xff]
    %v4678 = vld [vmem:[%s4654 + $0xb8] sm:$0xff]
    %v4679 = vld [vmem:[%s4654 + $0xc0] sm:$0xff]
    %v4680 = vld [vmem:[%s4654 + $0xc8] sm:$0xff]
    %v4681 = vld [vmem:[%s4654 + $0xd0] sm:$0xff]
    %v4682 = vld [vmem:[%s4654 + $0xd8] sm:$0xff]
    %v4683 = vld [vmem:[%s4654 + $0xe0] sm:$0xff]
    %v4684 = vld [vmem:[%s4654 + $0xe8] sm:$0xff]
    %v4685 = vld [vmem:[%s4654 + $0xf0] sm:$0xff]
    %v4686 = vld [vmem:[%s4654 + $0xf8] sm:$0xff]
    %v4687 = vld [vmem:[%s4654 + $0x100] sm:$0xff]
    %v4688 = vld [vmem:[%s4654 + $0x108] sm:$0xff]
    %v4689 = vld [vmem:[%s4654 + $0x110] sm:$0xff]
    %v4690 = vld [vmem:[%s4654 + $0x118] sm:$0xff]
    %v4691 = vld [vmem:[%s4654 + $0x120] sm:$0xff]
    %v4692 = vld [vmem:[%s4654 + $0x128] sm:$0xff]
    %v4693 = vld [vmem:[%s4654 + $0x130] sm:$0xff]
    %v4694 = vld [vmem:[%s4654 + $0x138] sm:$0xff]
    %v4695 = vld [vmem:[%s4654 + $0x140] sm:$0xff]
    %v4696 = vld [vmem:[%s4654 + $0x148] sm:$0xff]
    %v4697 = vld [vmem:[%s4654 + $0x150] sm:$0xff]
    %v4698 = vld [vmem:[%s4654 + $0x158] sm:$0xff]
    %v4699 = vld [vmem:[%s4654 + $0x160] sm:$0xff]
    %v4700 = vld [vmem:[%s4654 + $0x168] sm:$0xff]
    %v4701 = vld [vmem:[%s4654 + $0x170] sm:$0xff]
    %v4702 = vld [vmem:[%s4654 + $0x178] sm:$0xff]
    %v4703 = vld [vmem:[%s4654 + $0x180] sm:$0xff]
    %v4704 = vld [vmem:[%s4654 + $0x188] sm:$0xff]
    %v4705 = vld [vmem:[%s4654 + $0x190] sm:$0xff]
    %v4706 = vld [vmem:[%s4654 + $0x198] sm:$0xff]
    %v4707 = vld [vmem:[%s4654 + $0x1a0] sm:$0xff]
    %v4708 = vld [vmem:[%s4654 + $0x1a8] sm:$0xff]
    %v4709 = vld [vmem:[%s4654 + $0x1b0] sm:$0xff]
    %v4710 = vld [vmem:[%s4654 + $0x1b8] sm:$0xff]
    %v4711 = vld [vmem:[%s4654 + $0x1c0] sm:$0xff]
    %v4712 = vld [vmem:[%s4654 + $0x1c8] sm:$0xff]
    %v4713 = vld [vmem:[%s4654 + $0x1d0] sm:$0xff]
    %v4714 = vld [vmem:[%s4654 + $0x1d8] sm:$0xff]
    %v4715 = vld [vmem:[%s4654 + $0x1e0] sm:$0xff]
    %v4716 = vld [vmem:[%s4654 + $0x1e8] sm:$0xff]
    %v4717 = vld [vmem:[%s4654 + $0x1f0] sm:$0xff]
    %v4718 = vld [vmem:[%s4654 + $0x1f8] sm:$0xff]
    %v4719 = vld [vmem:[%s4654 + $0x200] sm:$0xff]
    %v4720 = vld [vmem:[%s4654 + $0x208] sm:$0xff]
    %v4721 = vld [vmem:[%s4654 + $0x210] sm:$0xff]
    %v4722 = vld [vmem:[%s4654 + $0x218] sm:$0xff]
    %v4723 = vld [vmem:[%s4654 + $0x220] sm:$0xff]
    %v4724 = vld [vmem:[%s4654 + $0x228] sm:$0xff]
    %v4725 = vld [vmem:[%s4654 + $0x230] sm:$0xff]
    %v4726 = vld [vmem:[%s4654 + $0x238] sm:$0xff]
    %v4727 = vld [vmem:[%s4654 + $0x240] sm:$0xff]
    %v4728 = vld [vmem:[%s4654 + $0x248] sm:$0xff]
    %v4729 = vld [vmem:[%s4654 + $0x250] sm:$0xff]
    %v4730 = vld [vmem:[%s4654 + $0x258] sm:$0xff]
    %v4731 = vld [vmem:[%s4654 + $0x260] sm:$0xff]
    %v4732 = vld [vmem:[%s4654 + $0x268] sm:$0xff]
    %v4733 = vld [vmem:[%s4654 + $0x270] sm:$0xff]
    %v4734 = vld [vmem:[%s4654 + $0x278] sm:$0xff]
    %v4735 = vld [vmem:[%s4654 + $0x280] sm:$0xff]
    %v4736 = vld [vmem:[%s4654 + $0x288] sm:$0xff]
    %v4737 = vld [vmem:[%s4654 + $0x290] sm:$0xff]
    %v4738 = vld [vmem:[%s4654 + $0x298] sm:$0xff]
    %v4739 = vld [vmem:[%s4654 + $0x2a0] sm:$0xff]
    %v4740 = vld [vmem:[%s4654 + $0x2a8] sm:$0xff]
    %v4741 = vld [vmem:[%s4654 + $0x2b0] sm:$0xff]
    %v4742 = vld [vmem:[%s4654 + $0x2b8] sm:$0xff]
    %v4743 = vld [vmem:[%s4654 + $0x2c0] sm:$0xff]
    %v4744 = vld [vmem:[%s4654 + $0x2c8] sm:$0xff]
    %v4745 = vld [vmem:[%s4654 + $0x2d0] sm:$0xff]
    %v4746 = vld [vmem:[%s4654 + $0x2d8] sm:$0xff]
    %v4747 = vld [vmem:[%s4654 + $0x2e0] sm:$0xff]
    %v4748 = vld [vmem:[%s4654 + $0x2e8] sm:$0xff]
    %v4749 = vld [vmem:[%s4654 + $0x2f0] sm:$0xff]
    %v4750 = vld [vmem:[%s4654 + $0x2f8] sm:$0xff]
    %v4751 = vld [vmem:[%s4654 + $0x300] sm:$0xff]
    %v4752 = vld [vmem:[%s4654 + $0x308] sm:$0xff]
    %v4851 = vunpack.c.l.b16 %v4655
    %v4852 = vunpack.c.h.b16 %v4655
    %v4853 = vunpack.c.l.b16 %v4656
    %v4854 = vunpack.c.h.b16 %v4656
    %v4855 = vunpack.c.l.b16 %v4657
    %v4856 = vunpack.c.h.b16 %v4657
    %v4857 = vunpack.c.l.b16 %v4658
    %v4858 = vunpack.c.h.b16 %v4658
    %v4859 = vunpack.c.l.b16 %v4659
    %v4860 = vunpack.c.h.b16 %v4659
    %v4861 = vunpack.c.l.b16 %v4660
    %v4862 = vunpack.c.h.b16 %v4660
    %v4863 = vunpack.c.l.b16 %v4661
    %v4864 = vunpack.c.h.b16 %v4661
    %v4865 = vunpack.c.l.b16 %v4662
    %v4866 = vunpack.c.h.b16 %v4662
    %v4867 = vunpack.c.l.b16 %v4663
    %v4868 = vunpack.c.h.b16 %v4663
    %v4869 = vunpack.c.l.b16 %v4664
    %v4870 = vunpack.c.h.b16 %v4664
    %v4871 = vunpack.c.l.b16 %v4665
    %v4872 = vunpack.c.h.b16 %v4665
    %v4873 = vunpack.c.l.b16 %v4666
    %v4874 = vunpack.c.h.b16 %v4666
    %v4875 = vunpack.c.l.b16 %v4667
    %v4876 = vunpack.c.h.b16 %v4667
    %v4877 = vunpack.c.l.b16 %v4668
    %v4878 = vunpack.c.h.b16 %v4668
    %v4879 = vunpack.c.l.b16 %v4669
    %v4880 = vunpack.c.h.b16 %v4669
    %v4881 = vunpack.c.l.b16 %v4670
    %v4882 = vunpack.c.h.b16 %v4670
    %v4883 = vunpack.c.l.b16 %v4671
    %v4884 = vunpack.c.h.b16 %v4671
    %v4885 = vunpack.c.l.b16 %v4672
    %v4886 = vunpack.c.h.b16 %v4672
    %v4887 = vunpack.c.l.b16 %v4673
    %v4888 = vunpack.c.h.b16 %v4673
    %v4889 = vunpack.c.l.b16 %v4674
    %v4890 = vunpack.c.h.b16 %v4674
    %v4891 = vunpack.c.l.b16 %v4675
    %v4892 = vunpack.c.h.b16 %v4675
    %v4893 = vunpack.c.l.b16 %v4676
    %v4894 = vunpack.c.h.b16 %v4676
    %v4895 = vunpack.c.l.b16 %v4677
    %v4896 = vunpack.c.h.b16 %v4677
    %v4897 = vunpack.c.l.b16 %v4678
    %v4898 = vunpack.c.h.b16 %v4678
    %v4899 = vunpack.c.l.b16 %v4679
    %v4900 = vunpack.c.h.b16 %v4679
    %v4901 = vunpack.c.l.b16 %v4680
    %v4902 = vunpack.c.h.b16 %v4680
    %v4903 = vunpack.c.l.b16 %v4681
    %v4904 = vunpack.c.h.b16 %v4681
    %v4905 = vunpack.c.l.b16 %v4682
    %v4906 = vunpack.c.h.b16 %v4682
    %v4907 = vunpack.c.l.b16 %v4683
    %v4908 = vunpack.c.h.b16 %v4683
    %v4909 = vunpack.c.l.b16 %v4684
    %v4910 = vunpack.c.h.b16 %v4684
    %v4911 = vunpack.c.l.b16 %v4685
    %v4912 = vunpack.c.h.b16 %v4685
    %v4913 = vunpack.c.l.b16 %v4686
    %v4914 = vunpack.c.h.b16 %v4686
    %v4915 = vunpack.c.l.b16 %v4687
    %v4916 = vunpack.c.h.b16 %v4687
    %v4917 = vunpack.c.l.b16 %v4688
    %v4918 = vunpack.c.h.b16 %v4688
    %v4919 = vunpack.c.l.b16 %v4689
    %v4920 = vunpack.c.h.b16 %v4689
    %v4921 = vunpack.c.l.b16 %v4690
    %v4922 = vunpack.c.h.b16 %v4690
    %v4923 = vunpack.c.l.b16 %v4691
    %v4924 = vunpack.c.h.b16 %v4691
    %v4925 = vunpack.c.l.b16 %v4692
    %v4926 = vunpack.c.h.b16 %v4692
    %v4927 = vunpack.c.l.b16 %v4693
    %v4928 = vunpack.c.h.b16 %v4693
    %v4929 = vunpack.c.l.b16 %v4694
    %v4930 = vunpack.c.h.b16 %v4694
    %v4931 = vunpack.c.l.b16 %v4695
    %v4932 = vunpack.c.h.b16 %v4695
    %v4933 = vunpack.c.l.b16 %v4696
    %v4934 = vunpack.c.h.b16 %v4696
    %v4935 = vunpack.c.l.b16 %v4697
    %v4936 = vunpack.c.h.b16 %v4697
    %v4937 = vunpack.c.l.b16 %v4698
    %v4938 = vunpack.c.h.b16 %v4698
    %v4939 = vunpack.c.l.b16 %v4699
    %v4940 = vunpack.c.h.b16 %v4699
    %v4941 = vunpack.c.l.b16 %v4700
    %v4942 = vunpack.c.h.b16 %v4700
    %v4943 = vunpack.c.l.b16 %v4701
    %v4944 = vunpack.c.h.b16 %v4701
    %v4945 = vunpack.c.l.b16 %v4702
    %v4946 = vunpack.c.h.b16 %v4702
    %v4947 = vunpack.c.l.b16 %v4703
    %v4948 = vunpack.c.h.b16 %v4703
    %v4949 = vunpack.c.l.b16 %v4704
    %v4950 = vunpack.c.h.b16 %v4704
    %v4951 = vunpack.c.l.b16 %v4705
    %v4952 = vunpack.c.h.b16 %v4705
    %v4953 = vunpack.c.l.b16 %v4706
    %v4954 = vunpack.c.h.b16 %v4706
    %v4955 = vunpack.c.l.b16 %v4707
    %v4956 = vunpack.c.h.b16 %v4707
    %v4957 = vunpack.c.l.b16 %v4708
    %v4958 = vunpack.c.h.b16 %v4708
    %v4959 = vunpack.c.l.b16 %v4709
    %v4960 = vunpack.c.h.b16 %v4709
    %v4961 = vunpack.c.l.b16 %v4710
    %v4962 = vunpack.c.h.b16 %v4710
    %v4963 = vunpack.c.l.b16 %v4711
    %v4964 = vunpack.c.h.b16 %v4711
    %v4965 = vunpack.c.l.b16 %v4712
    %v4966 = vunpack.c.h.b16 %v4712
    %v4967 = vunpack.c.l.b16 %v4713
    %v4968 = vunpack.c.h.b16 %v4713
    %v4969 = vunpack.c.l.b16 %v4714
    %v4970 = vunpack.c.h.b16 %v4714
    %v4971 = vunpack.c.l.b16 %v4715
    %v4972 = vunpack.c.h.b16 %v4715
    %v4973 = vunpack.c.l.b16 %v4716
    %v4974 = vunpack.c.h.b16 %v4716
    %v4975 = vunpack.c.l.b16 %v4717
    %v4976 = vunpack.c.h.b16 %v4717
    %v4977 = vunpack.c.l.b16 %v4718
    %v4978 = vunpack.c.h.b16 %v4718
    %v4979 = vunpack.c.l.b16 %v4719
    %v4980 = vunpack.c.h.b16 %v4719
    %v4981 = vunpack.c.l.b16 %v4720
    %v4982 = vunpack.c.h.b16 %v4720
    %v4983 = vunpack.c.l.b16 %v4721
    %v4984 = vunpack.c.h.b16 %v4721
    %v4985 = vunpack.c.l.b16 %v4722
    %v4986 = vunpack.c.h.b16 %v4722
    %v4987 = vunpack.c.l.b16 %v4723
    %v4988 = vunpack.c.h.b16 %v4723
    %v4989 = vunpack.c.l.b16 %v4724
    %v4990 = vunpack.c.h.b16 %v4724
    %v4991 = vunpack.c.l.b16 %v4725
    %v4992 = vunpack.c.h.b16 %v4725
    %v4993 = vunpack.c.l.b16 %v4726
    %v4994 = vunpack.c.h.b16 %v4726
    %v4995 = vunpack.c.l.b16 %v4727
    %v4996 = vunpack.c.h.b16 %v4727
    %v4997 = vunpack.c.l.b16 %v4728
    %v4998 = vunpack.c.h.b16 %v4728
    %v4999 = vunpack.c.l.b16 %v4729
    %v5000 = vunpack.c.h.b16 %v4729
    %v5001 = vunpack.c.l.b16 %v4730
    %v5002 = vunpack.c.h.b16 %v4730
    %v5003 = vunpack.c.l.b16 %v4731
    %v5004 = vunpack.c.h.b16 %v4731
    %v5005 = vunpack.c.l.b16 %v4732
    %v5006 = vunpack.c.h.b16 %v4732
    %v5007 = vunpack.c.l.b16 %v4733
    %v5008 = vunpack.c.h.b16 %v4733
    %v5009 = vunpack.c.l.b16 %v4734
    %v5010 = vunpack.c.h.b16 %v4734
    %v5011 = vunpack.c.l.b16 %v4735
    %v5012 = vunpack.c.h.b16 %v4735
    %v5013 = vunpack.c.l.b16 %v4736
    %v5014 = vunpack.c.h.b16 %v4736
    %v5015 = vunpack.c.l.b16 %v4737
    %v5016 = vunpack.c.h.b16 %v4737
    %v5017 = vunpack.c.l.b16 %v4738
    %v5018 = vunpack.c.h.b16 %v4738
    %v5019 = vunpack.c.l.b16 %v4739
    %v5020 = vunpack.c.h.b16 %v4739
    %v5021 = vunpack.c.l.b16 %v4740
    %v5022 = vunpack.c.h.b16 %v4740
    %v5023 = vunpack.c.l.b16 %v4741
    %v5024 = vunpack.c.h.b16 %v4741
    %v5025 = vunpack.c.l.b16 %v4742
    %v5026 = vunpack.c.h.b16 %v4742
    %v5027 = vunpack.c.l.b16 %v4743
    %v5028 = vunpack.c.h.b16 %v4743
    %v5029 = vunpack.c.l.b16 %v4744
    %v5030 = vunpack.c.h.b16 %v4744
    %v5031 = vunpack.c.l.b16 %v4745
    %v5032 = vunpack.c.h.b16 %v4745
    %v5033 = vunpack.c.l.b16 %v4746
    %v5034 = vunpack.c.h.b16 %v4746
    %v5035 = vunpack.c.l.b16 %v4747
    %v5036 = vunpack.c.h.b16 %v4747
    %v5037 = vunpack.c.l.b16 %v4748
    %v5038 = vunpack.c.h.b16 %v4748
    %v5039 = vunpack.c.l.b16 %v4749
    %v5040 = vunpack.c.h.b16 %v4749
    %v5041 = vunpack.c.l.b16 %v4750
    %v5042 = vunpack.c.h.b16 %v4750
    %v5043 = vunpack.c.l.b16 %v4751
    %v5044 = vunpack.c.h.b16 %v4751
    %v5045 = vunpack.c.l.b16 %v4752
    %v5046 = vunpack.c.h.b16 %v4752
    %v5047 = vpack.c.b16 %v4853, %v4851
    %v5048 = vpack.c.b16 %v4854, %v4852
    %v5049 = vpack.c.b16 %v4857, %v4855
    %v5050 = vpack.c.b16 %v4858, %v4856
    %v5051 = vpack.c.b16 %v4861, %v4859
    %v5052 = vpack.c.b16 %v4862, %v4860
    %v5053 = vpack.c.b16 %v4865, %v4863
    %v5054 = vpack.c.b16 %v4866, %v4864
    %v5055 = vpack.c.b16 %v4869, %v4867
    %v5056 = vpack.c.b16 %v4870, %v4868
    %v5057 = vpack.c.b16 %v4873, %v4871
    %v5058 = vpack.c.b16 %v4874, %v4872
    %v5059 = vpack.c.b16 %v4877, %v4875
    %v5060 = vpack.c.b16 %v4878, %v4876
    %v5061 = vpack.c.b16 %v4881, %v4879
    %v5062 = vpack.c.b16 %v4882, %v4880
    %v5063 = vpack.c.b16 %v4885, %v4883
    %v5064 = vpack.c.b16 %v4886, %v4884
    %v5065 = vpack.c.b16 %v4889, %v4887
    %v5066 = vpack.c.b16 %v4890, %v4888
    %v5067 = vpack.c.b16 %v4893, %v4891
    %v5068 = vpack.c.b16 %v4894, %v4892
    %v5069 = vpack.c.b16 %v4897, %v4895
    %v5070 = vpack.c.b16 %v4898, %v4896
    %v5071 = vpack.c.b16 %v4901, %v4899
    %v5072 = vpack.c.b16 %v4902, %v4900
    %v5073 = vpack.c.b16 %v4905, %v4903
    %v5074 = vpack.c.b16 %v4906, %v4904
    %v5075 = vpack.c.b16 %v4909, %v4907
    %v5076 = vpack.c.b16 %v4910, %v4908
    %v5077 = vpack.c.b16 %v4913, %v4911
    %v5078 = vpack.c.b16 %v4914, %v4912
    %v5079 = vpack.c.b16 %v4917, %v4915
    %v5080 = vpack.c.b16 %v4918, %v4916
    %v5081 = vpack.c.b16 %v4921, %v4919
    %v5082 = vpack.c.b16 %v4922, %v4920
    %v5083 = vpack.c.b16 %v4925, %v4923
    %v5084 = vpack.c.b16 %v4926, %v4924
    %v5085 = vpack.c.b16 %v4929, %v4927
    %v5086 = vpack.c.b16 %v4930, %v4928
    %v5087 = vpack.c.b16 %v4933, %v4931
    %v5088 = vpack.c.b16 %v4934, %v4932
    %v5089 = vpack.c.b16 %v4937, %v4935
    %v5090 = vpack.c.b16 %v4938, %v4936
    %v5091 = vpack.c.b16 %v4941, %v4939
    %v5092 = vpack.c.b16 %v4942, %v4940
    %v5093 = vpack.c.b16 %v4945, %v4943
    %v5094 = vpack.c.b16 %v4946, %v4944
    %v5095 = vpack.c.b16 %v4949, %v4947
    %v5096 = vpack.c.b16 %v4950, %v4948
    %v5097 = vpack.c.b16 %v4953, %v4951
    %v5098 = vpack.c.b16 %v4954, %v4952
    %v5099 = vpack.c.b16 %v4957, %v4955
    %v5100 = vpack.c.b16 %v4958, %v4956
    %v5101 = vpack.c.b16 %v4961, %v4959
    %v5102 = vpack.c.b16 %v4962, %v4960
    %v5103 = vpack.c.b16 %v4965, %v4963
    %v5104 = vpack.c.b16 %v4966, %v4964
    %v5105 = vpack.c.b16 %v4969, %v4967
    %v5106 = vpack.c.b16 %v4970, %v4968
    %v5107 = vpack.c.b16 %v4973, %v4971
    %v5108 = vpack.c.b16 %v4974, %v4972
    %v5109 = vpack.c.b16 %v4977, %v4975
    %v5110 = vpack.c.b16 %v4978, %v4976
    %v5111 = vpack.c.b16 %v4981, %v4979
    %v5112 = vpack.c.b16 %v4982, %v4980
    %v5113 = vpack.c.b16 %v4985, %v4983
    %v5114 = vpack.c.b16 %v4986, %v4984
    %v5115 = vpack.c.b16 %v4989, %v4987
    %v5116 = vpack.c.b16 %v4990, %v4988
    %v5117 = vpack.c.b16 %v4993, %v4991
    %v5118 = vpack.c.b16 %v4994, %v4992
    %v5119 = vpack.c.b16 %v4997, %v4995
    %v5120 = vpack.c.b16 %v4998, %v4996
    %v5121 = vpack.c.b16 %v5001, %v4999
    %v5122 = vpack.c.b16 %v5002, %v5000
    %v5123 = vpack.c.b16 %v5005, %v5003
    %v5124 = vpack.c.b16 %v5006, %v5004
    %v5125 = vpack.c.b16 %v5009, %v5007
    %v5126 = vpack.c.b16 %v5010, %v5008
    %v5127 = vpack.c.b16 %v5013, %v5011
    %v5128 = vpack.c.b16 %v5014, %v5012
    %v5129 = vpack.c.b16 %v5017, %v5015
    %v5130 = vpack.c.b16 %v5018, %v5016
    %v5131 = vpack.c.b16 %v5021, %v5019
    %v5132 = vpack.c.b16 %v5022, %v5020
    %v5133 = vpack.c.b16 %v5025, %v5023
    %v5134 = vpack.c.b16 %v5026, %v5024
    %v5135 = vpack.c.b16 %v5029, %v5027
    %v5136 = vpack.c.b16 %v5030, %v5028
    %v5137 = vpack.c.b16 %v5033, %v5031
    %v5138 = vpack.c.b16 %v5034, %v5032
    %v5139 = vpack.c.b16 %v5037, %v5035
    %v5140 = vpack.c.b16 %v5038, %v5036
    %v5141 = vpack.c.b16 %v5041, %v5039
    %v5142 = vpack.c.b16 %v5042, %v5040
    %v5143 = vpack.c.b16 %v5045, %v5043
    %v5144 = vpack.c.b16 %v5046, %v5044
    %5243 = vmatprep.subr.bf16.mxu0 %v5048
    %5244 = vmatpush1.bf16.msra.mxu0 %v5047
    %5245 = vmatprep.subr.bf16.mxu0 %v5050
    %5246 = vmatpush1.bf16.msra.mxu0 %v5049
    %5247 = vmatprep.subr.bf16.mxu0 %v5052
    %5248 = vmatpush1.bf16.msra.mxu0 %v5051
    %5249 = vmatprep.subr.bf16.mxu0 %v5054
    %5250 = vmatpush1.bf16.msra.mxu0 %v5053
    %5251 = vmatprep.subr.bf16.mxu0 %v5056
    %5252 = vmatpush1.bf16.msra.mxu0 %v5055
    %5253 = vmatprep.subr.bf16.mxu0 %v5058
    %5254 = vmatpush1.bf16.msra.mxu0 %v5057
    %5255 = vmatprep.subr.bf16.mxu0 %v5060
    %5256 = vmatpush1.bf16.msra.mxu0 %v5059
    %5257 = vmatprep.subr.bf16.mxu0 %v5062
    %5258 = vmatpush1.bf16.msra.mxu0 %v5061
    %5259 = vmatprep.subr.bf16.mxu0 %v5064
    %5260 = vmatpush1.bf16.msra.mxu0 %v5063
    %5261 = vmatprep.subr.bf16.mxu0 %v5066
    %5262 = vmatpush1.bf16.msra.mxu0 %v5065
    %5263 = vmatprep.subr.bf16.mxu0 %v5068
    %5264 = vmatpush1.bf16.msra.mxu0 %v5067
    %5265 = vmatprep.subr.bf16.mxu0 %v5070
    %5266 = vmatpush1.bf16.msra.mxu0 %v5069
    %5267 = vmatprep.subr.bf16.mxu0 %v5072
    %5268 = vmatpush1.bf16.msra.mxu0 %v5071
    %5269 = vmatprep.subr.bf16.mxu0 %v5074
    %5270 = vmatpush1.bf16.msra.mxu0 %v5073
    %5271 = vmatprep.subr.bf16.mxu0 %v5076
    %5272 = vmatpush1.bf16.msra.mxu0 %v5075
    %5273 = vmatprep.subr.bf16.mxu0 %v5078
    %5274 = vmatpush1.bf16.msra.mxu0 %v5077
    %5275 = vmatprep.mubr.bf16.mxu0 %v151
    %5276 = vmatmul.mubr.bf16.gmra.mrb[0].mxu0 %v150
    %v5277 = vpop.f32.mrb[0].mxu0
    %v5278 = vadd.f32 0.0, %v5277
    %v5279 = vpop.f32.mrb[0].mxu0
    %v5280 = vadd.f32 0.0, %v5279
    %v5281 = vpop.f32.mrb[0].mxu0
    %v5282 = vadd.f32 0.0, %v5281
    %v5283 = vpop.f32.mrb[0].mxu0
    %v5284 = vadd.f32 0.0, %v5283
    %5285 = vdwg.mxu0
    %5286 = vmatprep.subr.bf16.mxu0 %v5080
    %5287 = vmatpush1.bf16.msra.mxu0 %v5079
    %5288 = vmatprep.subr.bf16.mxu0 %v5082
    %5289 = vmatpush1.bf16.msra.mxu0 %v5081
    %5290 = vmatprep.subr.bf16.mxu0 %v5084
    %5291 = vmatpush1.bf16.msra.mxu0 %v5083
    %5292 = vmatprep.subr.bf16.mxu0 %v5086
    %5293 = vmatpush1.bf16.msra.mxu0 %v5085
    %5294 = vmatprep.subr.bf16.mxu0 %v5088
    %5295 = vmatpush1.bf16.msra.mxu0 %v5087
    %5296 = vmatprep.subr.bf16.mxu0 %v5090
    %5297 = vmatpush1.bf16.msra.mxu0 %v5089
    %5298 = vmatprep.subr.bf16.mxu0 %v5092
    %5299 = vmatpush1.bf16.msra.mxu0 %v5091
    %5300 = vmatprep.subr.bf16.mxu0 %v5094
    %5301 = vmatpush1.bf16.msra.mxu0 %v5093
    %5302 = vmatprep.subr.bf16.mxu0 %v5096
    %5303 = vmatpush1.bf16.msra.mxu0 %v5095
    %5304 = vmatprep.subr.bf16.mxu0 %v5098
    %5305 = vmatpush1.bf16.msra.mxu0 %v5097
    %5306 = vmatprep.subr.bf16.mxu0 %v5100
    %5307 = vmatpush1.bf16.msra.mxu0 %v5099
    %5308 = vmatprep.subr.bf16.mxu0 %v5102
    %5309 = vmatpush1.bf16.msra.mxu0 %v5101
    %5310 = vmatprep.subr.bf16.mxu0 %v5104
    %5311 = vmatpush1.bf16.msra.mxu0 %v5103
    %5312 = vmatprep.subr.bf16.mxu0 %v5106
    %5313 = vmatpush1.bf16.msra.mxu0 %v5105
    %5314 = vmatprep.subr.bf16.mxu0 %v5108
    %5315 = vmatpush1.bf16.msra.mxu0 %v5107
    %5316 = vmatprep.subr.bf16.mxu0 %v5110
    %5317 = vmatpush1.bf16.msra.mxu0 %v5109
    %5318 = vmatprep.mubr.bf16.mxu0 %v153
    %5319 = vmatmul.mubr.bf16.gmra.mrb[0].mxu0 %v152
    %v5320 = vpop.f32.mrb[0].mxu0
    %v5321 = vadd.f32 %v5278, %v5320
    %v5322 = vpop.f32.mrb[0].mxu0
    %v5323 = vadd.f32 %v5280, %v5322
    %v5324 = vpop.f32.mrb[0].mxu0
    %v5325 = vadd.f32 %v5282, %v5324
    %v5326 = vpop.f32.mrb[0].mxu0
    %v5327 = vadd.f32 %v5284, %v5326
    %5328 = vdwg.mxu0
    %5329 = vmatprep.subr.bf16.mxu0 %v5112
    %5330 = vmatpush1.bf16.msra.mxu0 %v5111
    %5331 = vmatprep.subr.bf16.mxu0 %v5114
    %5332 = vmatpush1.bf16.msra.mxu0 %v5113
    %5333 = vmatprep.subr.bf16.mxu0 %v5116
    %5334 = vmatpush1.bf16.msra.mxu0 %v5115
    %5335 = vmatprep.subr.bf16.mxu0 %v5118
    %5336 = vmatpush1.bf16.msra.mxu0 %v5117
    %5337 = vmatprep.subr.bf16.mxu0 %v5120
    %5338 = vmatpush1.bf16.msra.mxu0 %v5119
    %5339 = vmatprep.subr.bf16.mxu0 %v5122
    %5340 = vmatpush1.bf16.msra.mxu0 %v5121
    %5341 = vmatprep.subr.bf16.mxu0 %v5124
    %5342 = vmatpush1.bf16.msra.mxu0 %v5123
    %5343 = vmatprep.subr.bf16.mxu0 %v5126
    %5344 = vmatpush1.bf16.msra.mxu0 %v5125
    %5345 = vmatprep.subr.bf16.mxu0 %v5128
    %5346 = vmatpush1.bf16.msra.mxu0 %v5127
    %5347 = vmatprep.subr.bf16.mxu0 %v5130
    %5348 = vmatpush1.bf16.msra.mxu0 %v5129
    %5349 = vmatprep.subr.bf16.mxu0 %v5132
    %5350 = vmatpush1.bf16.msra.mxu0 %v5131
    %5351 = vmatprep.subr.bf16.mxu0 %v5134
    %5352 = vmatpush1.bf16.msra.mxu0 %v5133
    %5353 = vmatprep.subr.bf16.mxu0 %v5136
    %5354 = vmatpush1.bf16.msra.mxu0 %v5135
    %5355 = vmatprep.subr.bf16.mxu0 %v5138
    %5356 = vmatpush1.bf16.msra.mxu0 %v5137
    %5357 = vmatprep.subr.bf16.mxu0 %v5140
    %5358 = vmatpush1.bf16.msra.mxu0 %v5139
    %5359 = vmatprep.subr.bf16.mxu0 %v5142
    %5360 = vmatpush1.bf16.msra.mxu0 %v5141
    %5361 = vmatprep.mubr.bf16.mxu0 %v155
    %5362 = vmatmul.mubr.bf16.gmra.mrb[0].mxu0 %v154
    %v5363 = vpop.f32.mrb[0].mxu0
    %v5364 = vadd.f32 %v5321, %v5363
    %v5365 = vpop.f32.mrb[0].mxu0
    %v5366 = vadd.f32 %v5323, %v5365
    %v5367 = vpop.f32.mrb[0].mxu0
    %v5368 = vadd.f32 %v5325, %v5367
    %v5369 = vpop.f32.mrb[0].mxu0
    %v5370 = vadd.f32 %v5327, %v5369
    %5371 = vdwg.mxu0
    %5372 = vmatprep.subr.bf16.mxu0 %v5144
    %5373 = vmatpush1.bf16.msra.mxu0 %v5143
    %5374 = vmatprep.subr.bf16.mxu0 0
    %5375 = vmatpush1.bf16.msra.mxu0 0
    %5376 = vmatprep.subr.bf16.mxu0 0
    %5377 = vmatpush1.bf16.msra.mxu0 0
    %5378 = vmatprep.subr.bf16.mxu0 0
    %5379 = vmatpush1.bf16.msra.mxu0 0
    %5380 = vmatprep.subr.bf16.mxu0 0
    %5381 = vmatpush1.bf16.msra.mxu0 0
    %5382 = vmatprep.subr.bf16.mxu0 0
    %5383 = vmatpush1.bf16.msra.mxu0 0
    %5384 = vmatprep.subr.bf16.mxu0 0
    %5385 = vmatpush1.bf16.msra.mxu0 0
    %5386 = vmatprep.subr.bf16.mxu0 0
    %5387 = vmatpush1.bf16.msra.mxu0 0
    %5388 = vmatprep.subr.bf16.mxu0 0
    %5389 = vmatpush1.bf16.msra.mxu0 0
    %5390 = vmatprep.subr.bf16.mxu0 0
    %5391 = vmatpush1.bf16.msra.mxu0 0
    %5392 = vmatprep.subr.bf16.mxu0 0
    %5393 = vmatpush1.bf16.msra.mxu0 0
    %5394 = vmatprep.subr.bf16.mxu0 0
    %5395 = vmatpush1.bf16.msra.mxu0 0
    %5396 = vmatprep.subr.bf16.mxu0 0
    %5397 = vmatpush1.bf16.msra.mxu0 0
    %5398 = vmatprep.subr.bf16.mxu0 0
    %5399 = vmatpush1.bf16.msra.mxu0 0
    %5400 = vmatprep.subr.bf16.mxu0 0
    %5401 = vmatpush1.bf16.msra.mxu0 0
    %5402 = vmatprep.subr.bf16.mxu0 0
    %5403 = vmatpush1.bf16.msra.mxu0 0
    %5404 = vmatprep.mubr.bf16.mxu0 0
    %5405 = vmatmul.mubr.bf16.gmra.mrb[0].mxu0 %v655
    %v5406 = vpop.f32.mrb[0].mxu0
    %v5407 = vadd.f32 %v5364, %v5406
    %v5408 = vpop.f32.mrb[0].mxu0
    %v5409 = vadd.f32 %v5366, %v5408
    %v5410 = vpop.f32.mrb[0].mxu0
    %v5411 = vadd.f32 %v5368, %v5410
    %v5412 = vpop.f32.mrb[0].mxu0
    %v5413 = vadd.f32 %v5370, %v5412
    %5414 = vdwg.mxu0
    %v5415 = vmax.f32 %v4650, %v5407
    %v5416 = vmax.f32 %v4651, %v5409
    %v5417 = vmax.f32 %v4652, %v5411
    %v5418 = vmax.f32 %v4653, %v5413
    %s5419 = scalar_lea.vmem %s1, 5488
    %v5420 = vld [vmem:[%s5419] sm:$0xff]
    %v5421 = vld [vmem:[%s5419 + $0x8] sm:$0xff]
    %v5422 = vld [vmem:[%s5419 + $0x10] sm:$0xff]
    %v5423 = vld [vmem:[%s5419 + $0x18] sm:$0xff]
    %v5424 = vld [vmem:[%s5419 + $0x20] sm:$0xff]
    %v5425 = vld [vmem:[%s5419 + $0x28] sm:$0xff]
    %v5426 = vld [vmem:[%s5419 + $0x30] sm:$0xff]
    %v5427 = vld [vmem:[%s5419 + $0x38] sm:$0xff]
    %v5428 = vld [vmem:[%s5419 + $0x40] sm:$0xff]
    %v5429 = vld [vmem:[%s5419 + $0x48] sm:$0xff]
    %v5430 = vld [vmem:[%s5419 + $0x50] sm:$0xff]
    %v5431 = vld [vmem:[%s5419 + $0x58] sm:$0xff]
    %v5432 = vld [vmem:[%s5419 + $0x60] sm:$0xff]
    %v5433 = vld [vmem:[%s5419 + $0x68] sm:$0xff]
    %v5434 = vld [vmem:[%s5419 + $0x70] sm:$0xff]
    %v5435 = vld [vmem:[%s5419 + $0x78] sm:$0xff]
    %v5436 = vld [vmem:[%s5419 + $0x80] sm:$0xff]
    %v5437 = vld [vmem:[%s5419 + $0x88] sm:$0xff]
    %v5438 = vld [vmem:[%s5419 + $0x90] sm:$0xff]
    %v5439 = vld [vmem:[%s5419 + $0x98] sm:$0xff]
    %v5440 = vld [vmem:[%s5419 + $0xa0] sm:$0xff]
    %v5441 = vld [vmem:[%s5419 + $0xa8] sm:$0xff]
    %v5442 = vld [vmem:[%s5419 + $0xb0] sm:$0xff]
    %v5443 = vld [vmem:[%s5419 + $0xb8] sm:$0xff]
    %v5444 = vld [vmem:[%s5419 + $0xc0] sm:$0xff]
    %v5445 = vld [vmem:[%s5419 + $0xc8] sm:$0xff]
    %v5446 = vld [vmem:[%s5419 + $0xd0] sm:$0xff]
    %v5447 = vld [vmem:[%s5419 + $0xd8] sm:$0xff]
    %v5448 = vld [vmem:[%s5419 + $0xe0] sm:$0xff]
    %v5449 = vld [vmem:[%s5419 + $0xe8] sm:$0xff]
    %v5450 = vld [vmem:[%s5419 + $0xf0] sm:$0xff]
    %v5451 = vld [vmem:[%s5419 + $0xf8] sm:$0xff]
    %v5452 = vld [vmem:[%s5419 + $0x100] sm:$0xff]
    %v5453 = vld [vmem:[%s5419 + $0x108] sm:$0xff]
    %v5454 = vld [vmem:[%s5419 + $0x110] sm:$0xff]
    %v5455 = vld [vmem:[%s5419 + $0x118] sm:$0xff]
    %v5456 = vld [vmem:[%s5419 + $0x120] sm:$0xff]
    %v5457 = vld [vmem:[%s5419 + $0x128] sm:$0xff]
    %v5458 = vld [vmem:[%s5419 + $0x130] sm:$0xff]
    %v5459 = vld [vmem:[%s5419 + $0x138] sm:$0xff]
    %v5460 = vld [vmem:[%s5419 + $0x140] sm:$0xff]
    %v5461 = vld [vmem:[%s5419 + $0x148] sm:$0xff]
    %v5462 = vld [vmem:[%s5419 + $0x150] sm:$0xff]
    %v5463 = vld [vmem:[%s5419 + $0x158] sm:$0xff]
    %v5464 = vld [vmem:[%s5419 + $0x160] sm:$0xff]
    %v5465 = vld [vmem:[%s5419 + $0x168] sm:$0xff]
    %v5466 = vld [vmem:[%s5419 + $0x170] sm:$0xff]
    %v5467 = vld [vmem:[%s5419 + $0x178] sm:$0xff]
    %v5468 = vld [vmem:[%s5419 + $0x180] sm:$0xff]
    %v5469 = vld [vmem:[%s5419 + $0x188] sm:$0xff]
    %v5470 = vld [vmem:[%s5419 + $0x190] sm:$0xff]
    %v5471 = vld [vmem:[%s5419 + $0x198] sm:$0xff]
    %v5472 = vld [vmem:[%s5419 + $0x1a0] sm:$0xff]
    %v5473 = vld [vmem:[%s5419 + $0x1a8] sm:$0xff]
    %v5474 = vld [vmem:[%s5419 + $0x1b0] sm:$0xff]
    %v5475 = vld [vmem:[%s5419 + $0x1b8] sm:$0xff]
    %v5476 = vld [vmem:[%s5419 + $0x1c0] sm:$0xff]
    %v5477 = vld [vmem:[%s5419 + $0x1c8] sm:$0xff]
    %v5478 = vld [vmem:[%s5419 + $0x1d0] sm:$0xff]
    %v5479 = vld [vmem:[%s5419 + $0x1d8] sm:$0xff]
    %v5480 = vld [vmem:[%s5419 + $0x1e0] sm:$0xff]
    %v5481 = vld [vmem:[%s5419 + $0x1e8] sm:$0xff]
    %v5482 = vld [vmem:[%s5419 + $0x1f0] sm:$0xff]
    %v5483 = vld [vmem:[%s5419 + $0x1f8] sm:$0xff]
    %v5484 = vld [vmem:[%s5419 + $0x200] sm:$0xff]
    %v5485 = vld [vmem:[%s5419 + $0x208] sm:$0xff]
    %v5486 = vld [vmem:[%s5419 + $0x210] sm:$0xff]
    %v5487 = vld [vmem:[%s5419 + $0x218] sm:$0xff]
    %v5488 = vld [vmem:[%s5419 + $0x220] sm:$0xff]
    %v5489 = vld [vmem:[%s5419 + $0x228] sm:$0xff]
    %v5490 = vld [vmem:[%s5419 + $0x230] sm:$0xff]
    %v5491 = vld [vmem:[%s5419 + $0x238] sm:$0xff]
    %v5492 = vld [vmem:[%s5419 + $0x240] sm:$0xff]
    %v5493 = vld [vmem:[%s5419 + $0x248] sm:$0xff]
    %v5494 = vld [vmem:[%s5419 + $0x250] sm:$0xff]
    %v5495 = vld [vmem:[%s5419 + $0x258] sm:$0xff]
    %v5496 = vld [vmem:[%s5419 + $0x260] sm:$0xff]
    %v5497 = vld [vmem:[%s5419 + $0x268] sm:$0xff]
    %v5498 = vld [vmem:[%s5419 + $0x270] sm:$0xff]
    %v5499 = vld [vmem:[%s5419 + $0x278] sm:$0xff]
    %v5500 = vld [vmem:[%s5419 + $0x280] sm:$0xff]
    %v5501 = vld [vmem:[%s5419 + $0x288] sm:$0xff]
    %v5502 = vld [vmem:[%s5419 + $0x290] sm:$0xff]
    %v5503 = vld [vmem:[%s5419 + $0x298] sm:$0xff]
    %v5504 = vld [vmem:[%s5419 + $0x2a0] sm:$0xff]
    %v5505 = vld [vmem:[%s5419 + $0x2a8] sm:$0xff]
    %v5506 = vld [vmem:[%s5419 + $0x2b0] sm:$0xff]
    %v5507 = vld [vmem:[%s5419 + $0x2b8] sm:$0xff]
    %v5508 = vld [vmem:[%s5419 + $0x2c0] sm:$0xff]
    %v5509 = vld [vmem:[%s5419 + $0x2c8] sm:$0xff]
    %v5510 = vld [vmem:[%s5419 + $0x2d0] sm:$0xff]
    %v5511 = vld [vmem:[%s5419 + $0x2d8] sm:$0xff]
    %v5512 = vld [vmem:[%s5419 + $0x2e0] sm:$0xff]
    %v5513 = vld [vmem:[%s5419 + $0x2e8] sm:$0xff]
    %v5514 = vld [vmem:[%s5419 + $0x2f0] sm:$0xff]
    %v5515 = vld [vmem:[%s5419 + $0x2f8] sm:$0xff]
    %v5516 = vld [vmem:[%s5419 + $0x300] sm:$0xff]
    %v5517 = vld [vmem:[%s5419 + $0x308] sm:$0xff]
    %v5616 = vunpack.c.l.b16 %v5420
    %v5617 = vunpack.c.h.b16 %v5420
    %v5618 = vunpack.c.l.b16 %v5421
    %v5619 = vunpack.c.h.b16 %v5421
    %v5620 = vunpack.c.l.b16 %v5422
    %v5621 = vunpack.c.h.b16 %v5422
    %v5622 = vunpack.c.l.b16 %v5423
    %v5623 = vunpack.c.h.b16 %v5423
    %v5624 = vunpack.c.l.b16 %v5424
    %v5625 = vunpack.c.h.b16 %v5424
    %v5626 = vunpack.c.l.b16 %v5425
    %v5627 = vunpack.c.h.b16 %v5425
    %v5628 = vunpack.c.l.b16 %v5426
    %v5629 = vunpack.c.h.b16 %v5426
    %v5630 = vunpack.c.l.b16 %v5427
    %v5631 = vunpack.c.h.b16 %v5427
    %v5632 = vunpack.c.l.b16 %v5428
    %v5633 = vunpack.c.h.b16 %v5428
    %v5634 = vunpack.c.l.b16 %v5429
    %v5635 = vunpack.c.h.b16 %v5429
    %v5636 = vunpack.c.l.b16 %v5430
    %v5637 = vunpack.c.h.b16 %v5430
    %v5638 = vunpack.c.l.b16 %v5431
    %v5639 = vunpack.c.h.b16 %v5431
    %v5640 = vunpack.c.l.b16 %v5432
    %v5641 = vunpack.c.h.b16 %v5432
    %v5642 = vunpack.c.l.b16 %v5433
    %v5643 = vunpack.c.h.b16 %v5433
    %v5644 = vunpack.c.l.b16 %v5434
    %v5645 = vunpack.c.h.b16 %v5434
    %v5646 = vunpack.c.l.b16 %v5435
    %v5647 = vunpack.c.h.b16 %v5435
    %v5648 = vunpack.c.l.b16 %v5436
    %v5649 = vunpack.c.h.b16 %v5436
    %v5650 = vunpack.c.l.b16 %v5437
    %v5651 = vunpack.c.h.b16 %v5437
    %v5652 = vunpack.c.l.b16 %v5438
    %v5653 = vunpack.c.h.b16 %v5438
    %v5654 = vunpack.c.l.b16 %v5439
    %v5655 = vunpack.c.h.b16 %v5439
    %v5656 = vunpack.c.l.b16 %v5440
    %v5657 = vunpack.c.h.b16 %v5440
    %v5658 = vunpack.c.l.b16 %v5441
    %v5659 = vunpack.c.h.b16 %v5441
    %v5660 = vunpack.c.l.b16 %v5442
    %v5661 = vunpack.c.h.b16 %v5442
    %v5662 = vunpack.c.l.b16 %v5443
    %v5663 = vunpack.c.h.b16 %v5443
    %v5664 = vunpack.c.l.b16 %v5444
    %v5665 = vunpack.c.h.b16 %v5444
    %v5666 = vunpack.c.l.b16 %v5445
    %v5667 = vunpack.c.h.b16 %v5445
    %v5668 = vunpack.c.l.b16 %v5446
    %v5669 = vunpack.c.h.b16 %v5446
    %v5670 = vunpack.c.l.b16 %v5447
    %v5671 = vunpack.c.h.b16 %v5447
    %v5672 = vunpack.c.l.b16 %v5448
    %v5673 = vunpack.c.h.b16 %v5448
    %v5674 = vunpack.c.l.b16 %v5449
    %v5675 = vunpack.c.h.b16 %v5449
    %v5676 = vunpack.c.l.b16 %v5450
    %v5677 = vunpack.c.h.b16 %v5450
    %v5678 = vunpack.c.l.b16 %v5451
    %v5679 = vunpack.c.h.b16 %v5451
    %v5680 = vunpack.c.l.b16 %v5452
    %v5681 = vunpack.c.h.b16 %v5452
    %v5682 = vunpack.c.l.b16 %v5453
    %v5683 = vunpack.c.h.b16 %v5453
    %v5684 = vunpack.c.l.b16 %v5454
    %v5685 = vunpack.c.h.b16 %v5454
    %v5686 = vunpack.c.l.b16 %v5455
    %v5687 = vunpack.c.h.b16 %v5455
    %v5688 = vunpack.c.l.b16 %v5456
    %v5689 = vunpack.c.h.b16 %v5456
    %v5690 = vunpack.c.l.b16 %v5457
    %v5691 = vunpack.c.h.b16 %v5457
    %v5692 = vunpack.c.l.b16 %v5458
    %v5693 = vunpack.c.h.b16 %v5458
    %v5694 = vunpack.c.l.b16 %v5459
    %v5695 = vunpack.c.h.b16 %v5459
    %v5696 = vunpack.c.l.b16 %v5460
    %v5697 = vunpack.c.h.b16 %v5460
    %v5698 = vunpack.c.l.b16 %v5461
    %v5699 = vunpack.c.h.b16 %v5461
    %v5700 = vunpack.c.l.b16 %v5462
    %v5701 = vunpack.c.h.b16 %v5462
    %v5702 = vunpack.c.l.b16 %v5463
    %v5703 = vunpack.c.h.b16 %v5463
    %v5704 = vunpack.c.l.b16 %v5464
    %v5705 = vunpack.c.h.b16 %v5464
    %v5706 = vunpack.c.l.b16 %v5465
    %v5707 = vunpack.c.h.b16 %v5465
    %v5708 = vunpack.c.l.b16 %v5466
    %v5709 = vunpack.c.h.b16 %v5466
    %v5710 = vunpack.c.l.b16 %v5467
    %v5711 = vunpack.c.h.b16 %v5467
    %v5712 = vunpack.c.l.b16 %v5468
    %v5713 = vunpack.c.h.b16 %v5468
    %v5714 = vunpack.c.l.b16 %v5469
    %v5715 = vunpack.c.h.b16 %v5469
    %v5716 = vunpack.c.l.b16 %v5470
    %v5717 = vunpack.c.h.b16 %v5470
    %v5718 = vunpack.c.l.b16 %v5471
    %v5719 = vunpack.c.h.b16 %v5471
    %v5720 = vunpack.c.l.b16 %v5472
    %v5721 = vunpack.c.h.b16 %v5472
    %v5722 = vunpack.c.l.b16 %v5473
    %v5723 = vunpack.c.h.b16 %v5473
    %v5724 = vunpack.c.l.b16 %v5474
    %v5725 = vunpack.c.h.b16 %v5474
    %v5726 = vunpack.c.l.b16 %v5475
    %v5727 = vunpack.c.h.b16 %v5475
    %v5728 = vunpack.c.l.b16 %v5476
    %v5729 = vunpack.c.h.b16 %v5476
    %v5730 = vunpack.c.l.b16 %v5477
    %v5731 = vunpack.c.h.b16 %v5477
    %v5732 = vunpack.c.l.b16 %v5478
    %v5733 = vunpack.c.h.b16 %v5478
    %v5734 = vunpack.c.l.b16 %v5479
    %v5735 = vunpack.c.h.b16 %v5479
    %v5736 = vunpack.c.l.b16 %v5480
    %v5737 = vunpack.c.h.b16 %v5480
    %v5738 = vunpack.c.l.b16 %v5481
    %v5739 = vunpack.c.h.b16 %v5481
    %v5740 = vunpack.c.l.b16 %v5482
    %v5741 = vunpack.c.h.b16 %v5482
    %v5742 = vunpack.c.l.b16 %v5483
    %v5743 = vunpack.c.h.b16 %v5483
    %v5744 = vunpack.c.l.b16 %v5484
    %v5745 = vunpack.c.h.b16 %v5484
    %v5746 = vunpack.c.l.b16 %v5485
    %v5747 = vunpack.c.h.b16 %v5485
    %v5748 = vunpack.c.l.b16 %v5486
    %v5749 = vunpack.c.h.b16 %v5486
    %v5750 = vunpack.c.l.b16 %v5487
    %v5751 = vunpack.c.h.b16 %v5487
    %v5752 = vunpack.c.l.b16 %v5488
    %v5753 = vunpack.c.h.b16 %v5488
    %v5754 = vunpack.c.l.b16 %v5489
    %v5755 = vunpack.c.h.b16 %v5489
    %v5756 = vunpack.c.l.b16 %v5490
    %v5757 = vunpack.c.h.b16 %v5490
    %v5758 = vunpack.c.l.b16 %v5491
    %v5759 = vunpack.c.h.b16 %v5491
    %v5760 = vunpack.c.l.b16 %v5492
    %v5761 = vunpack.c.h.b16 %v5492
    %v5762 = vunpack.c.l.b16 %v5493
    %v5763 = vunpack.c.h.b16 %v5493
    %v5764 = vunpack.c.l.b16 %v5494
    %v5765 = vunpack.c.h.b16 %v5494
    %v5766 = vunpack.c.l.b16 %v5495
    %v5767 = vunpack.c.h.b16 %v5495
    %v5768 = vunpack.c.l.b16 %v5496
    %v5769 = vunpack.c.h.b16 %v5496
    %v5770 = vunpack.c.l.b16 %v5497
    %v5771 = vunpack.c.h.b16 %v5497
    %v5772 = vunpack.c.l.b16 %v5498
    %v5773 = vunpack.c.h.b16 %v5498
    %v5774 = vunpack.c.l.b16 %v5499
    %v5775 = vunpack.c.h.b16 %v5499
    %v5776 = vunpack.c.l.b16 %v5500
    %v5777 = vunpack.c.h.b16 %v5500
    %v5778 = vunpack.c.l.b16 %v5501
    %v5779 = vunpack.c.h.b16 %v5501
    %v5780 = vunpack.c.l.b16 %v5502
    %v5781 = vunpack.c.h.b16 %v5502
    %v5782 = vunpack.c.l.b16 %v5503
    %v5783 = vunpack.c.h.b16 %v5503
    %v5784 = vunpack.c.l.b16 %v5504
    %v5785 = vunpack.c.h.b16 %v5504
    %v5786 = vunpack.c.l.b16 %v5505
    %v5787 = vunpack.c.h.b16 %v5505
    %v5788 = vunpack.c.l.b16 %v5506
    %v5789 = vunpack.c.h.b16 %v5506
    %v5790 = vunpack.c.l.b16 %v5507
    %v5791 = vunpack.c.h.b16 %v5507
    %v5792 = vunpack.c.l.b16 %v5508
    %v5793 = vunpack.c.h.b16 %v5508
    %v5794 = vunpack.c.l.b16 %v5509
    %v5795 = vunpack.c.h.b16 %v5509
    %v5796 = vunpack.c.l.b16 %v5510
    %v5797 = vunpack.c.h.b16 %v5510
    %v5798 = vunpack.c.l.b16 %v5511
    %v5799 = vunpack.c.h.b16 %v5511
    %v5800 = vunpack.c.l.b16 %v5512
    %v5801 = vunpack.c.h.b16 %v5512
    %v5802 = vunpack.c.l.b16 %v5513
    %v5803 = vunpack.c.h.b16 %v5513
    %v5804 = vunpack.c.l.b16 %v5514
    %v5805 = vunpack.c.h.b16 %v5514
    %v5806 = vunpack.c.l.b16 %v5515
    %v5807 = vunpack.c.h.b16 %v5515
    %v5808 = vunpack.c.l.b16 %v5516
    %v5809 = vunpack.c.h.b16 %v5516
    %v5810 = vunpack.c.l.b16 %v5517
    %v5811 = vunpack.c.h.b16 %v5517
    %v5812 = vpack.c.b16 %v5618, %v5616
    %v5813 = vpack.c.b16 %v5619, %v5617
    %v5814 = vpack.c.b16 %v5622, %v5620
    %v5815 = vpack.c.b16 %v5623, %v5621
    %v5816 = vpack.c.b16 %v5626, %v5624
    %v5817 = vpack.c.b16 %v5627, %v5625
    %v5818 = vpack.c.b16 %v5630, %v5628
    %v5819 = vpack.c.b16 %v5631, %v5629
    %v5820 = vpack.c.b16 %v5634, %v5632
    %v5821 = vpack.c.b16 %v5635, %v5633
    %v5822 = vpack.c.b16 %v5638, %v5636
    %v5823 = vpack.c.b16 %v5639, %v5637
    %v5824 = vpack.c.b16 %v5642, %v5640
    %v5825 = vpack.c.b16 %v5643, %v5641
    %v5826 = vpack.c.b16 %v5646, %v5644
    %v5827 = vpack.c.b16 %v5647, %v5645
    %v5828 = vpack.c.b16 %v5650, %v5648
    %v5829 = vpack.c.b16 %v5651, %v5649
    %v5830 = vpack.c.b16 %v5654, %v5652
    %v5831 = vpack.c.b16 %v5655, %v5653
    %v5832 = vpack.c.b16 %v5658, %v5656
    %v5833 = vpack.c.b16 %v5659, %v5657
    %v5834 = vpack.c.b16 %v5662, %v5660
    %v5835 = vpack.c.b16 %v5663, %v5661
    %v5836 = vpack.c.b16 %v5666, %v5664
    %v5837 = vpack.c.b16 %v5667, %v5665
    %v5838 = vpack.c.b16 %v5670, %v5668
    %v5839 = vpack.c.b16 %v5671, %v5669
    %v5840 = vpack.c.b16 %v5674, %v5672
    %v5841 = vpack.c.b16 %v5675, %v5673
    %v5842 = vpack.c.b16 %v5678, %v5676
    %v5843 = vpack.c.b16 %v5679, %v5677
    %v5844 = vpack.c.b16 %v5682, %v5680
    %v5845 = vpack.c.b16 %v5683, %v5681
    %v5846 = vpack.c.b16 %v5686, %v5684
    %v5847 = vpack.c.b16 %v5687, %v5685
    %v5848 = vpack.c.b16 %v5690, %v5688
    %v5849 = vpack.c.b16 %v5691, %v5689
    %v5850 = vpack.c.b16 %v5694, %v5692
    %v5851 = vpack.c.b16 %v5695, %v5693
    %v5852 = vpack.c.b16 %v5698, %v5696
    %v5853 = vpack.c.b16 %v5699, %v5697
    %v5854 = vpack.c.b16 %v5702, %v5700
    %v5855 = vpack.c.b16 %v5703, %v5701
    %v5856 = vpack.c.b16 %v5706, %v5704
    %v5857 = vpack.c.b16 %v5707, %v5705
    %v5858 = vpack.c.b16 %v5710, %v5708
    %v5859 = vpack.c.b16 %v5711, %v5709
    %v5860 = vpack.c.b16 %v5714, %v5712
    %v5861 = vpack.c.b16 %v5715, %v5713
    %v5862 = vpack.c.b16 %v5718, %v5716
    %v5863 = vpack.c.b16 %v5719, %v5717
    %v5864 = vpack.c.b16 %v5722, %v5720
    %v5865 = vpack.c.b16 %v5723, %v5721
    %v5866 = vpack.c.b16 %v5726, %v5724
    %v5867 = vpack.c.b16 %v5727, %v5725
    %v5868 = vpack.c.b16 %v5730, %v5728
    %v5869 = vpack.c.b16 %v5731, %v5729
    %v5870 = vpack.c.b16 %v5734, %v5732
    %v5871 = vpack.c.b16 %v5735, %v5733
    %v5872 = vpack.c.b16 %v5738, %v5736
    %v5873 = vpack.c.b16 %v5739, %v5737
    %v5874 = vpack.c.b16 %v5742, %v5740
    %v5875 = vpack.c.b16 %v5743, %v5741
    %v5876 = vpack.c.b16 %v5746, %v5744
    %v5877 = vpack.c.b16 %v5747, %v5745
    %v5878 = vpack.c.b16 %v5750, %v5748
    %v5879 = vpack.c.b16 %v5751, %v5749
    %v5880 = vpack.c.b16 %v5754, %v5752
    %v5881 = vpack.c.b16 %v5755, %v5753
    %v5882 = vpack.c.b16 %v5758, %v5756
    %v5883 = vpack.c.b16 %v5759, %v5757
    %v5884 = vpack.c.b16 %v5762, %v5760
    %v5885 = vpack.c.b16 %v5763, %v5761
    %v5886 = vpack.c.b16 %v5766, %v5764
    %v5887 = vpack.c.b16 %v5767, %v5765
    %v5888 = vpack.c.b16 %v5770, %v5768
    %v5889 = vpack.c.b16 %v5771, %v5769
    %v5890 = vpack.c.b16 %v5774, %v5772
    %v5891 = vpack.c.b16 %v5775, %v5773
    %v5892 = vpack.c.b16 %v5778, %v5776
    %v5893 = vpack.c.b16 %v5779, %v5777
    %v5894 = vpack.c.b16 %v5782, %v5780
    %v5895 = vpack.c.b16 %v5783, %v5781
    %v5896 = vpack.c.b16 %v5786, %v5784
    %v5897 = vpack.c.b16 %v5787, %v5785
    %v5898 = vpack.c.b16 %v5790, %v5788
    %v5899 = vpack.c.b16 %v5791, %v5789
    %v5900 = vpack.c.b16 %v5794, %v5792
    %v5901 = vpack.c.b16 %v5795, %v5793
    %v5902 = vpack.c.b16 %v5798, %v5796
    %v5903 = vpack.c.b16 %v5799, %v5797
    %v5904 = vpack.c.b16 %v5802, %v5800
    %v5905 = vpack.c.b16 %v5803, %v5801
    %v5906 = vpack.c.b16 %v5806, %v5804
    %v5907 = vpack.c.b16 %v5807, %v5805
    %v5908 = vpack.c.b16 %v5810, %v5808
    %v5909 = vpack.c.b16 %v5811, %v5809
    %6008 = vmatprep.subr.bf16.mxu0 %v5813
    %6009 = vmatpush1.bf16.msra.mxu0 %v5812
    %6010 = vmatprep.subr.bf16.mxu0 %v5815
    %6011 = vmatpush1.bf16.msra.mxu0 %v5814
    %6012 = vmatprep.subr.bf16.mxu0 %v5817
    %6013 = vmatpush1.bf16.msra.mxu0 %v5816
    %6014 = vmatprep.subr.bf16.mxu0 %v5819
    %6015 = vmatpush1.bf16.msra.mxu0 %v5818
    %6016 = vmatprep.subr.bf16.mxu0 %v5821
    %6017 = vmatpush1.bf16.msra.mxu0 %v5820
    %6018 = vmatprep.subr.bf16.mxu0 %v5823
    %6019 = vmatpush1.bf16.msra.mxu0 %v5822
    %6020 = vmatprep.subr.bf16.mxu0 %v5825
    %6021 = vmatpush1.bf16.msra.mxu0 %v5824
    %6022 = vmatprep.subr.bf16.mxu0 %v5827
    %6023 = vmatpush1.bf16.msra.mxu0 %v5826
    %6024 = vmatprep.subr.bf16.mxu0 %v5829
    %6025 = vmatpush1.bf16.msra.mxu0 %v5828
    %6026 = vmatprep.subr.bf16.mxu0 %v5831
    %6027 = vmatpush1.bf16.msra.mxu0 %v5830
    %6028 = vmatprep.subr.bf16.mxu0 %v5833
    %6029 = vmatpush1.bf16.msra.mxu0 %v5832
    %6030 = vmatprep.subr.bf16.mxu0 %v5835
    %6031 = vmatpush1.bf16.msra.mxu0 %v5834
    %6032 = vmatprep.subr.bf16.mxu0 %v5837
    %6033 = vmatpush1.bf16.msra.mxu0 %v5836
    %6034 = vmatprep.subr.bf16.mxu0 %v5839
    %6035 = vmatpush1.bf16.msra.mxu0 %v5838
    %6036 = vmatprep.subr.bf16.mxu0 %v5841
    %6037 = vmatpush1.bf16.msra.mxu0 %v5840
    %6038 = vmatprep.subr.bf16.mxu0 %v5843
    %6039 = vmatpush1.bf16.msra.mxu0 %v5842
    %6040 = vmatprep.mubr.bf16.mxu0 %v151
    %6041 = vmatmul.mubr.bf16.gmra.mrb[0].mxu0 %v150
    %v6042 = vpop.f32.mrb[0].mxu0
    %v6043 = vadd.f32 0.0, %v6042
    %v6044 = vpop.f32.mrb[0].mxu0
    %v6045 = vadd.f32 0.0, %v6044
    %v6046 = vpop.f32.mrb[0].mxu0
    %v6047 = vadd.f32 0.0, %v6046
    %v6048 = vpop.f32.mrb[0].mxu0
    %v6049 = vadd.f32 0.0, %v6048
    %6050 = vdwg.mxu0
    %6051 = vmatprep.subr.bf16.mxu0 %v5845
    %6052 = vmatpush1.bf16.msra.mxu0 %v5844
    %6053 = vmatprep.subr.bf16.mxu0 %v5847
    %6054 = vmatpush1.bf16.msra.mxu0 %v5846
    %6055 = vmatprep.subr.bf16.mxu0 %v5849
    %6056 = vmatpush1.bf16.msra.mxu0 %v5848
    %6057 = vmatprep.subr.bf16.mxu0 %v5851
    %6058 = vmatpush1.bf16.msra.mxu0 %v5850
    %6059 = vmatprep.subr.bf16.mxu0 %v5853
    %6060 = vmatpush1.bf16.msra.mxu0 %v5852
    %6061 = vmatprep.subr.bf16.mxu0 %v5855
    %6062 = vmatpush1.bf16.msra.mxu0 %v5854
    %6063 = vmatprep.subr.bf16.mxu0 %v5857
    %6064 = vmatpush1.bf16.msra.mxu0 %v5856
    %6065 = vmatprep.subr.bf16.mxu0 %v5859
    %6066 = vmatpush1.bf16.msra.mxu0 %v5858
    %6067 = vmatprep.subr.bf16.mxu0 %v5861
    %6068 = vmatpush1.bf16.msra.mxu0 %v5860
    %6069 = vmatprep.subr.bf16.mxu0 %v5863
    %6070 = vmatpush1.bf16.msra.mxu0 %v5862
    %6071 = vmatprep.subr.bf16.mxu0 %v5865
    %6072 = vmatpush1.bf16.msra.mxu0 %v5864
    %6073 = vmatprep.subr.bf16.mxu0 %v5867
    %6074 = vmatpush1.bf16.msra.mxu0 %v5866
    %6075 = vmatprep.subr.bf16.mxu0 %v5869
    %6076 = vmatpush1.bf16.msra.mxu0 %v5868
    %6077 = vmatprep.subr.bf16.mxu0 %v5871
    %6078 = vmatpush1.bf16.msra.mxu0 %v5870
    %6079 = vmatprep.subr.bf16.mxu0 %v5873
    %6080 = vmatpush1.bf16.msra.mxu0 %v5872
    %6081 = vmatprep.subr.bf16.mxu0 %v5875
    %6082 = vmatpush1.bf16.msra.mxu0 %v5874
    %6083 = vmatprep.mubr.bf16.mxu0 %v153
    %6084 = vmatmul.mubr.bf16.gmra.mrb[0].mxu0 %v152
    %v6085 = vpop.f32.mrb[0].mxu0
    %v6086 = vadd.f32 %v6043, %v6085
    %v6087 = vpop.f32.mrb[0].mxu0
    %v6088 = vadd.f32 %v6045, %v6087
    %v6089 = vpop.f32.mrb[0].mxu0
    %v6090 = vadd.f32 %v6047, %v6089
    %v6091 = vpop.f32.mrb[0].mxu0
    %v6092 = vadd.f32 %v6049, %v6091
    %6093 = vdwg.mxu0
    %6094 = vmatprep.subr.bf16.mxu0 %v5877
    %6095 = vmatpush1.bf16.msra.mxu0 %v5876
    %6096 = vmatprep.subr.bf16.mxu0 %v5879
    %6097 = vmatpush1.bf16.msra.mxu0 %v5878
    %6098 = vmatprep.subr.bf16.mxu0 %v5881
    %6099 = vmatpush1.bf16.msra.mxu0 %v5880
    %6100 = vmatprep.subr.bf16.mxu0 %v5883
    %6101 = vmatpush1.bf16.msra.mxu0 %v5882
    %6102 = vmatprep.subr.bf16.mxu0 %v5885
    %6103 = vmatpush1.bf16.msra.mxu0 %v5884
    %6104 = vmatprep.subr.bf16.mxu0 %v5887
    %6105 = vmatpush1.bf16.msra.mxu0 %v5886
    %6106 = vmatprep.subr.bf16.mxu0 %v5889
    %6107 = vmatpush1.bf16.msra.mxu0 %v5888
    %6108 = vmatprep.subr.bf16.mxu0 %v5891
    %6109 = vmatpush1.bf16.msra.mxu0 %v5890
    %6110 = vmatprep.subr.bf16.mxu0 %v5893
    %6111 = vmatpush1.bf16.msra.mxu0 %v5892
    %6112 = vmatprep.subr.bf16.mxu0 %v5895
    %6113 = vmatpush1.bf16.msra.mxu0 %v5894
    %6114 = vmatprep.subr.bf16.mxu0 %v5897
    %6115 = vmatpush1.bf16.msra.mxu0 %v5896
    %6116 = vmatprep.subr.bf16.mxu0 %v5899
    %6117 = vmatpush1.bf16.msra.mxu0 %v5898
    %6118 = vmatprep.subr.bf16.mxu0 %v5901
    %6119 = vmatpush1.bf16.msra.mxu0 %v5900
    %6120 = vmatprep.subr.bf16.mxu0 %v5903
    %6121 = vmatpush1.bf16.msra.mxu0 %v5902
    %6122 = vmatprep.subr.bf16.mxu0 %v5905
    %6123 = vmatpush1.bf16.msra.mxu0 %v5904
    %6124 = vmatprep.subr.bf16.mxu0 %v5907
    %6125 = vmatpush1.bf16.msra.mxu0 %v5906
    %6126 = vmatprep.mubr.bf16.mxu0 %v155
    %6127 = vmatmul.mubr.bf16.gmra.mrb[0].mxu0 %v154
    %v6128 = vpop.f32.mrb[0].mxu0
    %v6129 = vadd.f32 %v6086, %v6128
    %v6130 = vpop.f32.mrb[0].mxu0
    %v6131 = vadd.f32 %v6088, %v6130
    %v6132 = vpop.f32.mrb[0].mxu0
    %v6133 = vadd.f32 %v6090, %v6132
    %v6134 = vpop.f32.mrb[0].mxu0
    %v6135 = vadd.f32 %v6092, %v6134
    %6136 = vdwg.mxu0
    %6137 = vmatprep.subr.bf16.mxu0 %v5909
    %6138 = vmatpush1.bf16.msra.mxu0 %v5908
    %6139 = vmatprep.subr.bf16.mxu0 0
    %6140 = vmatpush1.bf16.msra.mxu0 0
    %6141 = vmatprep.subr.bf16.mxu0 0
    %6142 = vmatpush1.bf16.msra.mxu0 0
    %6143 = vmatprep.subr.bf16.mxu0 0
    %6144 = vmatpush1.bf16.msra.mxu0 0
    %6145 = vmatprep.subr.bf16.mxu0 0
    %6146 = vmatpush1.bf16.msra.mxu0 0
    %6147 = vmatprep.subr.bf16.mxu0 0
    %6148 = vmatpush1.bf16.msra.mxu0 0
    %6149 = vmatprep.subr.bf16.mxu0 0
    %6150 = vmatpush1.bf16.msra.mxu0 0
    %6151 = vmatprep.subr.bf16.mxu0 0
    %6152 = vmatpush1.bf16.msra.mxu0 0
    %6153 = vmatprep.subr.bf16.mxu0 0
    %6154 = vmatpush1.bf16.msra.mxu0 0
    %6155 = vmatprep.subr.bf16.mxu0 0
    %6156 = vmatpush1.bf16.msra.mxu0 0
    %6157 = vmatprep.subr.bf16.mxu0 0
    %6158 = vmatpush1.bf16.msra.mxu0 0
    %6159 = vmatprep.subr.bf16.mxu0 0
    %6160 = vmatpush1.bf16.msra.mxu0 0
    %6161 = vmatprep.subr.bf16.mxu0 0
    %6162 = vmatpush1.bf16.msra.mxu0 0
    %6163 = vmatprep.subr.bf16.mxu0 0
    %6164 = vmatpush1.bf16.msra.mxu0 0
    %6165 = vmatprep.subr.bf16.mxu0 0
    %6166 = vmatpush1.bf16.msra.mxu0 0
    %6167 = vmatprep.subr.bf16.mxu0 0
    %6168 = vmatpush1.bf16.msra.mxu0 0
    %6169 = vmatprep.mubr.bf16.mxu0 0
    %6170 = vmatmul.mubr.bf16.gmra.mrb[0].mxu0 %v655
    %v6171 = vpop.f32.mrb[0].mxu0
    %v6172 = vadd.f32 %v6129, %v6171
    %v6173 = vpop.f32.mrb[0].mxu0
    %v6174 = vadd.f32 %v6131, %v6173
    %v6175 = vpop.f32.mrb[0].mxu0
    %v6176 = vadd.f32 %v6133, %v6175
    %v6177 = vpop.f32.mrb[0].mxu0
    %v6178 = vadd.f32 %v6135, %v6177
    %6179 = vdwg.mxu0
    %v6180 = vmax.f32 %v5415, %v6172
    %v6181 = vmax.f32 %v5416, %v6174
    %v6182 = vmax.f32 %v5417, %v6176
    %v6183 = vmax.f32 %v5418, %v6178
    %s6184 = scalar_lea.vmem %s1, 6272
    %v6185 = vld [vmem:[%s6184] sm:$0xff]
    %v6186 = vld [vmem:[%s6184 + $0x8] sm:$0xff]
    %v6187 = vld [vmem:[%s6184 + $0x10] sm:$0xff]
    %v6188 = vld [vmem:[%s6184 + $0x18] sm:$0xff]
    %v6189 = vld [vmem:[%s6184 + $0x20] sm:$0xff]
    %v6190 = vld [vmem:[%s6184 + $0x28] sm:$0xff]
    %v6191 = vld [vmem:[%s6184 + $0x30] sm:$0xff]
    %v6192 = vld [vmem:[%s6184 + $0x38] sm:$0xff]
    %v6193 = vld [vmem:[%s6184 + $0x40] sm:$0xff]
    %v6194 = vld [vmem:[%s6184 + $0x48] sm:$0xff]
    %v6195 = vld [vmem:[%s6184 + $0x50] sm:$0xff]
    %v6196 = vld [vmem:[%s6184 + $0x58] sm:$0xff]
    %v6197 = vld [vmem:[%s6184 + $0x60] sm:$0xff]
    %v6198 = vld [vmem:[%s6184 + $0x68] sm:$0xff]
    %v6199 = vld [vmem:[%s6184 + $0x70] sm:$0xff]
    %v6200 = vld [vmem:[%s6184 + $0x78] sm:$0xff]
    %v6201 = vld [vmem:[%s6184 + $0x80] sm:$0xff]
    %v6202 = vld [vmem:[%s6184 + $0x88] sm:$0xff]
    %v6203 = vld [vmem:[%s6184 + $0x90] sm:$0xff]
    %v6204 = vld [vmem:[%s6184 + $0x98] sm:$0xff]
    %v6205 = vld [vmem:[%s6184 + $0xa0] sm:$0xff]
    %v6206 = vld [vmem:[%s6184 + $0xa8] sm:$0xff]
    %v6207 = vld [vmem:[%s6184 + $0xb0] sm:$0xff]
    %v6208 = vld [vmem:[%s6184 + $0xb8] sm:$0xff]
    %v6209 = vld [vmem:[%s6184 + $0xc0] sm:$0xff]
    %v6210 = vld [vmem:[%s6184 + $0xc8] sm:$0xff]
    %v6211 = vld [vmem:[%s6184 + $0xd0] sm:$0xff]
    %v6212 = vld [vmem:[%s6184 + $0xd8] sm:$0xff]
    %v6213 = vld [vmem:[%s6184 + $0xe0] sm:$0xff]
    %v6214 = vld [vmem:[%s6184 + $0xe8] sm:$0xff]
    %v6215 = vld [vmem:[%s6184 + $0xf0] sm:$0xff]
    %v6216 = vld [vmem:[%s6184 + $0xf8] sm:$0xff]
    %v6217 = vld [vmem:[%s6184 + $0x100] sm:$0xff]
    %v6218 = vld [vmem:[%s6184 + $0x108] sm:$0xff]
    %v6219 = vld [vmem:[%s6184 + $0x110] sm:$0xff]
    %v6220 = vld [vmem:[%s6184 + $0x118] sm:$0xff]
    %v6221 = vld [vmem:[%s6184 + $0x120] sm:$0xff]
    %v6222 = vld [vmem:[%s6184 + $0x128] sm:$0xff]
    %v6223 = vld [vmem:[%s6184 + $0x130] sm:$0xff]
    %v6224 = vld [vmem:[%s6184 + $0x138] sm:$0xff]
    %v6225 = vld [vmem:[%s6184 + $0x140] sm:$0xff]
    %v6226 = vld [vmem:[%s6184 + $0x148] sm:$0xff]
    %v6227 = vld [vmem:[%s6184 + $0x150] sm:$0xff]
    %v6228 = vld [vmem:[%s6184 + $0x158] sm:$0xff]
    %v6229 = vld [vmem:[%s6184 + $0x160] sm:$0xff]
    %v6230 = vld [vmem:[%s6184 + $0x168] sm:$0xff]
    %v6231 = vld [vmem:[%s6184 + $0x170] sm:$0xff]
    %v6232 = vld [vmem:[%s6184 + $0x178] sm:$0xff]
    %v6233 = vld [vmem:[%s6184 + $0x180] sm:$0xff]
    %v6234 = vld [vmem:[%s6184 + $0x188] sm:$0xff]
    %v6235 = vld [vmem:[%s6184 + $0x190] sm:$0xff]
    %v6236 = vld [vmem:[%s6184 + $0x198] sm:$0xff]
    %v6237 = vld [vmem:[%s6184 + $0x1a0] sm:$0xff]
    %v6238 = vld [vmem:[%s6184 + $0x1a8] sm:$0xff]
    %v6239 = vld [vmem:[%s6184 + $0x1b0] sm:$0xff]
    %v6240 = vld [vmem:[%s6184 + $0x1b8] sm:$0xff]
    %v6241 = vld [vmem:[%s6184 + $0x1c0] sm:$0xff]
    %v6242 = vld [vmem:[%s6184 + $0x1c8] sm:$0xff]
    %v6243 = vld [vmem:[%s6184 + $0x1d0] sm:$0xff]
    %v6244 = vld [vmem:[%s6184 + $0x1d8] sm:$0xff]
    %v6245 = vld [vmem:[%s6184 + $0x1e0] sm:$0xff]
    %v6246 = vld [vmem:[%s6184 + $0x1e8] sm:$0xff]
    %v6247 = vld [vmem:[%s6184 + $0x1f0] sm:$0xff]
    %v6248 = vld [vmem:[%s6184 + $0x1f8] sm:$0xff]
    %v6249 = vld [vmem:[%s6184 + $0x200] sm:$0xff]
    %v6250 = vld [vmem:[%s6184 + $0x208] sm:$0xff]
    %v6251 = vld [vmem:[%s6184 + $0x210] sm:$0xff]
    %v6252 = vld [vmem:[%s6184 + $0x218] sm:$0xff]
    %v6253 = vld [vmem:[%s6184 + $0x220] sm:$0xff]
    %v6254 = vld [vmem:[%s6184 + $0x228] sm:$0xff]
    %v6255 = vld [vmem:[%s6184 + $0x230] sm:$0xff]
    %v6256 = vld [vmem:[%s6184 + $0x238] sm:$0xff]
    %v6257 = vld [vmem:[%s6184 + $0x240] sm:$0xff]
    %v6258 = vld [vmem:[%s6184 + $0x248] sm:$0xff]
    %v6259 = vld [vmem:[%s6184 + $0x250] sm:$0xff]
    %v6260 = vld [vmem:[%s6184 + $0x258] sm:$0xff]
    %v6261 = vld [vmem:[%s6184 + $0x260] sm:$0xff]
    %v6262 = vld [vmem:[%s6184 + $0x268] sm:$0xff]
    %v6263 = vld [vmem:[%s6184 + $0x270] sm:$0xff]
    %v6264 = vld [vmem:[%s6184 + $0x278] sm:$0xff]
    %v6265 = vld [vmem:[%s6184 + $0x280] sm:$0xff]
    %v6266 = vld [vmem:[%s6184 + $0x288] sm:$0xff]
    %v6267 = vld [vmem:[%s6184 + $0x290] sm:$0xff]
    %v6268 = vld [vmem:[%s6184 + $0x298] sm:$0xff]
    %v6269 = vld [vmem:[%s6184 + $0x2a0] sm:$0xff]
    %v6270 = vld [vmem:[%s6184 + $0x2a8] sm:$0xff]
    %v6271 = vld [vmem:[%s6184 + $0x2b0] sm:$0xff]
    %v6272 = vld [vmem:[%s6184 + $0x2b8] sm:$0xff]
    %v6273 = vld [vmem:[%s6184 + $0x2c0] sm:$0xff]
    %v6274 = vld [vmem:[%s6184 + $0x2c8] sm:$0xff]
    %v6275 = vld [vmem:[%s6184 + $0x2d0] sm:$0xff]
    %v6276 = vld [vmem:[%s6184 + $0x2d8] sm:$0xff]
    %v6277 = vld [vmem:[%s6184 + $0x2e0] sm:$0xff]
    %v6278 = vld [vmem:[%s6184 + $0x2e8] sm:$0xff]
    %v6279 = vld [vmem:[%s6184 + $0x2f0] sm:$0xff]
    %v6280 = vld [vmem:[%s6184 + $0x2f8] sm:$0xff]
    %v6281 = vld [vmem:[%s6184 + $0x300] sm:$0xff]
    %v6282 = vld [vmem:[%s6184 + $0x308] sm:$0xff]
    %v6381 = vunpack.c.l.b16 %v6185
    %v6382 = vunpack.c.h.b16 %v6185
    %v6383 = vunpack.c.l.b16 %v6186
    %v6384 = vunpack.c.h.b16 %v6186
    %v6385 = vunpack.c.l.b16 %v6187
    %v6386 = vunpack.c.h.b16 %v6187
    %v6387 = vunpack.c.l.b16 %v6188
    %v6388 = vunpack.c.h.b16 %v6188
    %v6389 = vunpack.c.l.b16 %v6189
    %v6390 = vunpack.c.h.b16 %v6189
    %v6391 = vunpack.c.l.b16 %v6190
    %v6392 = vunpack.c.h.b16 %v6190
    %v6393 = vunpack.c.l.b16 %v6191
    %v6394 = vunpack.c.h.b16 %v6191
    %v6395 = vunpack.c.l.b16 %v6192
    %v6396 = vunpack.c.h.b16 %v6192
    %v6397 = vunpack.c.l.b16 %v6193
    %v6398 = vunpack.c.h.b16 %v6193
    %v6399 = vunpack.c.l.b16 %v6194
    %v6400 = vunpack.c.h.b16 %v6194
    %v6401 = vunpack.c.l.b16 %v6195
    %v6402 = vunpack.c.h.b16 %v6195
    %v6403 = vunpack.c.l.b16 %v6196
    %v6404 = vunpack.c.h.b16 %v6196
    %v6405 = vunpack.c.l.b16 %v6197
    %v6406 = vunpack.c.h.b16 %v6197
    %v6407 = vunpack.c.l.b16 %v6198
    %v6408 = vunpack.c.h.b16 %v6198
    %v6409 = vunpack.c.l.b16 %v6199
    %v6410 = vunpack.c.h.b16 %v6199
    %v6411 = vunpack.c.l.b16 %v6200
    %v6412 = vunpack.c.h.b16 %v6200
    %v6413 = vunpack.c.l.b16 %v6201
    %v6414 = vunpack.c.h.b16 %v6201
    %v6415 = vunpack.c.l.b16 %v6202
    %v6416 = vunpack.c.h.b16 %v6202
    %v6417 = vunpack.c.l.b16 %v6203
    %v6418 = vunpack.c.h.b16 %v6203
    %v6419 = vunpack.c.l.b16 %v6204
    %v6420 = vunpack.c.h.b16 %v6204
    %v6421 = vunpack.c.l.b16 %v6205
    %v6422 = vunpack.c.h.b16 %v6205
    %v6423 = vunpack.c.l.b16 %v6206
    %v6424 = vunpack.c.h.b16 %v6206
    %v6425 = vunpack.c.l.b16 %v6207
    %v6426 = vunpack.c.h.b16 %v6207
    %v6427 = vunpack.c.l.b16 %v6208
    %v6428 = vunpack.c.h.b16 %v6208
    %v6429 = vunpack.c.l.b16 %v6209
    %v6430 = vunpack.c.h.b16 %v6209
    %v6431 = vunpack.c.l.b16 %v6210
    %v6432 = vunpack.c.h.b16 %v6210
    %v6433 = vunpack.c.l.b16 %v6211
    %v6434 = vunpack.c.h.b16 %v6211
    %v6435 = vunpack.c.l.b16 %v6212
    %v6436 = vunpack.c.h.b16 %v6212
    %v6437 = vunpack.c.l.b16 %v6213
    %v6438 = vunpack.c.h.b16 %v6213
    %v6439 = vunpack.c.l.b16 %v6214
    %v6440 = vunpack.c.h.b16 %v6214
    %v6441 = vunpack.c.l.b16 %v6215
    %v6442 = vunpack.c.h.b16 %v6215
    %v6443 = vunpack.c.l.b16 %v6216
    %v6444 = vunpack.c.h.b16 %v6216
    %v6445 = vunpack.c.l.b16 %v6217
    %v6446 = vunpack.c.h.b16 %v6217
    %v6447 = vunpack.c.l.b16 %v6218
    %v6448 = vunpack.c.h.b16 %v6218
    %v6449 = vunpack.c.l.b16 %v6219
    %v6450 = vunpack.c.h.b16 %v6219
    %v6451 = vunpack.c.l.b16 %v6220
    %v6452 = vunpack.c.h.b16 %v6220
    %v6453 = vunpack.c.l.b16 %v6221
    %v6454 = vunpack.c.h.b16 %v6221
    %v6455 = vunpack.c.l.b16 %v6222
    %v6456 = vunpack.c.h.b16 %v6222
    %v6457 = vunpack.c.l.b16 %v6223
    %v6458 = vunpack.c.h.b16 %v6223
    %v6459 = vunpack.c.l.b16 %v6224
    %v6460 = vunpack.c.h.b16 %v6224
    %v6461 = vunpack.c.l.b16 %v6225
    %v6462 = vunpack.c.h.b16 %v6225
    %v6463 = vunpack.c.l.b16 %v6226
    %v6464 = vunpack.c.h.b16 %v6226
    %v6465 = vunpack.c.l.b16 %v6227
    %v6466 = vunpack.c.h.b16 %v6227
    %v6467 = vunpack.c.l.b16 %v6228
    %v6468 = vunpack.c.h.b16 %v6228
    %v6469 = vunpack.c.l.b16 %v6229
    %v6470 = vunpack.c.h.b16 %v6229
    %v6471 = vunpack.c.l.b16 %v6230
    %v6472 = vunpack.c.h.b16 %v6230
    %v6473 = vunpack.c.l.b16 %v6231
    %v6474 = vunpack.c.h.b16 %v6231
    %v6475 = vunpack.c.l.b16 %v6232
    %v6476 = vunpack.c.h.b16 %v6232
    %v6477 = vunpack.c.l.b16 %v6233
    %v6478 = vunpack.c.h.b16 %v6233
    %v6479 = vunpack.c.l.b16 %v6234
    %v6480 = vunpack.c.h.b16 %v6234
    %v6481 = vunpack.c.l.b16 %v6235
    %v6482 = vunpack.c.h.b16 %v6235
    %v6483 = vunpack.c.l.b16 %v6236
    %v6484 = vunpack.c.h.b16 %v6236
    %v6485 = vunpack.c.l.b16 %v6237
    %v6486 = vunpack.c.h.b16 %v6237
    %v6487 = vunpack.c.l.b16 %v6238
    %v6488 = vunpack.c.h.b16 %v6238
    %v6489 = vunpack.c.l.b16 %v6239
    %v6490 = vunpack.c.h.b16 %v6239
    %v6491 = vunpack.c.l.b16 %v6240
    %v6492 = vunpack.c.h.b16 %v6240
    %v6493 = vunpack.c.l.b16 %v6241
    %v6494 = vunpack.c.h.b16 %v6241
    %v6495 = vunpack.c.l.b16 %v6242
    %v6496 = vunpack.c.h.b16 %v6242
    %v6497 = vunpack.c.l.b16 %v6243
    %v6498 = vunpack.c.h.b16 %v6243
    %v6499 = vunpack.c.l.b16 %v6244
    %v6500 = vunpack.c.h.b16 %v6244
    %v6501 = vunpack.c.l.b16 %v6245
    %v6502 = vunpack.c.h.b16 %v6245
    %v6503 = vunpack.c.l.b16 %v6246
    %v6504 = vunpack.c.h.b16 %v6246
    %v6505 = vunpack.c.l.b16 %v6247
    %v6506 = vunpack.c.h.b16 %v6247
    %v6507 = vunpack.c.l.b16 %v6248
    %v6508 = vunpack.c.h.b16 %v6248
    %v6509 = vunpack.c.l.b16 %v6249
    %v6510 = vunpack.c.h.b16 %v6249
    %v6511 = vunpack.c.l.b16 %v6250
    %v6512 = vunpack.c.h.b16 %v6250
    %v6513 = vunpack.c.l.b16 %v6251
    %v6514 = vunpack.c.h.b16 %v6251
    %v6515 = vunpack.c.l.b16 %v6252
    %v6516 = vunpack.c.h.b16 %v6252
    %v6517 = vunpack.c.l.b16 %v6253
    %v6518 = vunpack.c.h.b16 %v6253
    %v6519 = vunpack.c.l.b16 %v6254
    %v6520 = vunpack.c.h.b16 %v6254
    %v6521 = vunpack.c.l.b16 %v6255
    %v6522 = vunpack.c.h.b16 %v6255
    %v6523 = vunpack.c.l.b16 %v6256
    %v6524 = vunpack.c.h.b16 %v6256
    %v6525 = vunpack.c.l.b16 %v6257
    %v6526 = vunpack.c.h.b16 %v6257
    %v6527 = vunpack.c.l.b16 %v6258
    %v6528 = vunpack.c.h.b16 %v6258
    %v6529 = vunpack.c.l.b16 %v6259
    %v6530 = vunpack.c.h.b16 %v6259
    %v6531 = vunpack.c.l.b16 %v6260
    %v6532 = vunpack.c.h.b16 %v6260
    %v6533 = vunpack.c.l.b16 %v6261
    %v6534 = vunpack.c.h.b16 %v6261
    %v6535 = vunpack.c.l.b16 %v6262
    %v6536 = vunpack.c.h.b16 %v6262
    %v6537 = vunpack.c.l.b16 %v6263
    %v6538 = vunpack.c.h.b16 %v6263
    %v6539 = vunpack.c.l.b16 %v6264
    %v6540 = vunpack.c.h.b16 %v6264
    %v6541 = vunpack.c.l.b16 %v6265
    %v6542 = vunpack.c.h.b16 %v6265
    %v6543 = vunpack.c.l.b16 %v6266
    %v6544 = vunpack.c.h.b16 %v6266
    %v6545 = vunpack.c.l.b16 %v6267
    %v6546 = vunpack.c.h.b16 %v6267
    %v6547 = vunpack.c.l.b16 %v6268
    %v6548 = vunpack.c.h.b16 %v6268
    %v6549 = vunpack.c.l.b16 %v6269
    %v6550 = vunpack.c.h.b16 %v6269
    %v6551 = vunpack.c.l.b16 %v6270
    %v6552 = vunpack.c.h.b16 %v6270
    %v6553 = vunpack.c.l.b16 %v6271
    %v6554 = vunpack.c.h.b16 %v6271
    %v6555 = vunpack.c.l.b16 %v6272
    %v6556 = vunpack.c.h.b16 %v6272
    %v6557 = vunpack.c.l.b16 %v6273
    %v6558 = vunpack.c.h.b16 %v6273
    %v6559 = vunpack.c.l.b16 %v6274
    %v6560 = vunpack.c.h.b16 %v6274
    %v6561 = vunpack.c.l.b16 %v6275
    %v6562 = vunpack.c.h.b16 %v6275
    %v6563 = vunpack.c.l.b16 %v6276
    %v6564 = vunpack.c.h.b16 %v6276
    %v6565 = vunpack.c.l.b16 %v6277
    %v6566 = vunpack.c.h.b16 %v6277
    %v6567 = vunpack.c.l.b16 %v6278
    %v6568 = vunpack.c.h.b16 %v6278
    %v6569 = vunpack.c.l.b16 %v6279
    %v6570 = vunpack.c.h.b16 %v6279
    %v6571 = vunpack.c.l.b16 %v6280
    %v6572 = vunpack.c.h.b16 %v6280
    %v6573 = vunpack.c.l.b16 %v6281
    %v6574 = vunpack.c.h.b16 %v6281
    %v6575 = vunpack.c.l.b16 %v6282
    %v6576 = vunpack.c.h.b16 %v6282
    %v6577 = vpack.c.b16 %v6383, %v6381
    %v6578 = vpack.c.b16 %v6384, %v6382
    %v6579 = vpack.c.b16 %v6387, %v6385
    %v6580 = vpack.c.b16 %v6388, %v6386
    %v6581 = vpack.c.b16 %v6391, %v6389
    %v6582 = vpack.c.b16 %v6392, %v6390
    %v6583 = vpack.c.b16 %v6395, %v6393
    %v6584 = vpack.c.b16 %v6396, %v6394
    %v6585 = vpack.c.b16 %v6399, %v6397
    %v6586 = vpack.c.b16 %v6400, %v6398
    %v6587 = vpack.c.b16 %v6403, %v6401
    %v6588 = vpack.c.b16 %v6404, %v6402
    %v6589 = vpack.c.b16 %v6407, %v6405
    %v6590 = vpack.c.b16 %v6408, %v6406
    %v6591 = vpack.c.b16 %v6411, %v6409
    %v6592 = vpack.c.b16 %v6412, %v6410
    %v6593 = vpack.c.b16 %v6415, %v6413
    %v6594 = vpack.c.b16 %v6416, %v6414
    %v6595 = vpack.c.b16 %v6419, %v6417
    %v6596 = vpack.c.b16 %v6420, %v6418
    %v6597 = vpack.c.b16 %v6423, %v6421
    %v6598 = vpack.c.b16 %v6424, %v6422
    %v6599 = vpack.c.b16 %v6427, %v6425
    %v6600 = vpack.c.b16 %v6428, %v6426
    %v6601 = vpack.c.b16 %v6431, %v6429
    %v6602 = vpack.c.b16 %v6432, %v6430
    %v6603 = vpack.c.b16 %v6435, %v6433
    %v6604 = vpack.c.b16 %v6436, %v6434
    %v6605 = vpack.c.b16 %v6439, %v6437
    %v6606 = vpack.c.b16 %v6440, %v6438
    %v6607 = vpack.c.b16 %v6443, %v6441
    %v6608 = vpack.c.b16 %v6444, %v6442
    %v6609 = vpack.c.b16 %v6447, %v6445
    %v6610 = vpack.c.b16 %v6448, %v6446
    %v6611 = vpack.c.b16 %v6451, %v6449
    %v6612 = vpack.c.b16 %v6452, %v6450
    %v6613 = vpack.c.b16 %v6455, %v6453
    %v6614 = vpack.c.b16 %v6456, %v6454
    %v6615 = vpack.c.b16 %v6459, %v6457
    %v6616 = vpack.c.b16 %v6460, %v6458
    %v6617 = vpack.c.b16 %v6463, %v6461
    %v6618 = vpack.c.b16 %v6464, %v6462
    %v6619 = vpack.c.b16 %v6467, %v6465
    %v6620 = vpack.c.b16 %v6468, %v6466
    %v6621 = vpack.c.b16 %v6471, %v6469
    %v6622 = vpack.c.b16 %v6472, %v6470
    %v6623 = vpack.c.b16 %v6475, %v6473
    %v6624 = vpack.c.b16 %v6476, %v6474
    %v6625 = vpack.c.b16 %v6479, %v6477
    %v6626 = vpack.c.b16 %v6480, %v6478
    %v6627 = vpack.c.b16 %v6483, %v6481
    %v6628 = vpack.c.b16 %v6484, %v6482
    %v6629 = vpack.c.b16 %v6487, %v6485
    %v6630 = vpack.c.b16 %v6488, %v6486
    %v6631 = vpack.c.b16 %v6491, %v6489
    %v6632 = vpack.c.b16 %v6492, %v6490
    %v6633 = vpack.c.b16 %v6495, %v6493
    %v6634 = vpack.c.b16 %v6496, %v6494
    %v6635 = vpack.c.b16 %v6499, %v6497
    %v6636 = vpack.c.b16 %v6500, %v6498
    %v6637 = vpack.c.b16 %v6503, %v6501
    %v6638 = vpack.c.b16 %v6504, %v6502
    %v6639 = vpack.c.b16 %v6507, %v6505
    %v6640 = vpack.c.b16 %v6508, %v6506
    %v6641 = vpack.c.b16 %v6511, %v6509
    %v6642 = vpack.c.b16 %v6512, %v6510
    %v6643 = vpack.c.b16 %v6515, %v6513
    %v6644 = vpack.c.b16 %v6516, %v6514
    %v6645 = vpack.c.b16 %v6519, %v6517
    %v6646 = vpack.c.b16 %v6520, %v6518
    %v6647 = vpack.c.b16 %v6523, %v6521
    %v6648 = vpack.c.b16 %v6524, %v6522
    %v6649 = vpack.c.b16 %v6527, %v6525
    %v6650 = vpack.c.b16 %v6528, %v6526
    %v6651 = vpack.c.b16 %v6531, %v6529
    %v6652 = vpack.c.b16 %v6532, %v6530
    %v6653 = vpack.c.b16 %v6535, %v6533
    %v6654 = vpack.c.b16 %v6536, %v6534
    %v6655 = vpack.c.b16 %v6539, %v6537
    %v6656 = vpack.c.b16 %v6540, %v6538
    %v6657 = vpack.c.b16 %v6543, %v6541
    %v6658 = vpack.c.b16 %v6544, %v6542
    %v6659 = vpack.c.b16 %v6547, %v6545
    %v6660 = vpack.c.b16 %v6548, %v6546
    %v6661 = vpack.c.b16 %v6551, %v6549
    %v6662 = vpack.c.b16 %v6552, %v6550
    %v6663 = vpack.c.b16 %v6555, %v6553
    %v6664 = vpack.c.b16 %v6556, %v6554
    %v6665 = vpack.c.b16 %v6559, %v6557
    %v6666 = vpack.c.b16 %v6560, %v6558
    %v6667 = vpack.c.b16 %v6563, %v6561
    %v6668 = vpack.c.b16 %v6564, %v6562
    %v6669 = vpack.c.b16 %v6567, %v6565
    %v6670 = vpack.c.b16 %v6568, %v6566
    %v6671 = vpack.c.b16 %v6571, %v6569
    %v6672 = vpack.c.b16 %v6572, %v6570
    %v6673 = vpack.c.b16 %v6575, %v6573
    %v6674 = vpack.c.b16 %v6576, %v6574
    %6773 = vmatprep.subr.bf16.mxu0 %v6578
    %6774 = vmatpush1.bf16.msra.mxu0 %v6577
    %6775 = vmatprep.subr.bf16.mxu0 %v6580
    %6776 = vmatpush1.bf16.msra.mxu0 %v6579
    %6777 = vmatprep.subr.bf16.mxu0 %v6582
    %6778 = vmatpush1.bf16.msra.mxu0 %v6581
    %6779 = vmatprep.subr.bf16.mxu0 %v6584
    %6780 = vmatpush1.bf16.msra.mxu0 %v6583
    %6781 = vmatprep.subr.bf16.mxu0 %v6586
    %6782 = vmatpush1.bf16.msra.mxu0 %v6585
    %6783 = vmatprep.subr.bf16.mxu0 %v6588
    %6784 = vmatpush1.bf16.msra.mxu0 %v6587
    %6785 = vmatprep.subr.bf16.mxu0 %v6590
    %6786 = vmatpush1.bf16.msra.mxu0 %v6589
    %6787 = vmatprep.subr.bf16.mxu0 %v6592
    %6788 = vmatpush1.bf16.msra.mxu0 %v6591
    %6789 = vmatprep.subr.bf16.mxu0 %v6594
    %6790 = vmatpush1.bf16.msra.mxu0 %v6593
    %6791 = vmatprep.subr.bf16.mxu0 %v6596
    %6792 = vmatpush1.bf16.msra.mxu0 %v6595
    %6793 = vmatprep.subr.bf16.mxu0 %v6598
    %6794 = vmatpush1.bf16.msra.mxu0 %v6597
    %6795 = vmatprep.subr.bf16.mxu0 %v6600
    %6796 = vmatpush1.bf16.msra.mxu0 %v6599
    %6797 = vmatprep.subr.bf16.mxu0 %v6602
    %6798 = vmatpush1.bf16.msra.mxu0 %v6601
    %6799 = vmatprep.subr.bf16.mxu0 %v6604
    %6800 = vmatpush1.bf16.msra.mxu0 %v6603
    %6801 = vmatprep.subr.bf16.mxu0 %v6606
    %6802 = vmatpush1.bf16.msra.mxu0 %v6605
    %6803 = vmatprep.subr.bf16.mxu0 %v6608
    %6804 = vmatpush1.bf16.msra.mxu0 %v6607
    %6805 = vmatprep.mubr.bf16.mxu0 %v151
    %6806 = vmatmul.mubr.bf16.gmra.mrb[0].mxu0 %v150
    %v6807 = vpop.f32.mrb[0].mxu0
    %v6808 = vadd.f32 0.0, %v6807
    %v6809 = vpop.f32.mrb[0].mxu0
    %v6810 = vadd.f32 0.0, %v6809
    %v6811 = vpop.f32.mrb[0].mxu0
    %v6812 = vadd.f32 0.0, %v6811
    %v6813 = vpop.f32.mrb[0].mxu0
    %v6814 = vadd.f32 0.0, %v6813
    %6815 = vdwg.mxu0
    %6816 = vmatprep.subr.bf16.mxu0 %v6610
    %6817 = vmatpush1.bf16.msra.mxu0 %v6609
    %6818 = vmatprep.subr.bf16.mxu0 %v6612
    %6819 = vmatpush1.bf16.msra.mxu0 %v6611
    %6820 = vmatprep.subr.bf16.mxu0 %v6614
    %6821 = vmatpush1.bf16.msra.mxu0 %v6613
    %6822 = vmatprep.subr.bf16.mxu0 %v6616
    %6823 = vmatpush1.bf16.msra.mxu0 %v6615
    %6824 = vmatprep.subr.bf16.mxu0 %v6618
    %6825 = vmatpush1.bf16.msra.mxu0 %v6617
    %6826 = vmatprep.subr.bf16.mxu0 %v6620
    %6827 = vmatpush1.bf16.msra.mxu0 %v6619
    %6828 = vmatprep.subr.bf16.mxu0 %v6622
    %6829 = vmatpush1.bf16.msra.mxu0 %v6621
    %6830 = vmatprep.subr.bf16.mxu0 %v6624
    %6831 = vmatpush1.bf16.msra.mxu0 %v6623
    %6832 = vmatprep.subr.bf16.mxu0 %v6626
    %6833 = vmatpush1.bf16.msra.mxu0 %v6625
    %6834 = vmatprep.subr.bf16.mxu0 %v6628
    %6835 = vmatpush1.bf16.msra.mxu0 %v6627
    %6836 = vmatprep.subr.bf16.mxu0 %v6630
    %6837 = vmatpush1.bf16.msra.mxu0 %v6629
    %6838 = vmatprep.subr.bf16.mxu0 %v6632
    %6839 = vmatpush1.bf16.msra.mxu0 %v6631
    %6840 = vmatprep.subr.bf16.mxu0 %v6634
    %6841 = vmatpush1.bf16.msra.mxu0 %v6633
    %6842 = vmatprep.subr.bf16.mxu0 %v6636
    %6843 = vmatpush1.bf16.msra.mxu0 %v6635
    %6844 = vmatprep.subr.bf16.mxu0 %v6638
    %6845 = vmatpush1.bf16.msra.mxu0 %v6637
    %6846 = vmatprep.subr.bf16.mxu0 %v6640
    %6847 = vmatpush1.bf16.msra.mxu0 %v6639
    %6848 = vmatprep.mubr.bf16.mxu0 %v153
    %6849 = vmatmul.mubr.bf16.gmra.mrb[0].mxu0 %v152
    %v6850 = vpop.f32.mrb[0].mxu0
    %v6851 = vadd.f32 %v6808, %v6850
    %v6852 = vpop.f32.mrb[0].mxu0
    %v6853 = vadd.f32 %v6810, %v6852
    %v6854 = vpop.f32.mrb[0].mxu0
    %v6855 = vadd.f32 %v6812, %v6854
    %v6856 = vpop.f32.mrb[0].mxu0
    %v6857 = vadd.f32 %v6814, %v6856
    %6858 = vdwg.mxu0
    %6859 = vmatprep.subr.bf16.mxu0 %v6642
    %6860 = vmatpush1.bf16.msra.mxu0 %v6641
    %6861 = vmatprep.subr.bf16.mxu0 %v6644
    %6862 = vmatpush1.bf16.msra.mxu0 %v6643
    %6863 = vmatprep.subr.bf16.mxu0 %v6646
    %6864 = vmatpush1.bf16.msra.mxu0 %v6645
    %6865 = vmatprep.subr.bf16.mxu0 %v6648
    %6866 = vmatpush1.bf16.msra.mxu0 %v6647
    %6867 = vmatprep.subr.bf16.mxu0 %v6650
    %6868 = vmatpush1.bf16.msra.mxu0 %v6649
    %6869 = vmatprep.subr.bf16.mxu0 %v6652
    %6870 = vmatpush1.bf16.msra.mxu0 %v6651
    %6871 = vmatprep.subr.bf16.mxu0 %v6654
    %6872 = vmatpush1.bf16.msra.mxu0 %v6653
    %6873 = vmatprep.subr.bf16.mxu0 %v6656
    %6874 = vmatpush1.bf16.msra.mxu0 %v6655
    %6875 = vmatprep.subr.bf16.mxu0 %v6658
    %6876 = vmatpush1.bf16.msra.mxu0 %v6657
    %6877 = vmatprep.subr.bf16.mxu0 %v6660
    %6878 = vmatpush1.bf16.msra.mxu0 %v6659
    %6879 = vmatprep.subr.bf16.mxu0 %v6662
    %6880 = vmatpush1.bf16.msra.mxu0 %v6661
    %6881 = vmatprep.subr.bf16.mxu0 %v6664
    %6882 = vmatpush1.bf16.msra.mxu0 %v6663
    %6883 = vmatprep.subr.bf16.mxu0 %v6666
    %6884 = vmatpush1.bf16.msra.mxu0 %v6665
    %6885 = vmatprep.subr.bf16.mxu0 %v6668
    %6886 = vmatpush1.bf16.msra.mxu0 %v6667
    %6887 = vmatprep.subr.bf16.mxu0 %v6670
    %6888 = vmatpush1.bf16.msra.mxu0 %v6669
    %6889 = vmatprep.subr.bf16.mxu0 %v6672
    %6890 = vmatpush1.bf16.msra.mxu0 %v6671
    %6891 = vmatprep.mubr.bf16.mxu0 %v155
    %6892 = vmatmul.mubr.bf16.gmra.mrb[0].mxu0 %v154
    %v6893 = vpop.f32.mrb[0].mxu0
    %v6894 = vadd.f32 %v6851, %v6893
    %v6895 = vpop.f32.mrb[0].mxu0
    %v6896 = vadd.f32 %v6853, %v6895
    %v6897 = vpop.f32.mrb[0].mxu0
    %v6898 = vadd.f32 %v6855, %v6897
    %v6899 = vpop.f32.mrb[0].mxu0
    %v6900 = vadd.f32 %v6857, %v6899
    %6901 = vdwg.mxu0
    %6902 = vmatprep.subr.bf16.mxu0 %v6674
    %6903 = vmatpush1.bf16.msra.mxu0 %v6673
    %6904 = vmatprep.subr.bf16.mxu0 0
    %6905 = vmatpush1.bf16.msra.mxu0 0
    %6906 = vmatprep.subr.bf16.mxu0 0
    %6907 = vmatpush1.bf16.msra.mxu0 0
    %6908 = vmatprep.subr.bf16.mxu0 0
    %6909 = vmatpush1.bf16.msra.mxu0 0
    %6910 = vmatprep.subr.bf16.mxu0 0
    %6911 = vmatpush1.bf16.msra.mxu0 0
    %6912 = vmatprep.subr.bf16.mxu0 0
    %6913 = vmatpush1.bf16.msra.mxu0 0
    %6914 = vmatprep.subr.bf16.mxu0 0
    %6915 = vmatpush1.bf16.msra.mxu0 0
    %6916 = vmatprep.subr.bf16.mxu0 0
    %6917 = vmatpush1.bf16.msra.mxu0 0
    %6918 = vmatprep.subr.bf16.mxu0 0
    %6919 = vmatpush1.bf16.msra.mxu0 0
    %6920 = vmatprep.subr.bf16.mxu0 0
    %6921 = vmatpush1.bf16.msra.mxu0 0
    %6922 = vmatprep.subr.bf16.mxu0 0
    %6923 = vmatpush1.bf16.msra.mxu0 0
    %6924 = vmatprep.subr.bf16.mxu0 0
    %6925 = vmatpush1.bf16.msra.mxu0 0
    %6926 = vmatprep.subr.bf16.mxu0 0
    %6927 = vmatpush1.bf16.msra.mxu0 0
    %6928 = vmatprep.subr.bf16.mxu0 0
    %6929 = vmatpush1.bf16.msra.mxu0 0
    %6930 = vmatprep.subr.bf16.mxu0 0
    %6931 = vmatpush1.bf16.msra.mxu0 0
    %6932 = vmatprep.subr.bf16.mxu0 0
    %6933 = vmatpush1.bf16.msra.mxu0 0
    %6934 = vmatprep.mubr.bf16.mxu0 0
    %6935 = vmatmul.mubr.bf16.gmra.mrb[0].mxu0 %v655
    %v6936 = vpop.f32.mrb[0].mxu0
    %v6937 = vadd.f32 %v6894, %v6936
    %v6938 = vpop.f32.mrb[0].mxu0
    %v6939 = vadd.f32 %v6896, %v6938
    %v6940 = vpop.f32.mrb[0].mxu0
    %v6941 = vadd.f32 %v6898, %v6940
    %v6942 = vpop.f32.mrb[0].mxu0
    %v6943 = vadd.f32 %v6900, %v6942
    %6944 = vdwg.mxu0
    %v6945 = vmax.f32 %v6180, %v6937
    %v6946 = vmax.f32 %v6181, %v6939
    %v6947 = vmax.f32 %v6182, %v6941
    %v6948 = vmax.f32 %v6183, %v6943
    %v6949 = vld [vmem:[%s2] sm:$0x3]
    %v6951 = vlaneseq
    %v6952 = vshrl.u32 %v6951, 7
    %v6953 = vsub.s32 0, %v6952
    %v6954 = vrot.slane %v6949, %v6953
    %v6955 = vlaneseq
    %v6956 = vshrl.u32 %v6955, 7
    %v6957 = vsub.s32 1, %v6956
    %v6958 = vrot.slane %v6949, %v6957
    %v6961 = vadd.f32 %v6945, %v6954
    %v6962 = vadd.f32 %v6946, %v6958
    %v6963 = vadd.f32 %v6947, %v6954
    %v6964 = vadd.f32 %v6948, %v6958
    %v6965 = vmax.f32 %v6961, 0.0
    %v6966 = vmax.f32 %v6962, 0.0
    %v6967 = vmax.f32 %v6963, 0.0
    %v6968 = vmax.f32 %v6964, 0.0
    %v6969 = vpack.c.bf16 %v6967, %v6965
    %v6970 = vpack.c.bf16 %v6968, %v6966
    %v6971 = vld [vmem:[%s3] sm:$0xf]
    %v6972 = vld [vmem:[%s3 + $0x4] sm:$0xf]
    %v6973 = vld [vmem:[%s3 + $0x8] sm:$0xf]
    %v6974 = vld [vmem:[%s3 + $0xc] sm:$0xf]
    %v6975 = vld [vmem:[%s3 + $0x10] sm:$0xf]
    %v6976 = vld [vmem:[%s3 + $0x14] sm:$0xf]
    %v6977 = vld [vmem:[%s3 + $0x18] sm:$0xf]
    %v6978 = vld [vmem:[%s3 + $0x1c] sm:$0xf]
    %v6979 = vld [vmem:[%s3 + $0x20] sm:$0xf]
    %v6980 = vld [vmem:[%s3 + $0x24] sm:$0xf]
    %v6981 = vld [vmem:[%s3 + $0x28] sm:$0xf]
    %v6982 = vld [vmem:[%s3 + $0x2c] sm:$0xf]
    %v6983 = vld [vmem:[%s3 + $0x30] sm:$0xf]
    %v6984 = vld [vmem:[%s3 + $0x34] sm:$0xf]
    %v6985 = vld [vmem:[%s3 + $0x38] sm:$0xf]
    %v6986 = vld [vmem:[%s3 + $0x3c] sm:$0xf]
    %v6987 = vld [vmem:[%s3 + $0x40] sm:$0xf]
    %v6988 = vld [vmem:[%s3 + $0x44] sm:$0xf]
    %v6989 = vld [vmem:[%s3 + $0x48] sm:$0xf]
    %v6990 = vld [vmem:[%s3 + $0x4c] sm:$0xf]
    %v6991 = vld [vmem:[%s3 + $0x50] sm:$0xf]
    %v6992 = vld [vmem:[%s3 + $0x54] sm:$0xf]
    %v6993 = vld [vmem:[%s3 + $0x58] sm:$0xf]
    %v6994 = vld [vmem:[%s3 + $0x5c] sm:$0xf]
    %v6995 = vld [vmem:[%s4] sm:$0x1]
    %v6997 = vlaneseq
    %v6998 = vshrl.u32 %v6997, 7
    %v6999 = vsub.s32 0, %v6998
    %v7000 = vrot.slane %v6995, %v6999
    %v7026 = vunpack.c.l.b16 %v6971
    %v7027 = vunpack.c.l.b16 %v6972
    %v7028 = vunpack.c.l.b16 %v6973
    %v7029 = vunpack.c.l.b16 %v6974
    %v7030 = vunpack.c.l.b16 %v6975
    %v7031 = vunpack.c.l.b16 %v6976
    %v7032 = vunpack.c.l.b16 %v6977
    %v7033 = vunpack.c.l.b16 %v6978
    %v7034 = vunpack.c.l.b16 %v6979
    %v7035 = vunpack.c.l.b16 %v6980
    %v7036 = vunpack.c.l.b16 %v6981
    %v7037 = vunpack.c.l.b16 %v6982
    %v7038 = vunpack.c.l.b16 %v6983
    %v7039 = vunpack.c.l.b16 %v6984
    %v7040 = vunpack.c.l.b16 %v6985
    %v7041 = vunpack.c.l.b16 %v6986
    %v7042 = vunpack.c.l.b16 %v6987
    %v7043 = vunpack.c.l.b16 %v6988
    %v7044 = vunpack.c.l.b16 %v6989
    %v7045 = vunpack.c.l.b16 %v6990
    %v7046 = vunpack.c.l.b16 %v6991
    %v7047 = vunpack.c.l.b16 %v6992
    %v7048 = vunpack.c.l.b16 %v6993
    %v7049 = vunpack.c.l.b16 %v6994
    %v7050 = vpack.c.b16 %v7027, %v7026
    %v7051 = vpack.c.b16 %v7029, %v7028
    %v7052 = vpack.c.b16 %v7031, %v7030
    %v7053 = vpack.c.b16 %v7033, %v7032
    %v7054 = vpack.c.b16 %v7035, %v7034
    %v7055 = vpack.c.b16 %v7037, %v7036
    %v7056 = vpack.c.b16 %v7039, %v7038
    %v7057 = vpack.c.b16 %v7041, %v7040
    %v7058 = vpack.c.b16 %v7043, %v7042
    %v7059 = vpack.c.b16 %v7045, %v7044
    %v7060 = vpack.c.b16 %v7047, %v7046
    %v7061 = vpack.c.b16 %v7049, %v7048
    %vm7074 = vcmask 523264
    %v7076 = vsel %vm7074, %v6970, 0
    %7078 = vmatprep.subr.bf16.mxu0 0
    %7079 = vmatpush1.bf16.msra.mxu0 %v7050
    %7080 = vmatprep.subr.bf16.mxu0 0
    %7081 = vmatpush1.bf16.msra.mxu0 %v7051
    %7082 = vmatprep.subr.bf16.mxu0 0
    %7083 = vmatpush1.bf16.msra.mxu0 %v7052
    %7084 = vmatprep.subr.bf16.mxu0 0
    %7085 = vmatpush1.bf16.msra.mxu0 %v7053
    %7086 = vmatprep.subr.bf16.mxu0 0
    %7087 = vmatpush1.bf16.msra.mxu0 %v7054
    %7088 = vmatprep.subr.bf16.mxu0 0
    %7089 = vmatpush1.bf16.msra.mxu0 %v7055
    %7090 = vmatprep.subr.bf16.mxu0 0
    %7091 = vmatpush1.bf16.msra.mxu0 %v7056
    %7092 = vmatprep.subr.bf16.mxu0 0
    %7093 = vmatpush1.bf16.msra.mxu0 %v7057
    %7094 = vmatprep.subr.bf16.mxu0 0
    %7095 = vmatpush1.bf16.msra.mxu0 %v7058
    %7096 = vmatprep.subr.bf16.mxu0 0
    %7097 = vmatpush1.bf16.msra.mxu0 %v7059
    %7098 = vmatprep.subr.bf16.mxu0 0
    %7099 = vmatpush1.bf16.msra.mxu0 %v7060
    %7100 = vmatprep.subr.bf16.mxu0 0
    %7101 = vmatpush1.bf16.msra.mxu0 %v7061
    %7102 = vmatprep.subr.bf16.mxu0 0
    %7103 = vmatpush1.bf16.msra.mxu0 0
    %7104 = vmatprep.subr.bf16.mxu0 0
    %7105 = vmatpush1.bf16.msra.mxu0 0
    %7106 = vmatprep.subr.bf16.mxu0 0
    %7107 = vmatpush1.bf16.msra.mxu0 0
    %7108 = vmatprep.subr.bf16.mxu0 0
    %7109 = vmatpush1.bf16.msra.mxu0 0
    %7110 = vmatprep.mubr.bf16.mxu0 %v7076
    %7111 = vmatmul.mubr.bf16.gmra.mrb[0].mxu0 %v6969
    %v7112 = vpop.f32.mrb[0].mxu0
    %v7113 = vadd.f32 %v7000, %v7112
    %v7114 = vpop.f32.mrb[0].mxu0
    %v7115 = vpop.f32.mrb[0].mxu0
    %v7116 = vadd.f32 %v7000, %v7115
    %v7117 = vpop.f32.mrb[0].mxu0
    %7118 = vdwg.mxu0
    %vm7119 = vcmask 80896
    %v7120 = vsel %vm7119, %v7113, -inf
    %7121 = vmax.xlane.f32.xlu0 %v7120
    %v7122 = vpop.xlane.xlu0 %7121
    %v7123 = vsel %vm7119, %v7116, -inf
    %7124 = vmax.xlane.f32.xlu0 %v7123
    %v7125 = vpop.xlane.xlu0 %7124
    %v7126 = vsub.f32 %v7113, %v7122
    %v7127 = vsub.f32 %v7116, %v7125
    %v7128 = vmul.f32 %v7126, 1.442695
    %v7129 = vpow.pop %v7128
    %v7130 = vmul.f32 %v7127, 1.442695
    %v7131 = vpow.pop %v7130
    %v7132 = vsel %vm7119, %v7129, 0.0
    %7133 = vadd.xlane.f32.xlu0 %v7132
    %v7134 = vpop.xlane.xlu0 %7133
    %v7135 = vsel %vm7119, %v7131, 0.0
    %7136 = vadd.xlane.f32.xlu0 %v7135
    %v7137 = vpop.xlane.xlu0 %7136
    %v7138 = vlog2.pop %v7134
    %v7139 = vmul.f32 %v7138, 0.6931472
    %v7140 = vlog2.pop %v7137
    %v7141 = vmul.f32 %v7140, 0.6931472
    %v7142 = vadd.f32 %v7122, %v7139
    %v7143 = vadd.f32 %v7125, %v7141
    %v7144 = vsub.f32 %v7113, %v7142
    %v7145 = vsub.f32 %v7116, %v7143
    %7146 = vst.msk [vmem:[#allocation2] sm:$0xff] %vm7119, %v7144
    %7147 = vst.msk [vmem:[#allocation2 + $0x8] sm:$0xff] %vm7119, %v7145
    // Predicated region
    $region22: #{tpu_custom_call.1} parent=1 // pred_check
      _
    $region23: #{tpu_custom_call.1} parent=1 // pred_check_branch
      %7149 = sbr.rel (0) target = $region25
    $region24: #{tpu_custom_call.1} parent=1 // pred_region
      %s7151 = ssub.s32 256, 256
      %7152 = vsyncadd [#allocation3], %s7151
      %s7153 = sshll.u32 [#allocation2], 4
      %s7154 = int_to_ptr.vmem [resolvable:$true] %s7153
      %7159 = dma.vmem_to_hbm [thread:$0]  %s7154, 256, %s5, [#allocation3], 128, 128, 8
    $region25: #{tpu_custom_call.1} parent=1 // pred_fallthru
      _
    // Predicated region
    $region26: #{tpu_custom_call.1} parent=1 // pred_check
      _
    $region27: #{tpu_custom_call.1} parent=1 // pred_check_branch
      %7161 = sbr.rel (0) target = $region29
    $region28: #{tpu_custom_call.1} parent=1 // pred_region
      %7162 = dma.done [#allocation3], 256
    $region29: #{tpu_custom_call.1} parent=1 // pred_fallthru
      _
    %7163 = vsyncpa [#allocation3], 1

</llo_original>
